<compile_context>
chip_gen: v7x
topology: tpu7x:2x2x1
jax: 0.10.0
libtpu: 0.0.40
codegen_flags: <defaults>
</compile_context>

<pallas_src>
import functools
import math

import numpy as np
import jax
import jax.numpy as jnp
from jax import lax
from jax.experimental import pallas as pl
from jax.experimental.pallas import tpu as pltpu

_VMEM_LIMIT = 32 * 1024 * 1024  # bytes; safe on v5e/v6e (128 MiB) and v7x (64 MiB)


# --------------------------------------------------------------------------- #
# helpers
# --------------------------------------------------------------------------- #

def _round_up(x, m):
    return ((x + m - 1) // m) * m


def _interp_matrix_1d(in_size, out_size):
    """(out, in) 1-D linear interpolation matrix, align_corners=False (torch)."""
    scale = in_size / out_size
    i = np.arange(out_size, dtype=np.float64)
    src = np.maximum(scale * (i + 0.5) - 0.5, 0.0)
    idx0 = np.clip(np.floor(src).astype(np.int64), 0, in_size - 1)
    idx1 = np.minimum(idx0 + 1, in_size - 1)
    lam1 = src - idx0
    lam0 = 1.0 - lam1
    m = np.zeros((out_size, in_size), np.float32)
    rows = np.arange(out_size)
    m[rows, idx0] += lam0.astype(np.float32)
    m[rows, idx1] += lam1.astype(np.float32)
    return m


# --------------------------------------------------------------------------- #
# One-time parameter preparation (outside jit): pad / repack all weights into
# the matrices consumed by the fused kernel.  Volumes use a 2-D layout
# X[c*D + d, h*W + w] throughout.
# --------------------------------------------------------------------------- #

def prepare_decoder(params, latent_size, fc_info, conv_info, volume_size):
    del fc_info  # layer shapes are carried by params
    arrays = []

    # --- FC stack: torch (out,in) -> (in_pad, out_pad) with zero padding ---
    in_act, in_pad = latent_size, latent_size
    for (w, b) in params["fc"]:
        w = np.asarray(w, np.float32)
        b = np.asarray(b, np.float32)
        out_act = w.shape[0]
        out_pad = _round_up(out_act, 128)
        wt = np.zeros((in_pad, out_pad), np.float32)
        wt[:in_act, :out_act] = w.T
        bt = np.zeros((1, out_pad), np.float32)
        bt[0, :out_act] = b
        arrays += [wt, bt]
        in_act, in_pad = out_act, out_pad

    c0 = conv_info[0]
    cin0, s0 = c0["in_channels"], c0["in_size"]
    assert in_act == cin0 * s0 ** 3
    vol_rows, vol_cols = cin0 * s0, s0 * s0

    stages = []
    cur_c, cur_s = cin0, s0
    for info, (w, b) in zip(conv_info, params["conv"]):
        w = np.asarray(w, np.float32)
        b = np.asarray(b, np.float32)
        # resize before this conv if needed
        if cur_s != info["in_size"]:
            s_new = info["in_size"]
            m = _interp_matrix_1d(cur_s, s_new)
            bmat = np.kron(np.eye(cur_c, dtype=np.float32), m).astype(np.float32)
            amat = np.kron(m.T, m.T).astype(np.float32)
            arrays += [bmat, amat]
            stages.append(("resize",))
            cur_s = s_new
        # conv: Rcat selects all K^2 shifted (H,W) windows; Lstk holds the
        # D-banded weights so   out = sum_k Lstk[k] @ (X @ Rcat[:, k-block]).
        k = info["kernel_size"]
        cout, cin = info["out_channels"], info["in_channels"]
        assert cin == cur_c
        do = cur_s - k + 1
        howo = do * do
        rcat = np.zeros((cur_s * cur_s, k * k * howo), np.float32)
        lstk = np.zeros((k * k, cout * do, cin * cur_s), np.float32)
        for kh in range(k):
            for kw in range(k):
                kk = kh * k + kw
                for oh in range(do):
                    for ow in range(do):
                        rcat[(oh + kh) * cur_s + (ow + kw),
                             kk * howo + oh * do + ow] = 1.0
                for co in range(cout):
                    for od in range(do):
                        for ci in range(cin):
                            for kd in range(k):
                                lstk[kk, co * do + od, ci * cur_s + od + kd] = \
                                    w[co, ci, kd, kh, kw]
        b2d = np.repeat(b, do).reshape(cout * do, 1).astype(np.float32)
        arrays += [rcat, lstk, b2d]
        stages.append(("conv", bool(info["relu"])))
        cur_c, cur_s = cout, do

    # final resize to volume_size if needed
    if cur_s != volume_size:
        m = _interp_matrix_1d(cur_s, volume_size)
        bmat = np.kron(np.eye(cur_c, dtype=np.float32), m).astype(np.float32)
        amat = np.kron(m.T, m.T).astype(np.float32)
        arrays += [bmat, amat]
        stages.append(("resize",))
        cur_s = volume_size

    plan = dict(num_fc=len(params["fc"]),
                vol_rows=vol_rows, vol_cols=vol_cols,
                stages=tuple(stages),
                out_channels=cur_c, out_size=cur_s,
                out_rows=cur_c * cur_s, out_cols=cur_s * cur_s)
    arrays = [jnp.asarray(a, jnp.float32) for a in arrays]
    return plan, arrays


# --------------------------------------------------------------------------- #
# Fused decoder kernel: one grid step = one sample.  Everything stays in
# VMEM/vregs; all contractions are MXU dots with f32 accumulation.
# --------------------------------------------------------------------------- #

def _fused_decoder_kernel(z_ref, *refs, num_fc, vol_rows, vol_cols, stages, clamp):
    out_ref = refs[-1]
    wr = refs[:-1]
    i = 0

    # --- FC stack (ReLU after every layer) ---
    h = jnp.broadcast_to(z_ref[...], (8, z_ref.shape[-1]))     # 8 identical rows
    for _ in range(num_fc):
        w = wr[i][...]
        b = wr[i + 1][...]
        i += 2
        h = jnp.dot(h, w, preferred_element_type=jnp.float32) + b
        h = jnp.maximum(h, 0.0)

    # --- (1, C*D*H*W) row -> (C*D, H*W) volume layout (lane slices + concat) ---
    x = jnp.concatenate(
        [h[0:1, r * vol_cols:(r + 1) * vol_cols] for r in range(vol_rows)],
        axis=0)

    # --- conv / resize stages ---
    for st in stages:
        if st[0] == "resize":
            bmat = wr[i][...]
            amat = wr[i + 1][...]
            i += 2
            x = jnp.dot(x, amat, preferred_element_type=jnp.float32)    # H,W axes
            x = jnp.dot(bmat, x, preferred_element_type=jnp.float32)    # D axis
        else:  # conv
            rcat = wr[i][...]
            l_ref = wr[i + 1]
            b2d = wr[i + 2][...]
            i += 3
            k2, cout_do, _ = l_ref.shape
            ho_wo = rcat.shape[-1] // k2
            y = jnp.dot(x, rcat, preferred_element_type=jnp.float32)    # window gather
            acc = jnp.zeros((cout_do, ho_wo), jnp.float32)
            for k in range(k2):
                acc = acc + jnp.dot(l_ref[k], y[:, k * ho_wo:(k + 1) * ho_wo],
                                    preferred_element_type=jnp.float32)
            acc = acc + b2d
            if st[1]:
                acc = jnp.maximum(acc, 0.0)
            x = acc

    if clamp is not None:
        x = jnp.clip(x, clamp[0], clamp[1])
    out_ref[...] = x.astype(out_ref.dtype)


def sdf_decoder_forward(z, plan, arrays, *, tsdf=False, enforce_tsdf=False):
    """Fused SDFDecoder forward.  z: (N, latent) -> (N, 1, V, V, V) float32."""
    n, latent = z.shape
    clamp = None
    if tsdf is not False and enforce_tsdf:
        clamp = (-float(tsdf), float(tsdf))

    z3 = z.astype(jnp.float32).reshape(n, 1, latent)
    out_rows, out_cols = plan["out_rows"], plan["out_cols"]

    in_specs = [pl.BlockSpec((None, 1, latent), lambda b: (b, 0, 0))]
    for a in arrays:
        zeros = (0,) * a.ndim
        in_specs.append(pl.BlockSpec(a.shape, lambda b, _z=zeros: _z))
    out_spec = pl.BlockSpec((None, out_rows, out_cols), lambda b: (b, 0, 0))

    kernel = functools.partial(
        _fused_decoder_kernel,
        num_fc=plan["num_fc"], vol_rows=plan["vol_rows"], vol_cols=plan["vol_cols"],
        stages=plan["stages"], clamp=clamp)

    out = pl.pallas_call(
        kernel,
        out_shape=jax.ShapeDtypeStruct((n, out_rows, out_cols), jnp.float32),
        grid=(n,),
        in_specs=in_specs,
        out_specs=out_spec,
        compiler_params=pltpu.CompilerParams(
            dimension_semantics=("parallel",),
            vmem_limit_bytes=_VMEM_LIMIT),
    )(z3, *arrays)

    v = plan["out_size"]
    return out.reshape(n, plan["out_channels"], v, v, v)


# --------------------------------------------------------------------------- #
# Parameter init (PyTorch default uniform(-1/sqrt(fan_in), 1/sqrt(fan_in)))
# --------------------------------------------------------------------------- #

def init_params(key, latent_size, fc_info, conv_info):
    params = {"fc": [], "conv": []}
    in_size = latent_size
    for layer in fc_info:
        key, k1, k2 = jax.random.split(key, 3)
        bound = 1.0 / math.sqrt(in_size)
        w = jax.random.uniform(k1, (layer["out"], in_size), jnp.float32, -bound, bound)
        b = jax.random.uniform(k2, (layer["out"],), jnp.float32, -bound, bound)
        params["fc"].append((w, b))
        in_size = layer["out"]
    for layer in conv_info:
        key, k1, k2 = jax.random.split(key, 3)
        ks = layer["kernel_size"]
        fan_in = layer["in_channels"] * ks ** 3
        bound = 1.0 / math.sqrt(fan_in)
        w = jax.random.uniform(
            k1, (layer["out_channels"], layer["in_channels"], ks, ks, ks),
            jnp.float32, -bound, bound)
        b = jax.random.uniform(k2, (layer["out_channels"],), jnp.float32, -bound, bound)
        params["conv"].append((w, b))
    return params


# --------------------------------------------------------------------------- #
# Pure-JAX reference (independent math: lax.conv + einsum resize)
# --------------------------------------------------------------------------- #

def _ref_resize(x, out_size):
    n, c, d, h, w = x.shape
    md = jnp.asarray(_interp_matrix_1d(d, out_size))
    mh = jnp.asarray(_interp_matrix_1d(h, out_size))
    mw = jnp.asarray(_interp_matrix_1d(w, out_size))
    hp = lax.Precision.HIGHEST
    y = jnp.einsum("ncdhw,Dd->ncDhw", x, md, precision=hp)
    y = jnp.einsum("ncdhw,Hh->ncdHw", y, mh, precision=hp)
    y = jnp.einsum("ncdhw,Ww->ncdhW", y, mw, precision=hp)
    return y


def ref_forward(z, params, fc_info, conv_info, volume_size,
                tsdf=False, enforce_tsdf=False):
    del fc_info
    out = z
    for (w, b) in params["fc"]:
        out = jnp.maximum(jnp.dot(out, w.T, precision=lax.Precision.HIGHEST) + b, 0.0)
    c0 = conv_info[0]
    s0 = c0["in_size"]
    vol = out.reshape(z.shape[0], c0["in_channels"], s0, s0, s0)
    for info, (w, b) in zip(conv_info, params["conv"]):
        if vol.shape[2] != info["in_size"]:
            vol = _ref_resize(vol, info["in_size"])
        vol = lax.conv_general_dilated(
            vol, w, (1, 1, 1), "VALID",
            dimension_numbers=("NCDHW", "OIDHW", "NCDHW"),
            precision=lax.Precision.HIGHEST) + b.reshape(1, -1, 1, 1, 1)
        if info["relu"]:
            vol = jnp.maximum(vol, 0.0)
    if vol.shape[2] != volume_size:
        vol = _ref_resize(vol, volume_size)
    if tsdf is not False and enforce_tsdf:
        vol = jnp.clip(vol, -float(tsdf), float(tsdf))
    return vol


# --------------------------------------------------------------------------- #
# demo / check
# --------------------------------------------------------------------------- #

if __name__ == "__main__":
    latent_size = 8
    volume_size = 16
    fc_info = [{"out": 32}, {"out": 2 * 4 ** 3}]
    conv_info = [
        {"in_channels": 2, "out_channels": 4, "kernel_size": 3, "in_size": 4, "relu": True},
        {"in_channels": 4, "out_channels": 1, "kernel_size": 3, "in_size": 8, "relu": False},
    ]
    # Same sanity checks as the PyTorch module.
    assert fc_info[-1]["out"] == conv_info[0]["in_channels"] * conv_info[0]["in_size"] ** 3
    for i, cd in enumerate(conv_info[:-1]):
        assert cd["out_channels"] == conv_info[i + 1]["in_channels"]
    assert conv_info[-1]["out_channels"] == 1

    key = jax.random.PRNGKey(0)
    key, kz = jax.random.split(key)
    z = jax.random.normal(kz, (2, latent_size), jnp.float32)
    params = init_params(key, latent_size, fc_info, conv_info)

    # One-time weight repack (outside jit).
    plan, arrays = prepare_decoder(params, latent_size, fc_info, conv_info, volume_size)

    run_f32 = jax.jit(lambda zz, arrs: sdf_decoder_forward(zz, plan, arrs))
    run_clamp = jax.jit(lambda zz, arrs: sdf_decoder_forward(
        zz, plan, arrs, tsdf=0.25, enforce_tsdf=True))

    out = jax.block_until_ready(run_f32(z, arrays))
    assert out.shape == (2, 1, volume_size, volume_size, volume_size), out.shape
    assert out.dtype == jnp.float32

    ref = jax.block_until_ready(
        ref_forward(z, params, fc_info, conv_info, volume_size))
    assert jnp.allclose(out, ref, rtol=1e-4, atol=1e-4), float(
        jnp.max(jnp.abs(out - ref)))

    # Fused TSDF clamp epilogue.
    out_c = jax.block_until_ready(run_clamp(z, arrays))
    ref_c = jnp.clip(ref, -0.25, 0.25)
    assert jnp.allclose(out_c, ref_c, rtol=1e-4, atol=1e-4)

    print("KERNEL_OK")
</pallas_src>

<mosaic_0001>
module attributes {stable_mosaic.version = 11 : i64} {
  func.func @_fused_decoder_kernel(%arg0: i32, %arg1: memref<1x1x8xf32, #tpu.memory_space<vmem>>, %arg2: memref<8x128xf32, #tpu.memory_space<vmem>>, %arg3: memref<1x128xf32, #tpu.memory_space<vmem>>, %arg4: memref<128x128xf32, #tpu.memory_space<vmem>>, %arg5: memref<1x128xf32, #tpu.memory_space<vmem>>, %arg6: memref<16x36xf32, #tpu.memory_space<vmem>>, %arg7: memref<9x8x8xf32, #tpu.memory_space<vmem>>, %arg8: memref<8x1xf32, #tpu.memory_space<vmem>>, %arg9: memref<32x8xf32, #tpu.memory_space<vmem>>, %arg10: memref<4x64xf32, #tpu.memory_space<vmem>>, %arg11: memref<64x324xf32, #tpu.memory_space<vmem>>, %arg12: memref<9x6x32xf32, #tpu.memory_space<vmem>>, %arg13: memref<6x1xf32, #tpu.memory_space<vmem>>, %arg14: memref<16x6xf32, #tpu.memory_space<vmem>>, %arg15: memref<36x256xf32, #tpu.memory_space<vmem>>, %arg16: memref<1x16x256xf32, #tpu.memory_space<vmem>>) attributes {dimension_semantics = [#tpu.dimension_semantics<parallel>], iteration_bounds = array<i64: 2>, scalar_prefetch = 0 : i64, scratch_operands = 0 : i64, tpu.core_type = #tpu.core_type<tc>, window_params = [{transform_indices = @transform_0, window_bounds = array<i64: 1, 1, 8>}, {pipeline_mode = #tpu.pipeline_mode<synchronous>, transform_indices = @transform_1, window_bounds = array<i64: 8, 128>}, {pipeline_mode = #tpu.pipeline_mode<synchronous>, transform_indices = @transform_2, window_bounds = array<i64: 1, 128>}, {pipeline_mode = #tpu.pipeline_mode<synchronous>, transform_indices = @transform_3, window_bounds = array<i64: 128, 128>}, {pipeline_mode = #tpu.pipeline_mode<synchronous>, transform_indices = @transform_4, window_bounds = array<i64: 1, 128>}, {pipeline_mode = #tpu.pipeline_mode<synchronous>, transform_indices = @transform_5, window_bounds = array<i64: 16, 36>}, {pipeline_mode = #tpu.pipeline_mode<synchronous>, transform_indices = @transform_6, window_bounds = array<i64: 9, 8, 8>}, {pipeline_mode = #tpu.pipeline_mode<synchronous>, transform_indices = @transform_7, window_bounds = array<i64: 8, 1>}, {pipeline_mode = #tpu.pipeline_mode<synchronous>, transform_indices = @transform_8, window_bounds = array<i64: 32, 8>}, {pipeline_mode = #tpu.pipeline_mode<synchronous>, transform_indices = @transform_9, window_bounds = array<i64: 4, 64>}, {pipeline_mode = #tpu.pipeline_mode<synchronous>, transform_indices = @transform_10, window_bounds = array<i64: 64, 324>}, {pipeline_mode = #tpu.pipeline_mode<synchronous>, transform_indices = @transform_11, window_bounds = array<i64: 9, 6, 32>}, {pipeline_mode = #tpu.pipeline_mode<synchronous>, transform_indices = @transform_12, window_bounds = array<i64: 6, 1>}, {pipeline_mode = #tpu.pipeline_mode<synchronous>, transform_indices = @transform_13, window_bounds = array<i64: 16, 6>}, {pipeline_mode = #tpu.pipeline_mode<synchronous>, transform_indices = @transform_14, window_bounds = array<i64: 36, 256>}, {transform_indices = @transform_15, window_bounds = array<i64: 1, 16, 256>}]} {
    %c0 = arith.constant 0 : index
    %c0_0 = arith.constant 0 : index
    %c0_1 = arith.constant 0 : index
    %0 = vector.load %arg1[%c0, %c0_0, %c0_1] : memref<1x1x8xf32, #tpu.memory_space<vmem>>, vector<1x1x8xf32>
    %1 = vector.shape_cast %0 : vector<1x1x8xf32> to vector<1x8xf32>
    %2 = vector.shape_cast %1 : vector<1x8xf32> to vector<1x8xf32>
    %3 = vector.broadcast %2 : vector<1x8xf32> to vector<8x8xf32>
    %c0_2 = arith.constant 0 : index
    %c0_3 = arith.constant 0 : index
    %4 = vector.load %arg2[%c0_2, %c0_3] : memref<8x128xf32, #tpu.memory_space<vmem>>, vector<8x128xf32>
    %c0_4 = arith.constant 0 : index
    %c0_5 = arith.constant 0 : index
    %5 = vector.load %arg3[%c0_4, %c0_5] : memref<1x128xf32, #tpu.memory_space<vmem>>, vector<1x128xf32>
    %cst = arith.constant dense<0.000000e+00> : vector<8x128xf32>
    %6 = tpu.matmul %3, %4, %cst {dimension_numbers = #tpu.dot_dimension_numbers<[1], [0], [0], [1], [0, 0, 1, 1], [], []>} : vector<8x8xf32>, vector<8x128xf32>, vector<8x128xf32> -> vector<8x128xf32>
    %7 = vector.broadcast %5 : vector<1x128xf32> to vector<8x128xf32>
    %8 = arith.addf %6, %7 : vector<8x128xf32>
    %cst_6 = arith.constant 0.000000e+00 : f32
    %9 = vector.broadcast %cst_6 : f32 to vector<8x128xf32>
    %10 = arith.maximumf %8, %9 : vector<8x128xf32>
    %c0_7 = arith.constant 0 : index
    %c0_8 = arith.constant 0 : index
    %11 = vector.load %arg4[%c0_7, %c0_8] : memref<128x128xf32, #tpu.memory_space<vmem>>, vector<128x128xf32>
    %c0_9 = arith.constant 0 : index
    %c0_10 = arith.constant 0 : index
    %12 = vector.load %arg5[%c0_9, %c0_10] : memref<1x128xf32, #tpu.memory_space<vmem>>, vector<1x128xf32>
    %cst_11 = arith.constant dense<0.000000e+00> : vector<8x128xf32>
    %13 = tpu.matmul %10, %11, %cst_11 {dimension_numbers = #tpu.dot_dimension_numbers<[1], [0], [0], [1], [0, 0, 1, 1], [], []>} : vector<8x128xf32>, vector<128x128xf32>, vector<8x128xf32> -> vector<8x128xf32>
    %14 = vector.broadcast %12 : vector<1x128xf32> to vector<8x128xf32>
    %15 = arith.addf %13, %14 : vector<8x128xf32>
    %cst_12 = arith.constant 0.000000e+00 : f32
    %16 = vector.broadcast %cst_12 : f32 to vector<8x128xf32>
    %17 = arith.maximumf %15, %16 : vector<8x128xf32>
    %18 = vector.extract_strided_slice %17 {offsets = [0, 0], sizes = [1, 16], strides = [1, 1]} : vector<8x128xf32> to vector<1x16xf32>
    %19 = vector.extract_strided_slice %17 {offsets = [0, 16], sizes = [1, 16], strides = [1, 1]} : vector<8x128xf32> to vector<1x16xf32>
    %20 = vector.extract_strided_slice %17 {offsets = [0, 32], sizes = [1, 16], strides = [1, 1]} : vector<8x128xf32> to vector<1x16xf32>
    %21 = vector.extract_strided_slice %17 {offsets = [0, 48], sizes = [1, 16], strides = [1, 1]} : vector<8x128xf32> to vector<1x16xf32>
    %22 = vector.extract_strided_slice %17 {offsets = [0, 64], sizes = [1, 16], strides = [1, 1]} : vector<8x128xf32> to vector<1x16xf32>
    %23 = vector.extract_strided_slice %17 {offsets = [0, 80], sizes = [1, 16], strides = [1, 1]} : vector<8x128xf32> to vector<1x16xf32>
    %24 = vector.extract_strided_slice %17 {offsets = [0, 96], sizes = [1, 16], strides = [1, 1]} : vector<8x128xf32> to vector<1x16xf32>
    %25 = vector.extract_strided_slice %17 {offsets = [0, 112], sizes = [1, 16], strides = [1, 1]} : vector<8x128xf32> to vector<1x16xf32>
    %26 = tpu.concatenate %18, %19, %20, %21, %22, %23, %24, %25 in 0 : vector<1x16xf32>, vector<1x16xf32>, vector<1x16xf32>, vector<1x16xf32>, vector<1x16xf32>, vector<1x16xf32>, vector<1x16xf32>, vector<1x16xf32> -> vector<8x16xf32>
    %c0_13 = arith.constant 0 : index
    %c0_14 = arith.constant 0 : index
    %27 = vector.load %arg6[%c0_13, %c0_14] : memref<16x36xf32, #tpu.memory_space<vmem>>, vector<16x36xf32>
    %c0_15 = arith.constant 0 : index
    %c0_16 = arith.constant 0 : index
    %28 = vector.load %arg8[%c0_15, %c0_16] : memref<8x1xf32, #tpu.memory_space<vmem>>, vector<8x1xf32>
    %cst_17 = arith.constant dense<0.000000e+00> : vector<8x36xf32>
    %29 = tpu.matmul %26, %27, %cst_17 {dimension_numbers = #tpu.dot_dimension_numbers<[1], [0], [0], [1], [0, 0, 1, 1], [], []>} : vector<8x16xf32>, vector<16x36xf32>, vector<8x36xf32> -> vector<8x36xf32>
    %cst_18 = arith.constant 0.000000e+00 : f32
    %30 = vector.broadcast %cst_18 : f32 to vector<8x4xf32>
    %c0_19 = arith.constant 0 : index
    %c0_20 = arith.constant 0 : index
    %c0_21 = arith.constant 0 : index
    %31 = vector.load %arg7[%c0_19, %c0_20, %c0_21] : memref<9x8x8xf32, #tpu.memory_space<vmem>>, vector<1x8x8xf32>
    %32 = vector.shape_cast %31 : vector<1x8x8xf32> to vector<8x8xf32>
    %33 = vector.extract_strided_slice %29 {offsets = [0, 0], sizes = [8, 4], strides = [1, 1]} : vector<8x36xf32> to vector<8x4xf32>
    %cst_22 = arith.constant dense<0.000000e+00> : vector<8x4xf32>
    %34 = tpu.matmul %32, %33, %cst_22 {dimension_numbers = #tpu.dot_dimension_numbers<[1], [0], [0], [1], [0, 0, 1, 1], [], []>} : vector<8x8xf32>, vector<8x4xf32>, vector<8x4xf32> -> vector<8x4xf32>
    %35 = arith.addf %30, %34 : vector<8x4xf32>
    %c1 = arith.constant 1 : index
    %c0_23 = arith.constant 0 : index
    %c0_24 = arith.constant 0 : index
    %36 = vector.load %arg7[%c1, %c0_23, %c0_24] : memref<9x8x8xf32, #tpu.memory_space<vmem>>, vector<1x8x8xf32>
    %37 = vector.shape_cast %36 : vector<1x8x8xf32> to vector<8x8xf32>
    %38 = vector.extract_strided_slice %29 {offsets = [0, 4], sizes = [8, 4], strides = [1, 1]} : vector<8x36xf32> to vector<8x4xf32>
    %cst_25 = arith.constant dense<0.000000e+00> : vector<8x4xf32>
    %39 = tpu.matmul %37, %38, %cst_25 {dimension_numbers = #tpu.dot_dimension_numbers<[1], [0], [0], [1], [0, 0, 1, 1], [], []>} : vector<8x8xf32>, vector<8x4xf32>, vector<8x4xf32> -> vector<8x4xf32>
    %40 = arith.addf %35, %39 : vector<8x4xf32>
    %c2 = arith.constant 2 : index
    %c0_26 = arith.constant 0 : index
    %c0_27 = arith.constant 0 : index
    %41 = vector.load %arg7[%c2, %c0_26, %c0_27] : memref<9x8x8xf32, #tpu.memory_space<vmem>>, vector<1x8x8xf32>
    %42 = vector.shape_cast %41 : vector<1x8x8xf32> to vector<8x8xf32>
    %43 = vector.extract_strided_slice %29 {offsets = [0, 8], sizes = [8, 4], strides = [1, 1]} : vector<8x36xf32> to vector<8x4xf32>
    %cst_28 = arith.constant dense<0.000000e+00> : vector<8x4xf32>
    %44 = tpu.matmul %42, %43, %cst_28 {dimension_numbers = #tpu.dot_dimension_numbers<[1], [0], [0], [1], [0, 0, 1, 1], [], []>} : vector<8x8xf32>, vector<8x4xf32>, vector<8x4xf32> -> vector<8x4xf32>
    %45 = arith.addf %40, %44 : vector<8x4xf32>
    %c3 = arith.constant 3 : index
    %c0_29 = arith.constant 0 : index
    %c0_30 = arith.constant 0 : index
    %46 = vector.load %arg7[%c3, %c0_29, %c0_30] : memref<9x8x8xf32, #tpu.memory_space<vmem>>, vector<1x8x8xf32>
    %47 = vector.shape_cast %46 : vector<1x8x8xf32> to vector<8x8xf32>
    %48 = vector.extract_strided_slice %29 {offsets = [0, 12], sizes = [8, 4], strides = [1, 1]} : vector<8x36xf32> to vector<8x4xf32>
    %cst_31 = arith.constant dense<0.000000e+00> : vector<8x4xf32>
    %49 = tpu.matmul %47, %48, %cst_31 {dimension_numbers = #tpu.dot_dimension_numbers<[1], [0], [0], [1], [0, 0, 1, 1], [], []>} : vector<8x8xf32>, vector<8x4xf32>, vector<8x4xf32> -> vector<8x4xf32>
    %50 = arith.addf %45, %49 : vector<8x4xf32>
    %c4 = arith.constant 4 : index
    %c0_32 = arith.constant 0 : index
    %c0_33 = arith.constant 0 : index
    %51 = vector.load %arg7[%c4, %c0_32, %c0_33] : memref<9x8x8xf32, #tpu.memory_space<vmem>>, vector<1x8x8xf32>
    %52 = vector.shape_cast %51 : vector<1x8x8xf32> to vector<8x8xf32>
    %53 = vector.extract_strided_slice %29 {offsets = [0, 16], sizes = [8, 4], strides = [1, 1]} : vector<8x36xf32> to vector<8x4xf32>
    %cst_34 = arith.constant dense<0.000000e+00> : vector<8x4xf32>
    %54 = tpu.matmul %52, %53, %cst_34 {dimension_numbers = #tpu.dot_dimension_numbers<[1], [0], [0], [1], [0, 0, 1, 1], [], []>} : vector<8x8xf32>, vector<8x4xf32>, vector<8x4xf32> -> vector<8x4xf32>
    %55 = arith.addf %50, %54 : vector<8x4xf32>
    %c5 = arith.constant 5 : index
    %c0_35 = arith.constant 0 : index
    %c0_36 = arith.constant 0 : index
    %56 = vector.load %arg7[%c5, %c0_35, %c0_36] : memref<9x8x8xf32, #tpu.memory_space<vmem>>, vector<1x8x8xf32>
    %57 = vector.shape_cast %56 : vector<1x8x8xf32> to vector<8x8xf32>
    %58 = vector.extract_strided_slice %29 {offsets = [0, 20], sizes = [8, 4], strides = [1, 1]} : vector<8x36xf32> to vector<8x4xf32>
    %cst_37 = arith.constant dense<0.000000e+00> : vector<8x4xf32>
    %59 = tpu.matmul %57, %58, %cst_37 {dimension_numbers = #tpu.dot_dimension_numbers<[1], [0], [0], [1], [0, 0, 1, 1], [], []>} : vector<8x8xf32>, vector<8x4xf32>, vector<8x4xf32> -> vector<8x4xf32>
    %60 = arith.addf %55, %59 : vector<8x4xf32>
    %c6 = arith.constant 6 : index
    %c0_38 = arith.constant 0 : index
    %c0_39 = arith.constant 0 : index
    %61 = vector.load %arg7[%c6, %c0_38, %c0_39] : memref<9x8x8xf32, #tpu.memory_space<vmem>>, vector<1x8x8xf32>
    %62 = vector.shape_cast %61 : vector<1x8x8xf32> to vector<8x8xf32>
    %63 = vector.extract_strided_slice %29 {offsets = [0, 24], sizes = [8, 4], strides = [1, 1]} : vector<8x36xf32> to vector<8x4xf32>
    %cst_40 = arith.constant dense<0.000000e+00> : vector<8x4xf32>
    %64 = tpu.matmul %62, %63, %cst_40 {dimension_numbers = #tpu.dot_dimension_numbers<[1], [0], [0], [1], [0, 0, 1, 1], [], []>} : vector<8x8xf32>, vector<8x4xf32>, vector<8x4xf32> -> vector<8x4xf32>
    %65 = arith.addf %60, %64 : vector<8x4xf32>
    %c7 = arith.constant 7 : index
    %c0_41 = arith.constant 0 : index
    %c0_42 = arith.constant 0 : index
    %66 = vector.load %arg7[%c7, %c0_41, %c0_42] : memref<9x8x8xf32, #tpu.memory_space<vmem>>, vector<1x8x8xf32>
    %67 = vector.shape_cast %66 : vector<1x8x8xf32> to vector<8x8xf32>
    %68 = vector.extract_strided_slice %29 {offsets = [0, 28], sizes = [8, 4], strides = [1, 1]} : vector<8x36xf32> to vector<8x4xf32>
    %cst_43 = arith.constant dense<0.000000e+00> : vector<8x4xf32>
    %69 = tpu.matmul %67, %68, %cst_43 {dimension_numbers = #tpu.dot_dimension_numbers<[1], [0], [0], [1], [0, 0, 1, 1], [], []>} : vector<8x8xf32>, vector<8x4xf32>, vector<8x4xf32> -> vector<8x4xf32>
    %70 = arith.addf %65, %69 : vector<8x4xf32>
    %c8 = arith.constant 8 : index
    %c0_44 = arith.constant 0 : index
    %c0_45 = arith.constant 0 : index
    %71 = vector.load %arg7[%c8, %c0_44, %c0_45] : memref<9x8x8xf32, #tpu.memory_space<vmem>>, vector<1x8x8xf32>
    %72 = vector.shape_cast %71 : vector<1x8x8xf32> to vector<8x8xf32>
    %73 = vector.extract_strided_slice %29 {offsets = [0, 32], sizes = [8, 4], strides = [1, 1]} : vector<8x36xf32> to vector<8x4xf32>
    %cst_46 = arith.constant dense<0.000000e+00> : vector<8x4xf32>
    %74 = tpu.matmul %72, %73, %cst_46 {dimension_numbers = #tpu.dot_dimension_numbers<[1], [0], [0], [1], [0, 0, 1, 1], [], []>} : vector<8x8xf32>, vector<8x4xf32>, vector<8x4xf32> -> vector<8x4xf32>
    %75 = arith.addf %70, %74 : vector<8x4xf32>
    %76 = vector.broadcast %28 : vector<8x1xf32> to vector<8x4xf32>
    %77 = arith.addf %75, %76 : vector<8x4xf32>
    %cst_47 = arith.constant 0.000000e+00 : f32
    %78 = vector.broadcast %cst_47 : f32 to vector<8x4xf32>
    %79 = arith.maximumf %77, %78 : vector<8x4xf32>
    %c0_48 = arith.constant 0 : index
    %c0_49 = arith.constant 0 : index
    %80 = vector.load %arg9[%c0_48, %c0_49] : memref<32x8xf32, #tpu.memory_space<vmem>>, vector<32x8xf32>
    %c0_50 = arith.constant 0 : index
    %c0_51 = arith.constant 0 : index
    %81 = vector.load %arg10[%c0_50, %c0_51] : memref<4x64xf32, #tpu.memory_space<vmem>>, vector<4x64xf32>
    %cst_52 = arith.constant dense<0.000000e+00> : vector<8x64xf32>
    %82 = tpu.matmul %79, %81, %cst_52 {dimension_numbers = #tpu.dot_dimension_numbers<[1], [0], [0], [1], [0, 0, 1, 1], [], []>} : vector<8x4xf32>, vector<4x64xf32>, vector<8x64xf32> -> vector<8x64xf32>
    %cst_53 = arith.constant dense<0.000000e+00> : vector<32x64xf32>
    %83 = tpu.matmul %80, %82, %cst_53 {dimension_numbers = #tpu.dot_dimension_numbers<[1], [0], [0], [1], [0, 0, 1, 1], [], []>} : vector<32x8xf32>, vector<8x64xf32>, vector<32x64xf32> -> vector<32x64xf32>
    %c0_54 = arith.constant 0 : index
    %c0_55 = arith.constant 0 : index
    %84 = vector.load %arg11[%c0_54, %c0_55] : memref<64x324xf32, #tpu.memory_space<vmem>>, vector<64x324xf32>
    %c0_56 = arith.constant 0 : index
    %c0_57 = arith.constant 0 : index
    %85 = vector.load %arg13[%c0_56, %c0_57] : memref<6x1xf32, #tpu.memory_space<vmem>>, vector<6x1xf32>
    %cst_58 = arith.constant dense<0.000000e+00> : vector<32x324xf32>
    %86 = tpu.matmul %83, %84, %cst_58 {dimension_numbers = #tpu.dot_dimension_numbers<[1], [0], [0], [1], [0, 0, 1, 1], [], []>} : vector<32x64xf32>, vector<64x324xf32>, vector<32x324xf32> -> vector<32x324xf32>
    %cst_59 = arith.constant 0.000000e+00 : f32
    %87 = vector.broadcast %cst_59 : f32 to vector<6x36xf32>
    %c0_60 = arith.constant 0 : index
    %c0_61 = arith.constant 0 : index
    %c0_62 = arith.constant 0 : index
    %88 = vector.load %arg12[%c0_60, %c0_61, %c0_62] : memref<9x6x32xf32, #tpu.memory_space<vmem>>, vector<1x6x32xf32>
    %89 = vector.shape_cast %88 : vector<1x6x32xf32> to vector<6x32xf32>
    %90 = vector.extract_strided_slice %86 {offsets = [0, 0], sizes = [32, 36], strides = [1, 1]} : vector<32x324xf32> to vector<32x36xf32>
    %cst_63 = arith.constant dense<0.000000e+00> : vector<6x36xf32>
    %91 = tpu.matmul %89, %90, %cst_63 {dimension_numbers = #tpu.dot_dimension_numbers<[1], [0], [0], [1], [0, 0, 1, 1], [], []>} : vector<6x32xf32>, vector<32x36xf32>, vector<6x36xf32> -> vector<6x36xf32>
    %92 = arith.addf %87, %91 : vector<6x36xf32>
    %c1_64 = arith.constant 1 : index
    %c0_65 = arith.constant 0 : index
    %c0_66 = arith.constant 0 : index
    %93 = vector.load %arg12[%c1_64, %c0_65, %c0_66] : memref<9x6x32xf32, #tpu.memory_space<vmem>>, vector<1x6x32xf32>
    %94 = vector.shape_cast %93 : vector<1x6x32xf32> to vector<6x32xf32>
    %95 = vector.extract_strided_slice %86 {offsets = [0, 36], sizes = [32, 36], strides = [1, 1]} : vector<32x324xf32> to vector<32x36xf32>
    %cst_67 = arith.constant dense<0.000000e+00> : vector<6x36xf32>
    %96 = tpu.matmul %94, %95, %cst_67 {dimension_numbers = #tpu.dot_dimension_numbers<[1], [0], [0], [1], [0, 0, 1, 1], [], []>} : vector<6x32xf32>, vector<32x36xf32>, vector<6x36xf32> -> vector<6x36xf32>
    %97 = arith.addf %92, %96 : vector<6x36xf32>
    %c2_68 = arith.constant 2 : index
    %c0_69 = arith.constant 0 : index
    %c0_70 = arith.constant 0 : index
    %98 = vector.load %arg12[%c2_68, %c0_69, %c0_70] : memref<9x6x32xf32, #tpu.memory_space<vmem>>, vector<1x6x32xf32>
    %99 = vector.shape_cast %98 : vector<1x6x32xf32> to vector<6x32xf32>
    %100 = vector.extract_strided_slice %86 {offsets = [0, 72], sizes = [32, 36], strides = [1, 1]} : vector<32x324xf32> to vector<32x36xf32>
    %cst_71 = arith.constant dense<0.000000e+00> : vector<6x36xf32>
    %101 = tpu.matmul %99, %100, %cst_71 {dimension_numbers = #tpu.dot_dimension_numbers<[1], [0], [0], [1], [0, 0, 1, 1], [], []>} : vector<6x32xf32>, vector<32x36xf32>, vector<6x36xf32> -> vector<6x36xf32>
    %102 = arith.addf %97, %101 : vector<6x36xf32>
    %c3_72 = arith.constant 3 : index
    %c0_73 = arith.constant 0 : index
    %c0_74 = arith.constant 0 : index
    %103 = vector.load %arg12[%c3_72, %c0_73, %c0_74] : memref<9x6x32xf32, #tpu.memory_space<vmem>>, vector<1x6x32xf32>
    %104 = vector.shape_cast %103 : vector<1x6x32xf32> to vector<6x32xf32>
    %105 = vector.extract_strided_slice %86 {offsets = [0, 108], sizes = [32, 36], strides = [1, 1]} : vector<32x324xf32> to vector<32x36xf32>
    %cst_75 = arith.constant dense<0.000000e+00> : vector<6x36xf32>
    %106 = tpu.matmul %104, %105, %cst_75 {dimension_numbers = #tpu.dot_dimension_numbers<[1], [0], [0], [1], [0, 0, 1, 1], [], []>} : vector<6x32xf32>, vector<32x36xf32>, vector<6x36xf32> -> vector<6x36xf32>
    %107 = arith.addf %102, %106 : vector<6x36xf32>
    %c4_76 = arith.constant 4 : index
    %c0_77 = arith.constant 0 : index
    %c0_78 = arith.constant 0 : index
    %108 = vector.load %arg12[%c4_76, %c0_77, %c0_78] : memref<9x6x32xf32, #tpu.memory_space<vmem>>, vector<1x6x32xf32>
    %109 = vector.shape_cast %108 : vector<1x6x32xf32> to vector<6x32xf32>
    %110 = vector.extract_strided_slice %86 {offsets = [0, 144], sizes = [32, 36], strides = [1, 1]} : vector<32x324xf32> to vector<32x36xf32>
    %cst_79 = arith.constant dense<0.000000e+00> : vector<6x36xf32>
    %111 = tpu.matmul %109, %110, %cst_79 {dimension_numbers = #tpu.dot_dimension_numbers<[1], [0], [0], [1], [0, 0, 1, 1], [], []>} : vector<6x32xf32>, vector<32x36xf32>, vector<6x36xf32> -> vector<6x36xf32>
    %112 = arith.addf %107, %111 : vector<6x36xf32>
    %c5_80 = arith.constant 5 : index
    %c0_81 = arith.constant 0 : index
    %c0_82 = arith.constant 0 : index
    %113 = vector.load %arg12[%c5_80, %c0_81, %c0_82] : memref<9x6x32xf32, #tpu.memory_space<vmem>>, vector<1x6x32xf32>
    %114 = vector.shape_cast %113 : vector<1x6x32xf32> to vector<6x32xf32>
    %115 = vector.extract_strided_slice %86 {offsets = [0, 180], sizes = [32, 36], strides = [1, 1]} : vector<32x324xf32> to vector<32x36xf32>
    %cst_83 = arith.constant dense<0.000000e+00> : vector<6x36xf32>
    %116 = tpu.matmul %114, %115, %cst_83 {dimension_numbers = #tpu.dot_dimension_numbers<[1], [0], [0], [1], [0, 0, 1, 1], [], []>} : vector<6x32xf32>, vector<32x36xf32>, vector<6x36xf32> -> vector<6x36xf32>
    %117 = arith.addf %112, %116 : vector<6x36xf32>
    %c6_84 = arith.constant 6 : index
    %c0_85 = arith.constant 0 : index
    %c0_86 = arith.constant 0 : index
    %118 = vector.load %arg12[%c6_84, %c0_85, %c0_86] : memref<9x6x32xf32, #tpu.memory_space<vmem>>, vector<1x6x32xf32>
    %119 = vector.shape_cast %118 : vector<1x6x32xf32> to vector<6x32xf32>
    %120 = vector.extract_strided_slice %86 {offsets = [0, 216], sizes = [32, 36], strides = [1, 1]} : vector<32x324xf32> to vector<32x36xf32>
    %cst_87 = arith.constant dense<0.000000e+00> : vector<6x36xf32>
    %121 = tpu.matmul %119, %120, %cst_87 {dimension_numbers = #tpu.dot_dimension_numbers<[1], [0], [0], [1], [0, 0, 1, 1], [], []>} : vector<6x32xf32>, vector<32x36xf32>, vector<6x36xf32> -> vector<6x36xf32>
    %122 = arith.addf %117, %121 : vector<6x36xf32>
    %c7_88 = arith.constant 7 : index
    %c0_89 = arith.constant 0 : index
    %c0_90 = arith.constant 0 : index
    %123 = vector.load %arg12[%c7_88, %c0_89, %c0_90] : memref<9x6x32xf32, #tpu.memory_space<vmem>>, vector<1x6x32xf32>
    %124 = vector.shape_cast %123 : vector<1x6x32xf32> to vector<6x32xf32>
    %125 = vector.extract_strided_slice %86 {offsets = [0, 252], sizes = [32, 36], strides = [1, 1]} : vector<32x324xf32> to vector<32x36xf32>
    %cst_91 = arith.constant dense<0.000000e+00> : vector<6x36xf32>
    %126 = tpu.matmul %124, %125, %cst_91 {dimension_numbers = #tpu.dot_dimension_numbers<[1], [0], [0], [1], [0, 0, 1, 1], [], []>} : vector<6x32xf32>, vector<32x36xf32>, vector<6x36xf32> -> vector<6x36xf32>
    %127 = arith.addf %122, %126 : vector<6x36xf32>
    %c8_92 = arith.constant 8 : index
    %c0_93 = arith.constant 0 : index
    %c0_94 = arith.constant 0 : index
    %128 = vector.load %arg12[%c8_92, %c0_93, %c0_94] : memref<9x6x32xf32, #tpu.memory_space<vmem>>, vector<1x6x32xf32>
    %129 = vector.shape_cast %128 : vector<1x6x32xf32> to vector<6x32xf32>
    %130 = vector.extract_strided_slice %86 {offsets = [0, 288], sizes = [32, 36], strides = [1, 1]} : vector<32x324xf32> to vector<32x36xf32>
    %cst_95 = arith.constant dense<0.000000e+00> : vector<6x36xf32>
    %131 = tpu.matmul %129, %130, %cst_95 {dimension_numbers = #tpu.dot_dimension_numbers<[1], [0], [0], [1], [0, 0, 1, 1], [], []>} : vector<6x32xf32>, vector<32x36xf32>, vector<6x36xf32> -> vector<6x36xf32>
    %132 = arith.addf %127, %131 : vector<6x36xf32>
    %133 = vector.broadcast %85 : vector<6x1xf32> to vector<6x36xf32>
    %134 = arith.addf %132, %133 : vector<6x36xf32>
    %c0_96 = arith.constant 0 : index
    %c0_97 = arith.constant 0 : index
    %135 = vector.load %arg14[%c0_96, %c0_97] : memref<16x6xf32, #tpu.memory_space<vmem>>, vector<16x6xf32>
    %c0_98 = arith.constant 0 : index
    %c0_99 = arith.constant 0 : index
    %136 = vector.load %arg15[%c0_98, %c0_99] : memref<36x256xf32, #tpu.memory_space<vmem>>, vector<36x256xf32>
    %cst_100 = arith.constant dense<0.000000e+00> : vector<6x256xf32>
    %137 = tpu.matmul %134, %136, %cst_100 {dimension_numbers = #tpu.dot_dimension_numbers<[1], [0], [0], [1], [0, 0, 1, 1], [], []>} : vector<6x36xf32>, vector<36x256xf32>, vector<6x256xf32> -> vector<6x256xf32>
    %cst_101 = arith.constant dense<0.000000e+00> : vector<16x256xf32>
    %138 = tpu.matmul %135, %137, %cst_101 {dimension_numbers = #tpu.dot_dimension_numbers<[1], [0], [0], [1], [0, 0, 1, 1], [], []>} : vector<16x6xf32>, vector<6x256xf32>, vector<16x256xf32> -> vector<16x256xf32>
    %c0_102 = arith.constant 0 : index
    %c0_103 = arith.constant 0 : index
    %c0_104 = arith.constant 0 : index
    %139 = vector.load %arg16[%c0_102, %c0_103, %c0_104] : memref<1x16x256xf32, #tpu.memory_space<vmem>>, vector<1x16x256xf32>
    %140 = vector.shape_cast %139 : vector<1x16x256xf32> to vector<16x256xf32>
    %141 = vector.shape_cast %138 : vector<16x256xf32> to vector<1x16x256xf32>
    tpu.vector_store %arg16[%c0_102, %c0_103, %c0_104], %141 {strides = array<i32>} : memref<1x16x256xf32, #tpu.memory_space<vmem>>, vector<1x16x256xf32>,
    return
  }
  func.func @transform_0(%arg0: i32) -> (i32, i32, i32) {
    %c0_i32 = arith.constant 0 : i32
    %c0_i32_0 = arith.constant 0 : i32
    %c0_i32_1 = arith.constant 0 : i32
    return %arg0, %c0_i32, %c0_i32_0 : i32, i32, i32
  }
  func.func @transform_1(%arg0: i32) -> (i32, i32) {
    %c0_i32 = arith.constant 0 : i32
    %c0_i32_0 = arith.constant 0 : i32
    %c0_i32_1 = arith.constant 0 : i32
    return %c0_i32, %c0_i32_0 : i32, i32
  }
  func.func @transform_2(%arg0: i32) -> (i32, i32) {
    %c0_i32 = arith.constant 0 : i32
    %c0_i32_0 = arith.constant 0 : i32
    %c0_i32_1 = arith.constant 0 : i32
    return %c0_i32, %c0_i32_0 : i32, i32
  }
  func.func @transform_3(%arg0: i32) -> (i32, i32) {
    %c0_i32 = arith.constant 0 : i32
    %c0_i32_0 = arith.constant 0 : i32
    %c0_i32_1 = arith.constant 0 : i32
    return %c0_i32, %c0_i32_0 : i32, i32
  }
  func.func @transform_4(%arg0: i32) -> (i32, i32) {
    %c0_i32 = arith.constant 0 : i32
    %c0_i32_0 = arith.constant 0 : i32
    %c0_i32_1 = arith.constant 0 : i32
    return %c0_i32, %c0_i32_0 : i32, i32
  }
  func.func @transform_5(%arg0: i32) -> (i32, i32) {
    %c0_i32 = arith.constant 0 : i32
    %c0_i32_0 = arith.constant 0 : i32
    %c0_i32_1 = arith.constant 0 : i32
    return %c0_i32, %c0_i32_0 : i32, i32
  }
  func.func @transform_6(%arg0: i32) -> (i32, i32, i32) {
    %c0_i32 = arith.constant 0 : i32
    %c0_i32_0 = arith.constant 0 : i32
    %c0_i32_1 = arith.constant 0 : i32
    %c0_i32_2 = arith.constant 0 : i32
    return %c0_i32, %c0_i32_0, %c0_i32_1 : i32, i32, i32
  }
  func.func @transform_7(%arg0: i32) -> (i32, i32) {
    %c0_i32 = arith.constant 0 : i32
    %c0_i32_0 = arith.constant 0 : i32
    %c0_i32_1 = arith.constant 0 : i32
    return %c0_i32, %c0_i32_0 : i32, i32
  }
  func.func @transform_8(%arg0: i32) -> (i32, i32) {
    %c0_i32 = arith.constant 0 : i32
    %c0_i32_0 = arith.constant 0 : i32
    %c0_i32_1 = arith.constant 0 : i32
    return %c0_i32, %c0_i32_0 : i32, i32
  }
  func.func @transform_9(%arg0: i32) -> (i32, i32) {
    %c0_i32 = arith.constant 0 : i32
    %c0_i32_0 = arith.constant 0 : i32
    %c0_i32_1 = arith.constant 0 : i32
    return %c0_i32, %c0_i32_0 : i32, i32
  }
  func.func @transform_10(%arg0: i32) -> (i32, i32) {
    %c0_i32 = arith.constant 0 : i32
    %c0_i32_0 = arith.constant 0 : i32
    %c0_i32_1 = arith.constant 0 : i32
    return %c0_i32, %c0_i32_0 : i32, i32
  }
  func.func @transform_11(%arg0: i32) -> (i32, i32, i32) {
    %c0_i32 = arith.constant 0 : i32
    %c0_i32_0 = arith.constant 0 : i32
    %c0_i32_1 = arith.constant 0 : i32
    %c0_i32_2 = arith.constant 0 : i32
    return %c0_i32, %c0_i32_0, %c0_i32_1 : i32, i32, i32
  }
  func.func @transform_12(%arg0: i32) -> (i32, i32) {
    %c0_i32 = arith.constant 0 : i32
    %c0_i32_0 = arith.constant 0 : i32
    %c0_i32_1 = arith.constant 0 : i32
    return %c0_i32, %c0_i32_0 : i32, i32
  }
  func.func @transform_13(%arg0: i32) -> (i32, i32) {
    %c0_i32 = arith.constant 0 : i32
    %c0_i32_0 = arith.constant 0 : i32
    %c0_i32_1 = arith.constant 0 : i32
    return %c0_i32, %c0_i32_0 : i32, i32
  }
  func.func @transform_14(%arg0: i32) -> (i32, i32) {
    %c0_i32 = arith.constant 0 : i32
    %c0_i32_0 = arith.constant 0 : i32
    %c0_i32_1 = arith.constant 0 : i32
    return %c0_i32, %c0_i32_0 : i32, i32
  }
  func.func @transform_15(%arg0: i32) -> (i32, i32, i32) {
    %c0_i32 = arith.constant 0 : i32
    %c0_i32_0 = arith.constant 0 : i32
    %c0_i32_1 = arith.constant 0 : i32
    return %arg0, %c0_i32, %c0_i32_0 : i32, i32, i32
  }
}

</mosaic_0001>

<llo_original>
// kernel: _lambda_.1
$region0: #{_lambda_.1}
  #allocation0 [shape = 'u32[]', space=smem, size = 0x4, offset = 0x4, fixed_abs, tag = 'smem constant byte address 0x4 - core index']
  #allocation1 [shape = 'u32[144,128]{1,0:T(1,128)}', space=vmem, size = 0x12000, scoped, tag = 'internal scratch']
  %s0 = inlined_call_operand.vmem [shape: f32[2,1,8], index: 0, kind: input, shape index: {}]
  %s1 = inlined_call_operand.hbm [shape: f32[8,128], index: 1, kind: input, shape index: {}]
  %s2 = inlined_call_operand.hbm [shape: f32[1,128], index: 2, kind: input, shape index: {}]
  %s3 = inlined_call_operand.hbm [shape: f32[128,128], index: 3, kind: input, shape index: {}]
  %s4 = inlined_call_operand.hbm [shape: f32[1,128], index: 4, kind: input, shape index: {}]
  %s5 = inlined_call_operand.hbm [shape: f32[16,36], index: 5, kind: input, shape index: {}]
  %s6 = inlined_call_operand.vmem [shape: f32[9,8,8], index: 6, kind: input, shape index: {}]
  %s7 = inlined_call_operand.vmem [shape: f32[8,1], index: 7, kind: input, shape index: {}]
  %s8 = inlined_call_operand.vmem [shape: f32[32,8], index: 8, kind: input, shape index: {}]
  %s9 = inlined_call_operand.hbm [shape: f32[4,64], index: 9, kind: input, shape index: {}]
  %s10 = inlined_call_operand.vmem [shape: f32[64,324], index: 10, kind: input, shape index: {}]
  %s11 = inlined_call_operand.hbm [shape: f32[9,6,32], index: 11, kind: input, shape index: {}]
  %s12 = inlined_call_operand.vmem [shape: f32[6,1], index: 12, kind: input, shape index: {}]
  %s13 = inlined_call_operand.vmem [shape: f32[16,6], index: 13, kind: input, shape index: {}]
  %s14 = inlined_call_operand.vmem [shape: f32[36,256], index: 14, kind: input, shape index: {}]
  %s15 = inlined_call_operand.vmem [shape: f32[2,16,256], index: 15, kind: output, shape index: {}]
  %s16 = sld [smem:[#allocation0]]
  $region121: #{_lambda_.1} parent=0
    _
  %s18 = ssub.s32 1, %s16
  %s19 = scalar_select 0, %s18, %s16
  $region1: #{_lambda_.1} parent=0
    #allocation2 [shape = 'u8[4096]{0}', space=vmem, size = 0x1000, scoped, tag = 'input window, operand 1, single buffered']
    #allocation3 [shape = 's32[2]{0}', space=sflag, size = 0x8, scoped, tag = 'scoped memory for _lambda_.1']
    #allocation4 [shape = 'u8[512]{0}', space=vmem, size = 0x400, scoped, tag = 'input window, operand 2, single buffered']
    #allocation5 [shape = 's32[1]{0}', space=sflag, size = 0x4, scoped, tag = 'scoped memory for _lambda_.1']
    #allocation6 [shape = 'u8[65536]{0}', space=vmem, size = 0x10000, scoped, tag = 'input window, operand 3, single buffered']
    #allocation7 [shape = 'u8[512]{0}', space=vmem, size = 0x400, scoped, tag = 'input window, operand 4, single buffered']
    #allocation8 [shape = 's32[1]{0}', space=sflag, size = 0x4, scoped, tag = 'scoped memory for _lambda_.1']
    #allocation9 [shape = 'u8[8192]{0}', space=vmem, size = 0x2000, scoped, tag = 'input window, operand 5, single buffered']
    #allocation10 [shape = 'u8[2048]{0}', space=vmem, size = 0x800, scoped, tag = 'input window, operand 9, single buffered']
    #allocation11 [shape = 's32[1]{0}', space=sflag, size = 0x4, scoped, tag = 'scoped memory for _lambda_.1']
    #allocation12 [shape = 'u8[36864]{0}', space=vmem, size = 0x9000, scoped, tag = 'input window, operand 11, single buffered']
    %20 = vsyncpa [#allocation3], 0
    %21 = vsyncpa [#allocation5], 0
    %22 = vsyncpa [#allocation8], 0
    %23 = vsyncpa [#allocation11], 0
    loop: start=0, step=1, limit=4
    $region2: #{_lambda_.1} parent=1 // loop_pre_header
      _
    $region3: #{_lambda_.1} parent=1 // loop_header
      %s25 = sphi 0, %s29
      %p26 = scmp.ge.s32.totalorder %s25, 4
      %s35 = sphi 0, %s37
      %s38 = sphi 0, %s35
      %s39 = sphi 0, %s38
      %s55 = sphi 0, %s39
      %s59 = sphi 0, %s59
      %s61 = sphi 0, %s59
      %s62 = sphi 0, %s61
      %s76 = sphi 0, %s62
      %s80 = sphi 0, %s80
      %s82 = sphi 0, %s80
      %s83 = sphi 0, %s82
      %s97 = sphi 0, %s83
      %s101 = sphi 0, %s101
      %s103 = sphi 0, %s101
      %s104 = sphi 0, %s103
      %s118 = sphi 0, %s104
      %s122 = sphi 0, %s122
      %s124 = sphi 0, %s122
      %s125 = sphi 0, %s124
      %s139 = sphi 0, %s125
      %s143 = sphi 0, %s143
      %s145 = sphi 0, %s143
      %s146 = sphi 0, %s145
      %s160 = sphi 0, %s146
      %s164 = sphi 0, %s164
      %s166 = sphi 0, %s164
      %s167 = sphi 0, %s166
      %s181 = sphi 0, %s167
      %s185 = sphi 0, %s185
      %s187 = sphi 0, %s185
      %s188 = sphi 0, %s187
      %s202 = sphi 0, %s188
      %s206 = sphi 0, %s206
      %s208 = sphi 0, %s206
      %s209 = sphi 0, %s208
      %s223 = sphi 0, %s209
      %s227 = sphi 0, %s227
      %s229 = sphi 0, %s227
      %s230 = sphi 0, %s229
      %s244 = sphi 0, %s230
      %s248 = sphi 0, %s248
      %s250 = sphi 0, %s248
      %s251 = sphi 0, %s250
      %s265 = sphi 0, %s251
      %s269 = sphi 0, %s269
      %s271 = sphi 0, %s269
      %s272 = sphi 0, %s271
      %s286 = sphi 0, %s272
      %s290 = sphi 0, %s290
      %s292 = sphi 0, %s290
      %s293 = sphi 0, %s292
      %s307 = sphi 0, %s293
      %s311 = sphi 0, %s311
      %s313 = sphi 0, %s311
      %s314 = sphi 0, %s313
      %s328 = sphi 0, %s314
      %s332 = sphi 0, %s332
      %s334 = sphi 0, %s332
      %s335 = sphi 0, %s334
      %s349 = sphi 0, %s335
      %s355 = sphi 0, %s357
      %s358 = sphi 0, %s355
      %s359 = sphi 0, %s358
      %s375 = sphi 0, %s359
    $region4: #{_lambda_.1} parent=1 // loop_header_branch
      %28 = sbr.rel (%p26) target = $region8
    $region5: #{_lambda_.1} parent=1 // loop_body
      %s30 = ssub.s32 %s25, 1
      %s31 = ssub.s32 %s25, 2
      %s32 = sadd.s32 %s25, 1
      %s33 = ssub.s32 %s25, %s32
      %p34 = scmp.eq.s32.totalorder %s33, 0
      %s36 = sadd.s32 %s35, 1
      %s37 = scalar_select %p34, %s35, %s36
      %p40 = pneg %p34
      %p41 = scmp.eq.s32.totalorder %s25, 1
      %p42 = por %p40, %p41
      %p43 = scmp.ne.s32.totalorder %s35, %s38
      %p44 = scmp.eq.s32.totalorder %s25, 0
      %p45 = por %p43, %p44
      %p46 = scmp.ne.s32.totalorder %s35, %s38
      %p47 = scmp.eq.s32.totalorder %s30, 1
      %p48 = por %p46, %p47
      %p49 = scmp.ne.s32.totalorder %s38, %s39
      %p50 = scmp.eq.s32.totalorder %s30, 0
      %p51 = por %p49, %p50
      %p52 = scmp.ne.s32.totalorder %s38, %s39
      %p53 = scmp.eq.s32.totalorder %s31, 1
      %p54 = por %p52, %p53
      %p56 = scmp.ne.s32.totalorder %s39, %s55
      %p57 = scmp.eq.s32.totalorder %s31, 0
      %p58 = por %p56, %p57
      %s60 = sadd.s32 %s59, 1
      %p63 = scmp.eq.s32.totalorder %s25, 1
      %p64 = scmp.ne.s32.totalorder %s59, %s61
      %p65 = scmp.eq.s32.totalorder %s25, 0
      %p66 = por %p64, %p65
      %p67 = scmp.ne.s32.totalorder %s59, %s61
      %p68 = scmp.eq.s32.totalorder %s30, 1
      %p69 = por %p67, %p68
      %p70 = scmp.ne.s32.totalorder %s61, %s62
      %p71 = scmp.eq.s32.totalorder %s30, 0
      %p72 = por %p70, %p71
      %p73 = scmp.ne.s32.totalorder %s61, %s62
      %p74 = scmp.eq.s32.totalorder %s31, 1
      %p75 = por %p73, %p74
      %p77 = scmp.ne.s32.totalorder %s62, %s76
      %p78 = scmp.eq.s32.totalorder %s31, 0
      %p79 = por %p77, %p78
      %s81 = sadd.s32 %s80, 1
      %p84 = scmp.eq.s32.totalorder %s25, 1
      %p85 = scmp.ne.s32.totalorder %s80, %s82
      %p86 = scmp.eq.s32.totalorder %s25, 0
      %p87 = por %p85, %p86
      %p88 = scmp.ne.s32.totalorder %s80, %s82
      %p89 = scmp.eq.s32.totalorder %s30, 1
      %p90 = por %p88, %p89
      %p91 = scmp.ne.s32.totalorder %s82, %s83
      %p92 = scmp.eq.s32.totalorder %s30, 0
      %p93 = por %p91, %p92
      %p94 = scmp.ne.s32.totalorder %s82, %s83
      %p95 = scmp.eq.s32.totalorder %s31, 1
      %p96 = por %p94, %p95
      %p98 = scmp.ne.s32.totalorder %s83, %s97
      %p99 = scmp.eq.s32.totalorder %s31, 0
      %p100 = por %p98, %p99
      %s102 = sadd.s32 %s101, 1
      %p105 = scmp.eq.s32.totalorder %s25, 1
      %p106 = scmp.ne.s32.totalorder %s101, %s103
      %p107 = scmp.eq.s32.totalorder %s25, 0
      %p108 = por %p106, %p107
      %p109 = scmp.ne.s32.totalorder %s101, %s103
      %p110 = scmp.eq.s32.totalorder %s30, 1
      %p111 = por %p109, %p110
      %p112 = scmp.ne.s32.totalorder %s103, %s104
      %p113 = scmp.eq.s32.totalorder %s30, 0
      %p114 = por %p112, %p113
      %p115 = scmp.ne.s32.totalorder %s103, %s104
      %p116 = scmp.eq.s32.totalorder %s31, 1
      %p117 = por %p115, %p116
      %p119 = scmp.ne.s32.totalorder %s104, %s118
      %p120 = scmp.eq.s32.totalorder %s31, 0
      %p121 = por %p119, %p120
      %s123 = sadd.s32 %s122, 1
      %p126 = scmp.eq.s32.totalorder %s25, 1
      %p127 = scmp.ne.s32.totalorder %s122, %s124
      %p128 = scmp.eq.s32.totalorder %s25, 0
      %p129 = por %p127, %p128
      %p130 = scmp.ne.s32.totalorder %s122, %s124
      %p131 = scmp.eq.s32.totalorder %s30, 1
      %p132 = por %p130, %p131
      %p133 = scmp.ne.s32.totalorder %s124, %s125
      %p134 = scmp.eq.s32.totalorder %s30, 0
      %p135 = por %p133, %p134
      %p136 = scmp.ne.s32.totalorder %s124, %s125
      %p137 = scmp.eq.s32.totalorder %s31, 1
      %p138 = por %p136, %p137
      %p140 = scmp.ne.s32.totalorder %s125, %s139
      %p141 = scmp.eq.s32.totalorder %s31, 0
      %p142 = por %p140, %p141
      %s144 = sadd.s32 %s143, 1
      %p147 = scmp.eq.s32.totalorder %s25, 1
      %p148 = scmp.ne.s32.totalorder %s143, %s145
      %p149 = scmp.eq.s32.totalorder %s25, 0
      %p150 = por %p148, %p149
      %p151 = scmp.ne.s32.totalorder %s143, %s145
      %p152 = scmp.eq.s32.totalorder %s30, 1
      %p153 = por %p151, %p152
      %p154 = scmp.ne.s32.totalorder %s145, %s146
      %p155 = scmp.eq.s32.totalorder %s30, 0
      %p156 = por %p154, %p155
      %p157 = scmp.ne.s32.totalorder %s145, %s146
      %p158 = scmp.eq.s32.totalorder %s31, 1
      %p159 = por %p157, %p158
      %p161 = scmp.ne.s32.totalorder %s146, %s160
      %p162 = scmp.eq.s32.totalorder %s31, 0
      %p163 = por %p161, %p162
      %s165 = sadd.s32 %s164, 1
      %p168 = scmp.eq.s32.totalorder %s25, 1
      %p169 = scmp.ne.s32.totalorder %s164, %s166
      %p170 = scmp.eq.s32.totalorder %s25, 0
      %p171 = por %p169, %p170
      %p172 = scmp.ne.s32.totalorder %s164, %s166
      %p173 = scmp.eq.s32.totalorder %s30, 1
      %p174 = por %p172, %p173
      %p175 = scmp.ne.s32.totalorder %s166, %s167
      %p176 = scmp.eq.s32.totalorder %s30, 0
      %p177 = por %p175, %p176
      %p178 = scmp.ne.s32.totalorder %s166, %s167
      %p179 = scmp.eq.s32.totalorder %s31, 1
      %p180 = por %p178, %p179
      %p182 = scmp.ne.s32.totalorder %s167, %s181
      %p183 = scmp.eq.s32.totalorder %s31, 0
      %p184 = por %p182, %p183
      %s186 = sadd.s32 %s185, 1
      %p189 = scmp.eq.s32.totalorder %s25, 1
      %p190 = scmp.ne.s32.totalorder %s185, %s187
      %p191 = scmp.eq.s32.totalorder %s25, 0
      %p192 = por %p190, %p191
      %p193 = scmp.ne.s32.totalorder %s185, %s187
      %p194 = scmp.eq.s32.totalorder %s30, 1
      %p195 = por %p193, %p194
      %p196 = scmp.ne.s32.totalorder %s187, %s188
      %p197 = scmp.eq.s32.totalorder %s30, 0
      %p198 = por %p196, %p197
      %p199 = scmp.ne.s32.totalorder %s187, %s188
      %p200 = scmp.eq.s32.totalorder %s31, 1
      %p201 = por %p199, %p200
      %p203 = scmp.ne.s32.totalorder %s188, %s202
      %p204 = scmp.eq.s32.totalorder %s31, 0
      %p205 = por %p203, %p204
      %s207 = sadd.s32 %s206, 1
      %p210 = scmp.eq.s32.totalorder %s25, 1
      %p211 = scmp.ne.s32.totalorder %s206, %s208
      %p212 = scmp.eq.s32.totalorder %s25, 0
      %p213 = por %p211, %p212
      %p214 = scmp.ne.s32.totalorder %s206, %s208
      %p215 = scmp.eq.s32.totalorder %s30, 1
      %p216 = por %p214, %p215
      %p217 = scmp.ne.s32.totalorder %s208, %s209
      %p218 = scmp.eq.s32.totalorder %s30, 0
      %p219 = por %p217, %p218
      %p220 = scmp.ne.s32.totalorder %s208, %s209
      %p221 = scmp.eq.s32.totalorder %s31, 1
      %p222 = por %p220, %p221
      %p224 = scmp.ne.s32.totalorder %s209, %s223
      %p225 = scmp.eq.s32.totalorder %s31, 0
      %p226 = por %p224, %p225
      %s228 = sadd.s32 %s227, 1
      %p231 = scmp.eq.s32.totalorder %s25, 1
      %p232 = scmp.ne.s32.totalorder %s227, %s229
      %p233 = scmp.eq.s32.totalorder %s25, 0
      %p234 = por %p232, %p233
      %p235 = scmp.ne.s32.totalorder %s227, %s229
      %p236 = scmp.eq.s32.totalorder %s30, 1
      %p237 = por %p235, %p236
      %p238 = scmp.ne.s32.totalorder %s229, %s230
      %p239 = scmp.eq.s32.totalorder %s30, 0
      %p240 = por %p238, %p239
      %p241 = scmp.ne.s32.totalorder %s229, %s230
      %p242 = scmp.eq.s32.totalorder %s31, 1
      %p243 = por %p241, %p242
      %p245 = scmp.ne.s32.totalorder %s230, %s244
      %p246 = scmp.eq.s32.totalorder %s31, 0
      %p247 = por %p245, %p246
      %s249 = sadd.s32 %s248, 1
      %p252 = scmp.eq.s32.totalorder %s25, 1
      %p253 = scmp.ne.s32.totalorder %s248, %s250
      %p254 = scmp.eq.s32.totalorder %s25, 0
      %p255 = por %p253, %p254
      %p256 = scmp.ne.s32.totalorder %s248, %s250
      %p257 = scmp.eq.s32.totalorder %s30, 1
      %p258 = por %p256, %p257
      %p259 = scmp.ne.s32.totalorder %s250, %s251
      %p260 = scmp.eq.s32.totalorder %s30, 0
      %p261 = por %p259, %p260
      %p262 = scmp.ne.s32.totalorder %s250, %s251
      %p263 = scmp.eq.s32.totalorder %s31, 1
      %p264 = por %p262, %p263
      %p266 = scmp.ne.s32.totalorder %s251, %s265
      %p267 = scmp.eq.s32.totalorder %s31, 0
      %p268 = por %p266, %p267
      %s270 = sadd.s32 %s269, 1
      %p273 = scmp.eq.s32.totalorder %s25, 1
      %p274 = scmp.ne.s32.totalorder %s269, %s271
      %p275 = scmp.eq.s32.totalorder %s25, 0
      %p276 = por %p274, %p275
      %p277 = scmp.ne.s32.totalorder %s269, %s271
      %p278 = scmp.eq.s32.totalorder %s30, 1
      %p279 = por %p277, %p278
      %p280 = scmp.ne.s32.totalorder %s271, %s272
      %p281 = scmp.eq.s32.totalorder %s30, 0
      %p282 = por %p280, %p281
      %p283 = scmp.ne.s32.totalorder %s271, %s272
      %p284 = scmp.eq.s32.totalorder %s31, 1
      %p285 = por %p283, %p284
      %p287 = scmp.ne.s32.totalorder %s272, %s286
      %p288 = scmp.eq.s32.totalorder %s31, 0
      %p289 = por %p287, %p288
      %s291 = sadd.s32 %s290, 1
      %p294 = scmp.eq.s32.totalorder %s25, 1
      %p295 = scmp.ne.s32.totalorder %s290, %s292
      %p296 = scmp.eq.s32.totalorder %s25, 0
      %p297 = por %p295, %p296
      %p298 = scmp.ne.s32.totalorder %s290, %s292
      %p299 = scmp.eq.s32.totalorder %s30, 1
      %p300 = por %p298, %p299
      %p301 = scmp.ne.s32.totalorder %s292, %s293
      %p302 = scmp.eq.s32.totalorder %s30, 0
      %p303 = por %p301, %p302
      %p304 = scmp.ne.s32.totalorder %s292, %s293
      %p305 = scmp.eq.s32.totalorder %s31, 1
      %p306 = por %p304, %p305
      %p308 = scmp.ne.s32.totalorder %s293, %s307
      %p309 = scmp.eq.s32.totalorder %s31, 0
      %p310 = por %p308, %p309
      %s312 = sadd.s32 %s311, 1
      %p315 = scmp.eq.s32.totalorder %s25, 1
      %p316 = scmp.ne.s32.totalorder %s311, %s313
      %p317 = scmp.eq.s32.totalorder %s25, 0
      %p318 = por %p316, %p317
      %p319 = scmp.ne.s32.totalorder %s311, %s313
      %p320 = scmp.eq.s32.totalorder %s30, 1
      %p321 = por %p319, %p320
      %p322 = scmp.ne.s32.totalorder %s313, %s314
      %p323 = scmp.eq.s32.totalorder %s30, 0
      %p324 = por %p322, %p323
      %p325 = scmp.ne.s32.totalorder %s313, %s314
      %p326 = scmp.eq.s32.totalorder %s31, 1
      %p327 = por %p325, %p326
      %p329 = scmp.ne.s32.totalorder %s314, %s328
      %p330 = scmp.eq.s32.totalorder %s31, 0
      %p331 = por %p329, %p330
      %s333 = sadd.s32 %s332, 1
      %p336 = scmp.eq.s32.totalorder %s25, 1
      %p337 = scmp.ne.s32.totalorder %s332, %s334
      %p338 = scmp.eq.s32.totalorder %s25, 0
      %p339 = por %p337, %p338
      %p340 = scmp.ne.s32.totalorder %s332, %s334
      %p341 = scmp.eq.s32.totalorder %s30, 1
      %p342 = por %p340, %p341
      %p343 = scmp.ne.s32.totalorder %s334, %s335
      %p344 = scmp.eq.s32.totalorder %s30, 0
      %p345 = por %p343, %p344
      %p346 = scmp.ne.s32.totalorder %s334, %s335
      %p347 = scmp.eq.s32.totalorder %s31, 1
      %p348 = por %p346, %p347
      %p350 = scmp.ne.s32.totalorder %s335, %s349
      %p351 = scmp.eq.s32.totalorder %s31, 0
      %p352 = por %p350, %p351
      %s353 = ssub.s32 %s25, %s32
      %p354 = scmp.eq.s32.totalorder %s353, 0
      %s356 = sadd.s32 %s355, 1
      %s357 = scalar_select %p354, %s355, %s356
      %p360 = pneg %p354
      %p361 = scmp.eq.s32.totalorder %s25, 1
      %p362 = por %p360, %p361
      %p363 = scmp.ne.s32.totalorder %s355, %s358
      %p364 = scmp.eq.s32.totalorder %s25, 0
      %p365 = por %p363, %p364
      %p366 = scmp.ne.s32.totalorder %s355, %s358
      %p367 = scmp.eq.s32.totalorder %s30, 1
      %p368 = por %p366, %p367
      %p369 = scmp.ne.s32.totalorder %s358, %s359
      %p370 = scmp.eq.s32.totalorder %s30, 0
      %p371 = por %p369, %p370
      %p372 = scmp.ne.s32.totalorder %s358, %s359
      %p373 = scmp.eq.s32.totalorder %s31, 1
      %p374 = por %p372, %p373
      %p376 = scmp.ne.s32.totalorder %s359, %s375
      %p377 = scmp.eq.s32.totalorder %s31, 0
      %p378 = por %p376, %p377
      %p379 = scmp.le.s32.totalorder 1, %s25
      %p380 = scmp.lt.s32.totalorder %s25, 3
      %p381 = pnand %p379, %p380
      %p382 = pneg %p381
      // Predicated region
      $region9: #{_lambda_.1} parent=5 // pred_check
        _
      $region10: #{_lambda_.1} parent=5 // pred_check_branch
        %384 = sbr.rel (%p381) target = $region12
      $region11: #{_lambda_.1} parent=5 // pred_region
        %s385 = ssub.s32 %s25, 1
        // Predicated region
        $region13: #{_lambda_.1} parent=11 // pred_check
          %p386 = pneg %p72
        $region14: #{_lambda_.1} parent=11 // pred_check_branch
          %388 = sbr.rel (%p386) target = $region16
        $region15: #{_lambda_.1} parent=11 // pred_region
          %s390 = ssub.s32 128, 128
          %391 = vsyncadd [#allocation3], %s390
          %s393 = sshll.u32 [#allocation2], 4
          %s394 = int_to_ptr.vmem [resolvable:$true] %s393
          %396 = dma.hbm_to_vmem [thread:$0]  %s1, 128, %s394, [#allocation3]
        $region16: #{_lambda_.1} parent=11 // pred_fallthru
          _
        // Predicated region
        $region17: #{_lambda_.1} parent=11 // pred_check
          %p397 = pneg %p93
        $region18: #{_lambda_.1} parent=11 // pred_check_branch
          %399 = sbr.rel (%p397) target = $region20
        $region19: #{_lambda_.1} parent=11 // pred_region
          %s401 = ssub.s32 16, 16
          %402 = vsyncadd [#allocation5], %s401
          %s404 = sshll.u32 [#allocation4], 4
          %s405 = int_to_ptr.vmem [resolvable:$true] %s404
          %407 = dma.hbm_to_vmem [thread:$0]  %s2, 16, %s405, [#allocation5]
        $region20: #{_lambda_.1} parent=11 // pred_fallthru
          _
        // Predicated region
        $region21: #{_lambda_.1} parent=11 // pred_check
          %p408 = pneg %p114
        $region22: #{_lambda_.1} parent=11 // pred_check_branch
          %410 = sbr.rel (%p408) target = $region24
        $region23: #{_lambda_.1} parent=11 // pred_region
          %s412 = ssub.s32 2048, 2048
          %413 = vsyncadd [#allocation5], %s412
          %s414 = sshll.u32 [#allocation6], 4
          %s415 = int_to_ptr.vmem [resolvable:$true] %s414
          %420 = dma.hbm_to_vmem [thread:$0]  %s3, 2048, %s415, [#allocation5], 128, 128, 8
        $region24: #{_lambda_.1} parent=11 // pred_fallthru
          _
        // Predicated region
        $region25: #{_lambda_.1} parent=11 // pred_check
          %p421 = pneg %p135
        $region26: #{_lambda_.1} parent=11 // pred_check_branch
          %423 = sbr.rel (%p421) target = $region28
        $region27: #{_lambda_.1} parent=11 // pred_region
          %s425 = ssub.s32 16, 16
          %426 = vsyncadd [#allocation8], %s425
          %s428 = sshll.u32 [#allocation7], 4
          %s429 = int_to_ptr.vmem [resolvable:$true] %s428
          %431 = dma.hbm_to_vmem [thread:$0]  %s4, 16, %s429, [#allocation8]
        $region28: #{_lambda_.1} parent=11 // pred_fallthru
          _
        // Predicated region
        $region29: #{_lambda_.1} parent=11 // pred_check
          %p432 = pneg %p156
        $region30: #{_lambda_.1} parent=11 // pred_check_branch
          %434 = sbr.rel (%p432) target = $region32
        $region31: #{_lambda_.1} parent=11 // pred_region
          %s436 = ssub.s32 256, 256
          %437 = vsyncadd [#allocation8], %s436
          %s438 = sshll.u32 [#allocation9], 4
          %s439 = int_to_ptr.vmem [resolvable:$true] %s438
          %444 = dma.hbm_to_vmem [thread:$0]  %s5, 256, %s439, [#allocation8], 128, 128, 8
        $region32: #{_lambda_.1} parent=11 // pred_fallthru
          _
        // Predicated region
        $region33: #{_lambda_.1} parent=11 // pred_check
          %p445 = pneg %p177
        $region34: #{_lambda_.1} parent=11 // pred_check_branch
          %447 = sbr.rel (%p445) target = $region36
        $region35: #{_lambda_.1} parent=11 // pred_region
          _
        $region36: #{_lambda_.1} parent=11 // pred_fallthru
          _
        // Predicated region
        $region37: #{_lambda_.1} parent=11 // pred_check
          %p448 = pneg %p198
        $region38: #{_lambda_.1} parent=11 // pred_check_branch
          %450 = sbr.rel (%p448) target = $region40
        $region39: #{_lambda_.1} parent=11 // pred_region
          _
        $region40: #{_lambda_.1} parent=11 // pred_fallthru
          _
        // Predicated region
        $region41: #{_lambda_.1} parent=11 // pred_check
          %p451 = pneg %p219
        $region42: #{_lambda_.1} parent=11 // pred_check_branch
          %453 = sbr.rel (%p451) target = $region44
        $region43: #{_lambda_.1} parent=11 // pred_region
          _
        $region44: #{_lambda_.1} parent=11 // pred_fallthru
          _
        // Predicated region
        $region45: #{_lambda_.1} parent=11 // pred_check
          %p454 = pneg %p240
        $region46: #{_lambda_.1} parent=11 // pred_check_branch
          %456 = sbr.rel (%p454) target = $region48
        $region47: #{_lambda_.1} parent=11 // pred_region
          %s458 = ssub.s32 64, 64
          %459 = vsyncadd [#allocation11], %s458
          %s461 = sshll.u32 [#allocation10], 4
          %s462 = int_to_ptr.vmem [resolvable:$true] %s461
          %464 = dma.hbm_to_vmem [thread:$0]  %s9, 64, %s462, [#allocation11]
        $region48: #{_lambda_.1} parent=11 // pred_fallthru
          _
        // Predicated region
        $region49: #{_lambda_.1} parent=11 // pred_check
          %p465 = pneg %p261
        $region50: #{_lambda_.1} parent=11 // pred_check_branch
          %467 = sbr.rel (%p465) target = $region52
        $region51: #{_lambda_.1} parent=11 // pred_region
          _
        $region52: #{_lambda_.1} parent=11 // pred_fallthru
          _
        // Predicated region
        $region53: #{_lambda_.1} parent=11 // pred_check
          %p468 = pneg %p282
        $region54: #{_lambda_.1} parent=11 // pred_check_branch
          %470 = sbr.rel (%p468) target = $region56
        $region55: #{_lambda_.1} parent=11 // pred_region
          %s472 = ssub.s32 1152, 1152
          %473 = vsyncadd [#allocation11], %s472
          %s474 = sshll.u32 [#allocation12], 4
          %s475 = int_to_ptr.vmem [resolvable:$true] %s474
          %480 = dma.hbm_to_vmem [thread:$0]  %s11, 1152, %s475, [#allocation11], 128, 128, 8
        $region56: #{_lambda_.1} parent=11 // pred_fallthru
          _
        // Predicated region
        $region57: #{_lambda_.1} parent=11 // pred_check
          %p481 = pneg %p303
        $region58: #{_lambda_.1} parent=11 // pred_check_branch
          %483 = sbr.rel (%p481) target = $region60
        $region59: #{_lambda_.1} parent=11 // pred_region
          _
        $region60: #{_lambda_.1} parent=11 // pred_fallthru
          _
        // Predicated region
        $region61: #{_lambda_.1} parent=11 // pred_check
          %p484 = pneg %p324
        $region62: #{_lambda_.1} parent=11 // pred_check_branch
          %486 = sbr.rel (%p484) target = $region64
        $region63: #{_lambda_.1} parent=11 // pred_region
          _
        $region64: #{_lambda_.1} parent=11 // pred_fallthru
          _
        // Predicated region
        $region65: #{_lambda_.1} parent=11 // pred_check
          %p487 = pneg %p345
        $region66: #{_lambda_.1} parent=11 // pred_check_branch
          %489 = sbr.rel (%p487) target = $region68
        $region67: #{_lambda_.1} parent=11 // pred_region
          _
        $region68: #{_lambda_.1} parent=11 // pred_fallthru
          _
      $region12: #{_lambda_.1} parent=5 // pred_fallthru
        _
      %p490 = scmp.lt.s32.totalorder %s25, 2
      // Predicated region
      $region69: #{_lambda_.1} parent=5 // pred_check
        %p491 = pneg %p490
      $region70: #{_lambda_.1} parent=5 // pred_check_branch
        %493 = sbr.rel (%p491) target = $region72
      $region71: #{_lambda_.1} parent=5 // pred_region
        // Predicated region
        $region73: #{_lambda_.1} parent=71 // pred_check
          %p494 = pneg %p45
        $region74: #{_lambda_.1} parent=71 // pred_check_branch
          %496 = sbr.rel (%p494) target = $region76
        $region75: #{_lambda_.1} parent=71 // pred_region
          %p497 = scmp.lt.s32.totalorder %s25, 1
          %s498 = scalar_select %p497, %s25, 1
          %s499 = scalar_lea.vmem %s0, %s498
        $region76: #{_lambda_.1} parent=71 // pred_fallthru
          _
      $region72: #{_lambda_.1} parent=5 // pred_fallthru
        _
      %p500 = scmp.le.s32.totalorder 1, %s25
      %p501 = scmp.lt.s32.totalorder %s25, 3
      %p502 = pnand %p500, %p501
      %p503 = pneg %p502
      // Predicated region
      $region77: #{_lambda_.1} parent=5 // pred_check
        _
      $region78: #{_lambda_.1} parent=5 // pred_check_branch
        %505 = sbr.rel (%p502) target = $region80
      $region79: #{_lambda_.1} parent=5 // pred_region
        %s506 = ssub.s32 %s25, 1
        // Predicated region
        $region81: #{_lambda_.1} parent=79 // pred_check
          %p507 = pneg %p72
        $region82: #{_lambda_.1} parent=79 // pred_check_branch
          %509 = sbr.rel (%p507) target = $region84
        $region83: #{_lambda_.1} parent=79 // pred_region
          %510 = dma.done [#allocation3], 128
        $region84: #{_lambda_.1} parent=79 // pred_fallthru
          _
        // Predicated region
        $region85: #{_lambda_.1} parent=79 // pred_check
          %p511 = pneg %p93
        $region86: #{_lambda_.1} parent=79 // pred_check_branch
          %513 = sbr.rel (%p511) target = $region88
        $region87: #{_lambda_.1} parent=79 // pred_region
          %514 = dma.done [#allocation5], 16
        $region88: #{_lambda_.1} parent=79 // pred_fallthru
          _
        // Predicated region
        $region89: #{_lambda_.1} parent=79 // pred_check
          %p515 = pneg %p114
        $region90: #{_lambda_.1} parent=79 // pred_check_branch
          %517 = sbr.rel (%p515) target = $region92
        $region91: #{_lambda_.1} parent=79 // pred_region
          %518 = dma.done [#allocation5], 2048
        $region92: #{_lambda_.1} parent=79 // pred_fallthru
          _
        // Predicated region
        $region93: #{_lambda_.1} parent=79 // pred_check
          %p519 = pneg %p135
        $region94: #{_lambda_.1} parent=79 // pred_check_branch
          %521 = sbr.rel (%p519) target = $region96
        $region95: #{_lambda_.1} parent=79 // pred_region
          %522 = dma.done [#allocation8], 16
        $region96: #{_lambda_.1} parent=79 // pred_fallthru
          _
        // Predicated region
        $region97: #{_lambda_.1} parent=79 // pred_check
          %p523 = pneg %p156
        $region98: #{_lambda_.1} parent=79 // pred_check_branch
          %525 = sbr.rel (%p523) target = $region100
        $region99: #{_lambda_.1} parent=79 // pred_region
          %526 = dma.done [#allocation8], 256
        $region100: #{_lambda_.1} parent=79 // pred_fallthru
          _
        // Predicated region
        $region101: #{_lambda_.1} parent=79 // pred_check
          %p527 = pneg %p240
        $region102: #{_lambda_.1} parent=79 // pred_check_branch
          %529 = sbr.rel (%p527) target = $region104
        $region103: #{_lambda_.1} parent=79 // pred_region
          %530 = dma.done [#allocation11], 64
        $region104: #{_lambda_.1} parent=79 // pred_fallthru
          _
        // Predicated region
        $region105: #{_lambda_.1} parent=79 // pred_check
          %p531 = pneg %p282
        $region106: #{_lambda_.1} parent=79 // pred_check_branch
          %533 = sbr.rel (%p531) target = $region108
        $region107: #{_lambda_.1} parent=79 // pred_region
          %534 = dma.done [#allocation11], 1152
        $region108: #{_lambda_.1} parent=79 // pred_fallthru
          _
        %p535 = scmp.lt.s32.totalorder %s30, 1
        %s536 = scalar_select %p535, %s30, 1
        %s537 = scalar_lea.vmem %s0, %s536
        %p538 = pneg %p51
        %p539 = pneg %p48
        %p540 = pneg %p72
        %p541 = pneg %p69
        %p542 = pneg %p93
        %p543 = pneg %p90
        %p544 = pneg %p114
        %p545 = pneg %p111
        %p546 = pneg %p135
        %p547 = pneg %p132
        %p548 = pneg %p156
        %p549 = pneg %p153
        %p550 = pneg %p177
        %p551 = pneg %p174
        %p552 = pneg %p198
        %p553 = pneg %p195
        %p554 = pneg %p219
        %p555 = pneg %p216
        %p556 = pneg %p240
        %p557 = pneg %p237
        %p558 = pneg %p261
        %p559 = pneg %p258
        %p560 = pneg %p282
        %p561 = pneg %p279
        %p562 = pneg %p303
        %p563 = pneg %p300
        %p564 = pneg %p324
        %p565 = pneg %p321
        %p566 = pneg %p345
        %p567 = pneg %p342
        %p568 = pneg %p371
        %p569 = pneg %p368
        %p570 = scmp.lt.s32.totalorder %s30, 1
        %s571 = scalar_select %p570, %s30, 1
        %s572 = smul.addr %s571, 4
        %s573 = smul.addr %s572, 8
        %s574 = scalar_lea.vmem %s15, %s573
        %p575 = scmp.lt.s32.totalorder %s30, 1
        %s576 = scalar_select %p575, %s30, 1
        %s577 = scalar_lea.vmem %s0, %s576
        %p578 = scmp.lt.s32.totalorder %s30, 1
        %s579 = scalar_select %p578, %s30, 1
        %s580 = smul.addr %s579, 4
        %s581 = smul.addr %s580, 8
        %s582 = scalar_lea.vmem %s15, %s581
        %v583 = vld [vmem:[%s577] sm:$0x1]
        %v585 = vlaneseq
        %v586 = vshrl.u32 %v585, 7
        %v587 = vsub.s32 0, %v586
        %v588 = vrot.slane %v583, %v587
        %v589 = vld [vmem:[#allocation2] sm:$0xff]
        %v590 = vld [vmem:[#allocation4] sm:$0x1]
        %v592 = vlaneseq
        %v593 = vshrl.u32 %v592, 7
        %v594 = vsub.s32 0, %v593
        %v595 = vrot.slane %v590, %v594
        %vm597 = vcmask 64512
        %v598 = vsel %vm597, %v588, 0
        %600 = vmatprep.subr.mxu0 0.0
        %601 = vmatpush1.msra.mxu0 %v589
        %602 = vmatprep.subr.mxu0 0.0
        %603 = vmatpush1.msra.mxu0 0.0
        %604 = vmatprep.subr.mxu0 0.0
        %605 = vmatpush1.msra.mxu0 0.0
        %606 = vmatprep.subr.mxu0 0.0
        %607 = vmatpush1.msra.mxu0 0.0
        %608 = vmatprep.subr.mxu0 0.0
        %609 = vmatpush1.msra.mxu0 0.0
        %610 = vmatprep.subr.mxu0 0.0
        %611 = vmatpush1.msra.mxu0 0.0
        %612 = vmatprep.subr.mxu0 0.0
        %613 = vmatpush1.msra.mxu0 0.0
        %614 = vmatprep.subr.mxu0 0.0
        %615 = vmatpush1.msra.mxu0 0.0
        %616 = vmatprep.subr.mxu0 0.0
        %617 = vmatpush1.msra.mxu0 0.0
        %618 = vmatprep.subr.mxu0 0.0
        %619 = vmatpush1.msra.mxu0 0.0
        %620 = vmatprep.subr.mxu0 0.0
        %621 = vmatpush1.msra.mxu0 0.0
        %622 = vmatprep.subr.mxu0 0.0
        %623 = vmatpush1.msra.mxu0 0.0
        %624 = vmatprep.subr.mxu0 0.0
        %625 = vmatpush1.msra.mxu0 0.0
        %626 = vmatprep.subr.mxu0 0.0
        %627 = vmatpush1.msra.mxu0 0.0
        %628 = vmatprep.subr.mxu0 0.0
        %629 = vmatpush1.msra.mxu0 0.0
        %630 = vmatprep.subr.mxu0 0.0
        %631 = vmatpush1.msra.mxu0 0.0
        %632 = vmatprep.subr.mxu0 0.0
        %633 = vmatpush1.msra.mxu0 0.0
        %634 = vmatprep.subr.mxu0 0.0
        %635 = vmatpush1.msra.mxu0 0.0
        %636 = vmatprep.subr.mxu0 0.0
        %637 = vmatpush1.msra.mxu0 0.0
        %638 = vmatprep.subr.mxu0 0.0
        %639 = vmatpush1.msra.mxu0 0.0
        %640 = vmatprep.subr.mxu0 0.0
        %641 = vmatpush1.msra.mxu0 0.0
        %642 = vmatprep.subr.mxu0 0.0
        %643 = vmatpush1.msra.mxu0 0.0
        %644 = vmatprep.subr.mxu0 0.0
        %645 = vmatpush1.msra.mxu0 0.0
        %646 = vmatprep.subr.mxu0 0.0
        %647 = vmatpush1.msra.mxu0 0.0
        %648 = vmatprep.subr.mxu0 0.0
        %649 = vmatpush1.msra.mxu0 0.0
        %650 = vmatprep.subr.mxu0 0.0
        %651 = vmatpush1.msra.mxu0 0.0
        %652 = vmatprep.subr.mxu0 0.0
        %653 = vmatpush1.msra.mxu0 0.0
        %654 = vmatprep.subr.mxu0 0.0
        %655 = vmatpush1.msra.mxu0 0.0
        %656 = vmatprep.subr.mxu0 0.0
        %657 = vmatpush1.msra.mxu0 0.0
        %658 = vmatprep.subr.mxu0 0.0
        %659 = vmatpush1.msra.mxu0 0.0
        %660 = vmatprep.subr.mxu0 0.0
        %661 = vmatpush1.msra.mxu0 0.0
        %662 = vmatprep.subr.mxu0 0.0
        %663 = vmatpush1.msra.mxu0 0.0
        %664 = vmatprep.mubr.f32.mxu0 0.0
        %665 = vmatmul.mubr.f32.gmra.mrb[0].mxu0 %v598
        %v666 = vpop.f32.mrb[0].mxu0
        %v667 = vadd.f32 %v595, %v666
        %v668 = vpop.f32.mrb[0].mxu0
        %669 = vdwg.mxu0
        %v670 = vmax.f32 %v667, 0.0
        %v671 = vld [vmem:[#allocation6] sm:$0xff]
        %v672 = vld [vmem:[#allocation6 + $0x8] sm:$0xff]
        %v673 = vld [vmem:[#allocation6 + $0x10] sm:$0xff]
        %v674 = vld [vmem:[#allocation6 + $0x18] sm:$0xff]
        %v675 = vld [vmem:[#allocation6 + $0x20] sm:$0xff]
        %v676 = vld [vmem:[#allocation6 + $0x28] sm:$0xff]
        %v677 = vld [vmem:[#allocation6 + $0x30] sm:$0xff]
        %v678 = vld [vmem:[#allocation6 + $0x38] sm:$0xff]
        %v679 = vld [vmem:[#allocation6 + $0x40] sm:$0xff]
        %v680 = vld [vmem:[#allocation6 + $0x48] sm:$0xff]
        %v681 = vld [vmem:[#allocation6 + $0x50] sm:$0xff]
        %v682 = vld [vmem:[#allocation6 + $0x58] sm:$0xff]
        %v683 = vld [vmem:[#allocation6 + $0x60] sm:$0xff]
        %v684 = vld [vmem:[#allocation6 + $0x68] sm:$0xff]
        %v685 = vld [vmem:[#allocation6 + $0x70] sm:$0xff]
        %v686 = vld [vmem:[#allocation6 + $0x78] sm:$0xff]
        %v687 = vld [vmem:[#allocation7] sm:$0x1]
        %v689 = vlaneseq
        %v690 = vshrl.u32 %v689, 7
        %v691 = vsub.s32 0, %v690
        %v692 = vrot.slane %v687, %v691
        %694 = vmatprep.subr.mxu0 0.0
        %695 = vmatpush1.msra.mxu0 %v671
        %696 = vmatprep.subr.mxu0 0.0
        %697 = vmatpush1.msra.mxu0 %v672
        %698 = vmatprep.subr.mxu0 0.0
        %699 = vmatpush1.msra.mxu0 %v673
        %700 = vmatprep.subr.mxu0 0.0
        %701 = vmatpush1.msra.mxu0 %v674
        %702 = vmatprep.subr.mxu0 0.0
        %703 = vmatpush1.msra.mxu0 %v675
        %704 = vmatprep.subr.mxu0 0.0
        %705 = vmatpush1.msra.mxu0 %v676
        %706 = vmatprep.subr.mxu0 0.0
        %707 = vmatpush1.msra.mxu0 %v677
        %708 = vmatprep.subr.mxu0 0.0
        %709 = vmatpush1.msra.mxu0 %v678
        %710 = vmatprep.subr.mxu0 0.0
        %711 = vmatpush1.msra.mxu0 %v679
        %712 = vmatprep.subr.mxu0 0.0
        %713 = vmatpush1.msra.mxu0 %v680
        %714 = vmatprep.subr.mxu0 0.0
        %715 = vmatpush1.msra.mxu0 %v681
        %716 = vmatprep.subr.mxu0 0.0
        %717 = vmatpush1.msra.mxu0 %v682
        %718 = vmatprep.subr.mxu0 0.0
        %719 = vmatpush1.msra.mxu0 %v683
        %720 = vmatprep.subr.mxu0 0.0
        %721 = vmatpush1.msra.mxu0 %v684
        %722 = vmatprep.subr.mxu0 0.0
        %723 = vmatpush1.msra.mxu0 %v685
        %724 = vmatprep.subr.mxu0 0.0
        %725 = vmatpush1.msra.mxu0 %v686
        %726 = vmatprep.subr.mxu0 0.0
        %727 = vmatpush1.msra.mxu0 0.0
        %728 = vmatprep.subr.mxu0 0.0
        %729 = vmatpush1.msra.mxu0 0.0
        %730 = vmatprep.subr.mxu0 0.0
        %731 = vmatpush1.msra.mxu0 0.0
        %732 = vmatprep.subr.mxu0 0.0
        %733 = vmatpush1.msra.mxu0 0.0
        %734 = vmatprep.subr.mxu0 0.0
        %735 = vmatpush1.msra.mxu0 0.0
        %736 = vmatprep.subr.mxu0 0.0
        %737 = vmatpush1.msra.mxu0 0.0
        %738 = vmatprep.subr.mxu0 0.0
        %739 = vmatpush1.msra.mxu0 0.0
        %740 = vmatprep.subr.mxu0 0.0
        %741 = vmatpush1.msra.mxu0 0.0
        %742 = vmatprep.subr.mxu0 0.0
        %743 = vmatpush1.msra.mxu0 0.0
        %744 = vmatprep.subr.mxu0 0.0
        %745 = vmatpush1.msra.mxu0 0.0
        %746 = vmatprep.subr.mxu0 0.0
        %747 = vmatpush1.msra.mxu0 0.0
        %748 = vmatprep.subr.mxu0 0.0
        %749 = vmatpush1.msra.mxu0 0.0
        %750 = vmatprep.subr.mxu0 0.0
        %751 = vmatpush1.msra.mxu0 0.0
        %752 = vmatprep.subr.mxu0 0.0
        %753 = vmatpush1.msra.mxu0 0.0
        %754 = vmatprep.subr.mxu0 0.0
        %755 = vmatpush1.msra.mxu0 0.0
        %756 = vmatprep.subr.mxu0 0.0
        %757 = vmatpush1.msra.mxu0 0.0
        %758 = vmatprep.mubr.f32.mxu0 0.0
        %759 = vmatmul.mubr.f32.gmra.mrb[0].mxu0 %v670
        %v760 = vpop.f32.mrb[0].mxu0
        %v761 = vadd.f32 %v692, %v760
        %v762 = vpop.f32.mrb[0].mxu0
        %763 = vdwg.mxu0
        %v764 = vmax.f32 %v761, 0.0
        %v766 = vrot.slane %v764, 7
        %767 = vrot.lane.b32.xlu0 %v766, 112
        %v768 = vpop.permute.xlu0 %767
        %v770 = vrot.slane %v764, 6
        %771 = vrot.lane.b32.xlu0 %v770, 96
        %v772 = vpop.permute.xlu0 %771
        %v774 = vrot.slane %v764, 5
        %775 = vrot.lane.b32.xlu0 %v774, 80
        %v776 = vpop.permute.xlu0 %775
        %v778 = vrot.slane %v764, 4
        %779 = vrot.lane.b32.xlu0 %v778, 64
        %v780 = vpop.permute.xlu0 %779
        %v782 = vrot.slane %v764, 3
        %783 = vrot.lane.b32.xlu0 %v782, 48
        %v784 = vpop.permute.xlu0 %783
        %v786 = vrot.slane %v764, 2
        %787 = vrot.lane.b32.xlu0 %v786, 32
        %v788 = vpop.permute.xlu0 %787
        %v790 = vrot.slane %v764, 1
        %791 = vrot.lane.b32.xlu0 %v790, 16
        %v792 = vpop.permute.xlu0 %791
        %vm794 = vcmask 1040384
        %v795 = vsel %vm794, %v764, %v768
        %vm796 = vcmask 1041408
        %v797 = vsel %vm796, %v795, %v772
        %vm798 = vcmask 1042432
        %v799 = vsel %vm798, %v797, %v776
        %vm800 = vcmask 1043456
        %v801 = vsel %vm800, %v799, %v780
        %vm802 = vcmask 1044480
        %v803 = vsel %vm802, %v801, %v784
        %vm804 = vcmask 1045504
        %v805 = vsel %vm804, %v803, %v788
        %vm806 = vcmask 1046528
        %v807 = vsel %vm806, %v805, %v792
        %v808 = vld [vmem:[#allocation9] sm:$0xff]
        %v809 = vld [vmem:[#allocation9 + $0x8] sm:$0xff]
        %v810 = vld [vmem:[%s7] sm:$0xff]
        %vm811 = vcmask 130048
        %v813 = vsel %vm811, %v807, 0
        %815 = vmatprep.subr.mxu0 0.0
        %816 = vmatpush1.msra.mxu0 %v808
        %817 = vmatprep.subr.mxu0 0.0
        %818 = vmatpush1.msra.mxu0 %v809
        %819 = vmatprep.subr.mxu0 0.0
        %820 = vmatpush1.msra.mxu0 0.0
        %821 = vmatprep.subr.mxu0 0.0
        %822 = vmatpush1.msra.mxu0 0.0
        %823 = vmatprep.subr.mxu0 0.0
        %824 = vmatpush1.msra.mxu0 0.0
        %825 = vmatprep.subr.mxu0 0.0
        %826 = vmatpush1.msra.mxu0 0.0
        %827 = vmatprep.subr.mxu0 0.0
        %828 = vmatpush1.msra.mxu0 0.0
        %829 = vmatprep.subr.mxu0 0.0
        %830 = vmatpush1.msra.mxu0 0.0
        %831 = vmatprep.subr.mxu0 0.0
        %832 = vmatpush1.msra.mxu0 0.0
        %833 = vmatprep.subr.mxu0 0.0
        %834 = vmatpush1.msra.mxu0 0.0
        %835 = vmatprep.subr.mxu0 0.0
        %836 = vmatpush1.msra.mxu0 0.0
        %837 = vmatprep.subr.mxu0 0.0
        %838 = vmatpush1.msra.mxu0 0.0
        %839 = vmatprep.subr.mxu0 0.0
        %840 = vmatpush1.msra.mxu0 0.0
        %841 = vmatprep.subr.mxu0 0.0
        %842 = vmatpush1.msra.mxu0 0.0
        %843 = vmatprep.subr.mxu0 0.0
        %844 = vmatpush1.msra.mxu0 0.0
        %845 = vmatprep.subr.mxu0 0.0
        %846 = vmatpush1.msra.mxu0 0.0
        %847 = vmatprep.subr.mxu0 0.0
        %848 = vmatpush1.msra.mxu0 0.0
        %849 = vmatprep.subr.mxu0 0.0
        %850 = vmatpush1.msra.mxu0 0.0
        %851 = vmatprep.subr.mxu0 0.0
        %852 = vmatpush1.msra.mxu0 0.0
        %853 = vmatprep.subr.mxu0 0.0
        %854 = vmatpush1.msra.mxu0 0.0
        %855 = vmatprep.subr.mxu0 0.0
        %856 = vmatpush1.msra.mxu0 0.0
        %857 = vmatprep.subr.mxu0 0.0
        %858 = vmatpush1.msra.mxu0 0.0
        %859 = vmatprep.subr.mxu0 0.0
        %860 = vmatpush1.msra.mxu0 0.0
        %861 = vmatprep.subr.mxu0 0.0
        %862 = vmatpush1.msra.mxu0 0.0
        %863 = vmatprep.subr.mxu0 0.0
        %864 = vmatpush1.msra.mxu0 0.0
        %865 = vmatprep.subr.mxu0 0.0
        %866 = vmatpush1.msra.mxu0 0.0
        %867 = vmatprep.subr.mxu0 0.0
        %868 = vmatpush1.msra.mxu0 0.0
        %869 = vmatprep.subr.mxu0 0.0
        %870 = vmatpush1.msra.mxu0 0.0
        %871 = vmatprep.subr.mxu0 0.0
        %872 = vmatpush1.msra.mxu0 0.0
        %873 = vmatprep.subr.mxu0 0.0
        %874 = vmatpush1.msra.mxu0 0.0
        %875 = vmatprep.subr.mxu0 0.0
        %876 = vmatpush1.msra.mxu0 0.0
        %877 = vmatprep.subr.mxu0 0.0
        %878 = vmatpush1.msra.mxu0 0.0
        %879 = vmatprep.mubr.f32.mxu0 0.0
        %880 = vmatmul.mubr.f32.gmra.mrb[0].mxu0 %v813
        %v881 = vpop.f32.mrb[0].mxu0
        %v882 = vadd.f32 0.0, %v881
        %v883 = vpop.f32.mrb[0].mxu0
        %884 = vdwg.mxu0
        %v885 = vld [vmem:[%s6] sm:$0xff]
        %s886 = scalar_lea.vmem %s6, 8
        %v887 = vld [vmem:[%s886] sm:$0xff]
        %889 = vrot.lane.b32.xlu0 %v882, 124
        %v890 = vpop.permute.xlu0 %889
        %v893 = vsel %vm597, %v887, 0
        %895 = vmatprep.subr.mxu0 0.0
        %896 = vmatpush1.msra.mxu0 %v890
        %897 = vmatprep.subr.mxu0 0.0
        %898 = vmatpush1.msra.mxu0 0.0
        %899 = vmatprep.subr.mxu0 0.0
        %900 = vmatpush1.msra.mxu0 0.0
        %901 = vmatprep.subr.mxu0 0.0
        %902 = vmatpush1.msra.mxu0 0.0
        %903 = vmatprep.subr.mxu0 0.0
        %904 = vmatpush1.msra.mxu0 0.0
        %905 = vmatprep.subr.mxu0 0.0
        %906 = vmatpush1.msra.mxu0 0.0
        %907 = vmatprep.subr.mxu0 0.0
        %908 = vmatpush1.msra.mxu0 0.0
        %909 = vmatprep.subr.mxu0 0.0
        %910 = vmatpush1.msra.mxu0 0.0
        %911 = vmatprep.subr.mxu0 0.0
        %912 = vmatpush1.msra.mxu0 0.0
        %913 = vmatprep.subr.mxu0 0.0
        %914 = vmatpush1.msra.mxu0 0.0
        %915 = vmatprep.subr.mxu0 0.0
        %916 = vmatpush1.msra.mxu0 0.0
        %917 = vmatprep.subr.mxu0 0.0
        %918 = vmatpush1.msra.mxu0 0.0
        %919 = vmatprep.subr.mxu0 0.0
        %920 = vmatpush1.msra.mxu0 0.0
        %921 = vmatprep.subr.mxu0 0.0
        %922 = vmatpush1.msra.mxu0 0.0
        %923 = vmatprep.subr.mxu0 0.0
        %924 = vmatpush1.msra.mxu0 0.0
        %925 = vmatprep.subr.mxu0 0.0
        %926 = vmatpush1.msra.mxu0 0.0
        %927 = vmatprep.subr.mxu0 0.0
        %928 = vmatpush1.msra.mxu0 0.0
        %929 = vmatprep.subr.mxu0 0.0
        %930 = vmatpush1.msra.mxu0 0.0
        %931 = vmatprep.subr.mxu0 0.0
        %932 = vmatpush1.msra.mxu0 0.0
        %933 = vmatprep.subr.mxu0 0.0
        %934 = vmatpush1.msra.mxu0 0.0
        %935 = vmatprep.subr.mxu0 0.0
        %936 = vmatpush1.msra.mxu0 0.0
        %937 = vmatprep.subr.mxu0 0.0
        %938 = vmatpush1.msra.mxu0 0.0
        %939 = vmatprep.subr.mxu0 0.0
        %940 = vmatpush1.msra.mxu0 0.0
        %941 = vmatprep.subr.mxu0 0.0
        %942 = vmatpush1.msra.mxu0 0.0
        %943 = vmatprep.subr.mxu0 0.0
        %944 = vmatpush1.msra.mxu0 0.0
        %945 = vmatprep.subr.mxu0 0.0
        %946 = vmatpush1.msra.mxu0 0.0
        %947 = vmatprep.subr.mxu0 0.0
        %948 = vmatpush1.msra.mxu0 0.0
        %949 = vmatprep.subr.mxu0 0.0
        %950 = vmatpush1.msra.mxu0 0.0
        %951 = vmatprep.subr.mxu0 0.0
        %952 = vmatpush1.msra.mxu0 0.0
        %953 = vmatprep.subr.mxu0 0.0
        %954 = vmatpush1.msra.mxu0 0.0
        %955 = vmatprep.subr.mxu0 0.0
        %956 = vmatpush1.msra.mxu0 0.0
        %957 = vmatprep.subr.mxu0 0.0
        %958 = vmatpush1.msra.mxu0 0.0
        %959 = vmatprep.mubr.f32.mxu0 0.0
        %960 = vmatmul.mubr.f32.gmra.mrb[0].mxu0 %v893
        %v961 = vpop.f32.mrb[0].mxu0
        %v962 = vadd.f32 0.0, %v961
        %v963 = vpop.f32.mrb[0].mxu0
        %964 = vdwg.mxu0
        %v966 = vsel %vm597, %v885, 0
        %968 = vmatprep.subr.mxu0 0.0
        %969 = vmatpush1.msra.mxu0 %v882
        %970 = vmatprep.subr.mxu0 0.0
        %971 = vmatpush1.msra.mxu0 0.0
        %972 = vmatprep.subr.mxu0 0.0
        %973 = vmatpush1.msra.mxu0 0.0
        %974 = vmatprep.subr.mxu0 0.0
        %975 = vmatpush1.msra.mxu0 0.0
        %976 = vmatprep.subr.mxu0 0.0
        %977 = vmatpush1.msra.mxu0 0.0
        %978 = vmatprep.subr.mxu0 0.0
        %979 = vmatpush1.msra.mxu0 0.0
        %980 = vmatprep.subr.mxu0 0.0
        %981 = vmatpush1.msra.mxu0 0.0
        %982 = vmatprep.subr.mxu0 0.0
        %983 = vmatpush1.msra.mxu0 0.0
        %984 = vmatprep.subr.mxu0 0.0
        %985 = vmatpush1.msra.mxu0 0.0
        %986 = vmatprep.subr.mxu0 0.0
        %987 = vmatpush1.msra.mxu0 0.0
        %988 = vmatprep.subr.mxu0 0.0
        %989 = vmatpush1.msra.mxu0 0.0
        %990 = vmatprep.subr.mxu0 0.0
        %991 = vmatpush1.msra.mxu0 0.0
        %992 = vmatprep.subr.mxu0 0.0
        %993 = vmatpush1.msra.mxu0 0.0
        %994 = vmatprep.subr.mxu0 0.0
        %995 = vmatpush1.msra.mxu0 0.0
        %996 = vmatprep.subr.mxu0 0.0
        %997 = vmatpush1.msra.mxu0 0.0
        %998 = vmatprep.subr.mxu0 0.0
        %999 = vmatpush1.msra.mxu0 0.0
        %1000 = vmatprep.subr.mxu0 0.0
        %1001 = vmatpush1.msra.mxu0 0.0
        %1002 = vmatprep.subr.mxu0 0.0
        %1003 = vmatpush1.msra.mxu0 0.0
        %1004 = vmatprep.subr.mxu0 0.0
        %1005 = vmatpush1.msra.mxu0 0.0
        %1006 = vmatprep.subr.mxu0 0.0
        %1007 = vmatpush1.msra.mxu0 0.0
        %1008 = vmatprep.subr.mxu0 0.0
        %1009 = vmatpush1.msra.mxu0 0.0
        %1010 = vmatprep.subr.mxu0 0.0
        %1011 = vmatpush1.msra.mxu0 0.0
        %1012 = vmatprep.subr.mxu0 0.0
        %1013 = vmatpush1.msra.mxu0 0.0
        %1014 = vmatprep.subr.mxu0 0.0
        %1015 = vmatpush1.msra.mxu0 0.0
        %1016 = vmatprep.subr.mxu0 0.0
        %1017 = vmatpush1.msra.mxu0 0.0
        %1018 = vmatprep.subr.mxu0 0.0
        %1019 = vmatpush1.msra.mxu0 0.0
        %1020 = vmatprep.subr.mxu0 0.0
        %1021 = vmatpush1.msra.mxu0 0.0
        %1022 = vmatprep.subr.mxu0 0.0
        %1023 = vmatpush1.msra.mxu0 0.0
        %1024 = vmatprep.subr.mxu0 0.0
        %1025 = vmatpush1.msra.mxu0 0.0
        %1026 = vmatprep.subr.mxu0 0.0
        %1027 = vmatpush1.msra.mxu0 0.0
        %1028 = vmatprep.subr.mxu0 0.0
        %1029 = vmatpush1.msra.mxu0 0.0
        %1030 = vmatprep.subr.mxu0 0.0
        %1031 = vmatpush1.msra.mxu0 0.0
        %1032 = vmatprep.mubr.f32.mxu0 0.0
        %1033 = vmatmul.mubr.f32.gmra.mrb[0].mxu0 %v966
        %v1034 = vpop.f32.mrb[0].mxu0
        %v1035 = vadd.f32 %v962, %v1034
        %v1036 = vpop.f32.mrb[0].mxu0
        %1037 = vdwg.mxu0
        %s1038 = scalar_lea.vmem %s6, 16
        %v1039 = vld [vmem:[%s1038] sm:$0xff]
        %1040 = vrot.lane.b32.xlu0 %v882, 120
        %v1041 = vpop.permute.xlu0 %1040
        %v1044 = vsel %vm597, %v1039, 0
        %1046 = vmatprep.subr.mxu0 0.0
        %1047 = vmatpush1.msra.mxu0 %v1041
        %1048 = vmatprep.subr.mxu0 0.0
        %1049 = vmatpush1.msra.mxu0 0.0
        %1050 = vmatprep.subr.mxu0 0.0
        %1051 = vmatpush1.msra.mxu0 0.0
        %1052 = vmatprep.subr.mxu0 0.0
        %1053 = vmatpush1.msra.mxu0 0.0
        %1054 = vmatprep.subr.mxu0 0.0
        %1055 = vmatpush1.msra.mxu0 0.0
        %1056 = vmatprep.subr.mxu0 0.0
        %1057 = vmatpush1.msra.mxu0 0.0
        %1058 = vmatprep.subr.mxu0 0.0
        %1059 = vmatpush1.msra.mxu0 0.0
        %1060 = vmatprep.subr.mxu0 0.0
        %1061 = vmatpush1.msra.mxu0 0.0
        %1062 = vmatprep.subr.mxu0 0.0
        %1063 = vmatpush1.msra.mxu0 0.0
        %1064 = vmatprep.subr.mxu0 0.0
        %1065 = vmatpush1.msra.mxu0 0.0
        %1066 = vmatprep.subr.mxu0 0.0
        %1067 = vmatpush1.msra.mxu0 0.0
        %1068 = vmatprep.subr.mxu0 0.0
        %1069 = vmatpush1.msra.mxu0 0.0
        %1070 = vmatprep.subr.mxu0 0.0
        %1071 = vmatpush1.msra.mxu0 0.0
        %1072 = vmatprep.subr.mxu0 0.0
        %1073 = vmatpush1.msra.mxu0 0.0
        %1074 = vmatprep.subr.mxu0 0.0
        %1075 = vmatpush1.msra.mxu0 0.0
        %1076 = vmatprep.subr.mxu0 0.0
        %1077 = vmatpush1.msra.mxu0 0.0
        %1078 = vmatprep.subr.mxu0 0.0
        %1079 = vmatpush1.msra.mxu0 0.0
        %1080 = vmatprep.subr.mxu0 0.0
        %1081 = vmatpush1.msra.mxu0 0.0
        %1082 = vmatprep.subr.mxu0 0.0
        %1083 = vmatpush1.msra.mxu0 0.0
        %1084 = vmatprep.subr.mxu0 0.0
        %1085 = vmatpush1.msra.mxu0 0.0
        %1086 = vmatprep.subr.mxu0 0.0
        %1087 = vmatpush1.msra.mxu0 0.0
        %1088 = vmatprep.subr.mxu0 0.0
        %1089 = vmatpush1.msra.mxu0 0.0
        %1090 = vmatprep.subr.mxu0 0.0
        %1091 = vmatpush1.msra.mxu0 0.0
        %1092 = vmatprep.subr.mxu0 0.0
        %1093 = vmatpush1.msra.mxu0 0.0
        %1094 = vmatprep.subr.mxu0 0.0
        %1095 = vmatpush1.msra.mxu0 0.0
        %1096 = vmatprep.subr.mxu0 0.0
        %1097 = vmatpush1.msra.mxu0 0.0
        %1098 = vmatprep.subr.mxu0 0.0
        %1099 = vmatpush1.msra.mxu0 0.0
        %1100 = vmatprep.subr.mxu0 0.0
        %1101 = vmatpush1.msra.mxu0 0.0
        %1102 = vmatprep.subr.mxu0 0.0
        %1103 = vmatpush1.msra.mxu0 0.0
        %1104 = vmatprep.subr.mxu0 0.0
        %1105 = vmatpush1.msra.mxu0 0.0
        %1106 = vmatprep.subr.mxu0 0.0
        %1107 = vmatpush1.msra.mxu0 0.0
        %1108 = vmatprep.subr.mxu0 0.0
        %1109 = vmatpush1.msra.mxu0 0.0
        %1110 = vmatprep.mubr.f32.mxu0 0.0
        %1111 = vmatmul.mubr.f32.gmra.mrb[0].mxu0 %v1044
        %v1112 = vpop.f32.mrb[0].mxu0
        %v1113 = vadd.f32 0.0, %v1112
        %v1114 = vpop.f32.mrb[0].mxu0
        %1115 = vdwg.mxu0
        %v1116 = vadd.f32 %v1035, %v1113
        %s1117 = scalar_lea.vmem %s6, 24
        %v1118 = vld [vmem:[%s1117] sm:$0xff]
        %1119 = vrot.lane.b32.xlu0 %v882, 116
        %v1120 = vpop.permute.xlu0 %1119
        %v1123 = vsel %vm597, %v1118, 0
        %1125 = vmatprep.subr.mxu0 0.0
        %1126 = vmatpush1.msra.mxu0 %v1120
        %1127 = vmatprep.subr.mxu0 0.0
        %1128 = vmatpush1.msra.mxu0 0.0
        %1129 = vmatprep.subr.mxu0 0.0
        %1130 = vmatpush1.msra.mxu0 0.0
        %1131 = vmatprep.subr.mxu0 0.0
        %1132 = vmatpush1.msra.mxu0 0.0
        %1133 = vmatprep.subr.mxu0 0.0
        %1134 = vmatpush1.msra.mxu0 0.0
        %1135 = vmatprep.subr.mxu0 0.0
        %1136 = vmatpush1.msra.mxu0 0.0
        %1137 = vmatprep.subr.mxu0 0.0
        %1138 = vmatpush1.msra.mxu0 0.0
        %1139 = vmatprep.subr.mxu0 0.0
        %1140 = vmatpush1.msra.mxu0 0.0
        %1141 = vmatprep.subr.mxu0 0.0
        %1142 = vmatpush1.msra.mxu0 0.0
        %1143 = vmatprep.subr.mxu0 0.0
        %1144 = vmatpush1.msra.mxu0 0.0
        %1145 = vmatprep.subr.mxu0 0.0
        %1146 = vmatpush1.msra.mxu0 0.0
        %1147 = vmatprep.subr.mxu0 0.0
        %1148 = vmatpush1.msra.mxu0 0.0
        %1149 = vmatprep.subr.mxu0 0.0
        %1150 = vmatpush1.msra.mxu0 0.0
        %1151 = vmatprep.subr.mxu0 0.0
        %1152 = vmatpush1.msra.mxu0 0.0
        %1153 = vmatprep.subr.mxu0 0.0
        %1154 = vmatpush1.msra.mxu0 0.0
        %1155 = vmatprep.subr.mxu0 0.0
        %1156 = vmatpush1.msra.mxu0 0.0
        %1157 = vmatprep.subr.mxu0 0.0
        %1158 = vmatpush1.msra.mxu0 0.0
        %1159 = vmatprep.subr.mxu0 0.0
        %1160 = vmatpush1.msra.mxu0 0.0
        %1161 = vmatprep.subr.mxu0 0.0
        %1162 = vmatpush1.msra.mxu0 0.0
        %1163 = vmatprep.subr.mxu0 0.0
        %1164 = vmatpush1.msra.mxu0 0.0
        %1165 = vmatprep.subr.mxu0 0.0
        %1166 = vmatpush1.msra.mxu0 0.0
        %1167 = vmatprep.subr.mxu0 0.0
        %1168 = vmatpush1.msra.mxu0 0.0
        %1169 = vmatprep.subr.mxu0 0.0
        %1170 = vmatpush1.msra.mxu0 0.0
        %1171 = vmatprep.subr.mxu0 0.0
        %1172 = vmatpush1.msra.mxu0 0.0
        %1173 = vmatprep.subr.mxu0 0.0
        %1174 = vmatpush1.msra.mxu0 0.0
        %1175 = vmatprep.subr.mxu0 0.0
        %1176 = vmatpush1.msra.mxu0 0.0
        %1177 = vmatprep.subr.mxu0 0.0
        %1178 = vmatpush1.msra.mxu0 0.0
        %1179 = vmatprep.subr.mxu0 0.0
        %1180 = vmatpush1.msra.mxu0 0.0
        %1181 = vmatprep.subr.mxu0 0.0
        %1182 = vmatpush1.msra.mxu0 0.0
        %1183 = vmatprep.subr.mxu0 0.0
        %1184 = vmatpush1.msra.mxu0 0.0
        %1185 = vmatprep.subr.mxu0 0.0
        %1186 = vmatpush1.msra.mxu0 0.0
        %1187 = vmatprep.subr.mxu0 0.0
        %1188 = vmatpush1.msra.mxu0 0.0
        %1189 = vmatprep.mubr.f32.mxu0 0.0
        %1190 = vmatmul.mubr.f32.gmra.mrb[0].mxu0 %v1123
        %v1191 = vpop.f32.mrb[0].mxu0
        %v1192 = vadd.f32 0.0, %v1191
        %v1193 = vpop.f32.mrb[0].mxu0
        %1194 = vdwg.mxu0
        %v1195 = vadd.f32 %v1116, %v1192
        %s1196 = scalar_lea.vmem %s6, 32
        %v1197 = vld [vmem:[%s1196] sm:$0xff]
        %1198 = vrot.lane.b32.xlu0 %v882, 112
        %v1199 = vpop.permute.xlu0 %1198
        %v1202 = vsel %vm597, %v1197, 0
        %1204 = vmatprep.subr.mxu0 0.0
        %1205 = vmatpush1.msra.mxu0 %v1199
        %1206 = vmatprep.subr.mxu0 0.0
        %1207 = vmatpush1.msra.mxu0 0.0
        %1208 = vmatprep.subr.mxu0 0.0
        %1209 = vmatpush1.msra.mxu0 0.0
        %1210 = vmatprep.subr.mxu0 0.0
        %1211 = vmatpush1.msra.mxu0 0.0
        %1212 = vmatprep.subr.mxu0 0.0
        %1213 = vmatpush1.msra.mxu0 0.0
        %1214 = vmatprep.subr.mxu0 0.0
        %1215 = vmatpush1.msra.mxu0 0.0
        %1216 = vmatprep.subr.mxu0 0.0
        %1217 = vmatpush1.msra.mxu0 0.0
        %1218 = vmatprep.subr.mxu0 0.0
        %1219 = vmatpush1.msra.mxu0 0.0
        %1220 = vmatprep.subr.mxu0 0.0
        %1221 = vmatpush1.msra.mxu0 0.0
        %1222 = vmatprep.subr.mxu0 0.0
        %1223 = vmatpush1.msra.mxu0 0.0
        %1224 = vmatprep.subr.mxu0 0.0
        %1225 = vmatpush1.msra.mxu0 0.0
        %1226 = vmatprep.subr.mxu0 0.0
        %1227 = vmatpush1.msra.mxu0 0.0
        %1228 = vmatprep.subr.mxu0 0.0
        %1229 = vmatpush1.msra.mxu0 0.0
        %1230 = vmatprep.subr.mxu0 0.0
        %1231 = vmatpush1.msra.mxu0 0.0
        %1232 = vmatprep.subr.mxu0 0.0
        %1233 = vmatpush1.msra.mxu0 0.0
        %1234 = vmatprep.subr.mxu0 0.0
        %1235 = vmatpush1.msra.mxu0 0.0
        %1236 = vmatprep.subr.mxu0 0.0
        %1237 = vmatpush1.msra.mxu0 0.0
        %1238 = vmatprep.subr.mxu0 0.0
        %1239 = vmatpush1.msra.mxu0 0.0
        %1240 = vmatprep.subr.mxu0 0.0
        %1241 = vmatpush1.msra.mxu0 0.0
        %1242 = vmatprep.subr.mxu0 0.0
        %1243 = vmatpush1.msra.mxu0 0.0
        %1244 = vmatprep.subr.mxu0 0.0
        %1245 = vmatpush1.msra.mxu0 0.0
        %1246 = vmatprep.subr.mxu0 0.0
        %1247 = vmatpush1.msra.mxu0 0.0
        %1248 = vmatprep.subr.mxu0 0.0
        %1249 = vmatpush1.msra.mxu0 0.0
        %1250 = vmatprep.subr.mxu0 0.0
        %1251 = vmatpush1.msra.mxu0 0.0
        %1252 = vmatprep.subr.mxu0 0.0
        %1253 = vmatpush1.msra.mxu0 0.0
        %1254 = vmatprep.subr.mxu0 0.0
        %1255 = vmatpush1.msra.mxu0 0.0
        %1256 = vmatprep.subr.mxu0 0.0
        %1257 = vmatpush1.msra.mxu0 0.0
        %1258 = vmatprep.subr.mxu0 0.0
        %1259 = vmatpush1.msra.mxu0 0.0
        %1260 = vmatprep.subr.mxu0 0.0
        %1261 = vmatpush1.msra.mxu0 0.0
        %1262 = vmatprep.subr.mxu0 0.0
        %1263 = vmatpush1.msra.mxu0 0.0
        %1264 = vmatprep.subr.mxu0 0.0
        %1265 = vmatpush1.msra.mxu0 0.0
        %1266 = vmatprep.subr.mxu0 0.0
        %1267 = vmatpush1.msra.mxu0 0.0
        %1268 = vmatprep.mubr.f32.mxu0 0.0
        %1269 = vmatmul.mubr.f32.gmra.mrb[0].mxu0 %v1202
        %v1270 = vpop.f32.mrb[0].mxu0
        %v1271 = vadd.f32 0.0, %v1270
        %v1272 = vpop.f32.mrb[0].mxu0
        %1273 = vdwg.mxu0
        %v1274 = vadd.f32 %v1195, %v1271
        %s1275 = scalar_lea.vmem %s6, 40
        %v1276 = vld [vmem:[%s1275] sm:$0xff]
        %1277 = vrot.lane.b32.xlu0 %v882, 108
        %v1278 = vpop.permute.xlu0 %1277
        %v1281 = vsel %vm597, %v1276, 0
        %1283 = vmatprep.subr.mxu0 0.0
        %1284 = vmatpush1.msra.mxu0 %v1278
        %1285 = vmatprep.subr.mxu0 0.0
        %1286 = vmatpush1.msra.mxu0 0.0
        %1287 = vmatprep.subr.mxu0 0.0
        %1288 = vmatpush1.msra.mxu0 0.0
        %1289 = vmatprep.subr.mxu0 0.0
        %1290 = vmatpush1.msra.mxu0 0.0
        %1291 = vmatprep.subr.mxu0 0.0
        %1292 = vmatpush1.msra.mxu0 0.0
        %1293 = vmatprep.subr.mxu0 0.0
        %1294 = vmatpush1.msra.mxu0 0.0
        %1295 = vmatprep.subr.mxu0 0.0
        %1296 = vmatpush1.msra.mxu0 0.0
        %1297 = vmatprep.subr.mxu0 0.0
        %1298 = vmatpush1.msra.mxu0 0.0
        %1299 = vmatprep.subr.mxu0 0.0
        %1300 = vmatpush1.msra.mxu0 0.0
        %1301 = vmatprep.subr.mxu0 0.0
        %1302 = vmatpush1.msra.mxu0 0.0
        %1303 = vmatprep.subr.mxu0 0.0
        %1304 = vmatpush1.msra.mxu0 0.0
        %1305 = vmatprep.subr.mxu0 0.0
        %1306 = vmatpush1.msra.mxu0 0.0
        %1307 = vmatprep.subr.mxu0 0.0
        %1308 = vmatpush1.msra.mxu0 0.0
        %1309 = vmatprep.subr.mxu0 0.0
        %1310 = vmatpush1.msra.mxu0 0.0
        %1311 = vmatprep.subr.mxu0 0.0
        %1312 = vmatpush1.msra.mxu0 0.0
        %1313 = vmatprep.subr.mxu0 0.0
        %1314 = vmatpush1.msra.mxu0 0.0
        %1315 = vmatprep.subr.mxu0 0.0
        %1316 = vmatpush1.msra.mxu0 0.0
        %1317 = vmatprep.subr.mxu0 0.0
        %1318 = vmatpush1.msra.mxu0 0.0
        %1319 = vmatprep.subr.mxu0 0.0
        %1320 = vmatpush1.msra.mxu0 0.0
        %1321 = vmatprep.subr.mxu0 0.0
        %1322 = vmatpush1.msra.mxu0 0.0
        %1323 = vmatprep.subr.mxu0 0.0
        %1324 = vmatpush1.msra.mxu0 0.0
        %1325 = vmatprep.subr.mxu0 0.0
        %1326 = vmatpush1.msra.mxu0 0.0
        %1327 = vmatprep.subr.mxu0 0.0
        %1328 = vmatpush1.msra.mxu0 0.0
        %1329 = vmatprep.subr.mxu0 0.0
        %1330 = vmatpush1.msra.mxu0 0.0
        %1331 = vmatprep.subr.mxu0 0.0
        %1332 = vmatpush1.msra.mxu0 0.0
        %1333 = vmatprep.subr.mxu0 0.0
        %1334 = vmatpush1.msra.mxu0 0.0
        %1335 = vmatprep.subr.mxu0 0.0
        %1336 = vmatpush1.msra.mxu0 0.0
        %1337 = vmatprep.subr.mxu0 0.0
        %1338 = vmatpush1.msra.mxu0 0.0
        %1339 = vmatprep.subr.mxu0 0.0
        %1340 = vmatpush1.msra.mxu0 0.0
        %1341 = vmatprep.subr.mxu0 0.0
        %1342 = vmatpush1.msra.mxu0 0.0
        %1343 = vmatprep.subr.mxu0 0.0
        %1344 = vmatpush1.msra.mxu0 0.0
        %1345 = vmatprep.subr.mxu0 0.0
        %1346 = vmatpush1.msra.mxu0 0.0
        %1347 = vmatprep.mubr.f32.mxu0 0.0
        %1348 = vmatmul.mubr.f32.gmra.mrb[0].mxu0 %v1281
        %v1349 = vpop.f32.mrb[0].mxu0
        %v1350 = vadd.f32 0.0, %v1349
        %v1351 = vpop.f32.mrb[0].mxu0
        %1352 = vdwg.mxu0
        %v1353 = vadd.f32 %v1274, %v1350
        %s1354 = scalar_lea.vmem %s6, 48
        %v1355 = vld [vmem:[%s1354] sm:$0xff]
        %1356 = vrot.lane.b32.xlu0 %v882, 104
        %v1357 = vpop.permute.xlu0 %1356
        %v1360 = vsel %vm597, %v1355, 0
        %1362 = vmatprep.subr.mxu0 0.0
        %1363 = vmatpush1.msra.mxu0 %v1357
        %1364 = vmatprep.subr.mxu0 0.0
        %1365 = vmatpush1.msra.mxu0 0.0
        %1366 = vmatprep.subr.mxu0 0.0
        %1367 = vmatpush1.msra.mxu0 0.0
        %1368 = vmatprep.subr.mxu0 0.0
        %1369 = vmatpush1.msra.mxu0 0.0
        %1370 = vmatprep.subr.mxu0 0.0
        %1371 = vmatpush1.msra.mxu0 0.0
        %1372 = vmatprep.subr.mxu0 0.0
        %1373 = vmatpush1.msra.mxu0 0.0
        %1374 = vmatprep.subr.mxu0 0.0
        %1375 = vmatpush1.msra.mxu0 0.0
        %1376 = vmatprep.subr.mxu0 0.0
        %1377 = vmatpush1.msra.mxu0 0.0
        %1378 = vmatprep.subr.mxu0 0.0
        %1379 = vmatpush1.msra.mxu0 0.0
        %1380 = vmatprep.subr.mxu0 0.0
        %1381 = vmatpush1.msra.mxu0 0.0
        %1382 = vmatprep.subr.mxu0 0.0
        %1383 = vmatpush1.msra.mxu0 0.0
        %1384 = vmatprep.subr.mxu0 0.0
        %1385 = vmatpush1.msra.mxu0 0.0
        %1386 = vmatprep.subr.mxu0 0.0
        %1387 = vmatpush1.msra.mxu0 0.0
        %1388 = vmatprep.subr.mxu0 0.0
        %1389 = vmatpush1.msra.mxu0 0.0
        %1390 = vmatprep.subr.mxu0 0.0
        %1391 = vmatpush1.msra.mxu0 0.0
        %1392 = vmatprep.subr.mxu0 0.0
        %1393 = vmatpush1.msra.mxu0 0.0
        %1394 = vmatprep.subr.mxu0 0.0
        %1395 = vmatpush1.msra.mxu0 0.0
        %1396 = vmatprep.subr.mxu0 0.0
        %1397 = vmatpush1.msra.mxu0 0.0
        %1398 = vmatprep.subr.mxu0 0.0
        %1399 = vmatpush1.msra.mxu0 0.0
        %1400 = vmatprep.subr.mxu0 0.0
        %1401 = vmatpush1.msra.mxu0 0.0
        %1402 = vmatprep.subr.mxu0 0.0
        %1403 = vmatpush1.msra.mxu0 0.0
        %1404 = vmatprep.subr.mxu0 0.0
        %1405 = vmatpush1.msra.mxu0 0.0
        %1406 = vmatprep.subr.mxu0 0.0
        %1407 = vmatpush1.msra.mxu0 0.0
        %1408 = vmatprep.subr.mxu0 0.0
        %1409 = vmatpush1.msra.mxu0 0.0
        %1410 = vmatprep.subr.mxu0 0.0
        %1411 = vmatpush1.msra.mxu0 0.0
        %1412 = vmatprep.subr.mxu0 0.0
        %1413 = vmatpush1.msra.mxu0 0.0
        %1414 = vmatprep.subr.mxu0 0.0
        %1415 = vmatpush1.msra.mxu0 0.0
        %1416 = vmatprep.subr.mxu0 0.0
        %1417 = vmatpush1.msra.mxu0 0.0
        %1418 = vmatprep.subr.mxu0 0.0
        %1419 = vmatpush1.msra.mxu0 0.0
        %1420 = vmatprep.subr.mxu0 0.0
        %1421 = vmatpush1.msra.mxu0 0.0
        %1422 = vmatprep.subr.mxu0 0.0
        %1423 = vmatpush1.msra.mxu0 0.0
        %1424 = vmatprep.subr.mxu0 0.0
        %1425 = vmatpush1.msra.mxu0 0.0
        %1426 = vmatprep.mubr.f32.mxu0 0.0
        %1427 = vmatmul.mubr.f32.gmra.mrb[0].mxu0 %v1360
        %v1428 = vpop.f32.mrb[0].mxu0
        %v1429 = vadd.f32 0.0, %v1428
        %v1430 = vpop.f32.mrb[0].mxu0
        %1431 = vdwg.mxu0
        %v1432 = vadd.f32 %v1353, %v1429
        %s1433 = scalar_lea.vmem %s6, 56
        %v1434 = vld [vmem:[%s1433] sm:$0xff]
        %1435 = vrot.lane.b32.xlu0 %v882, 100
        %v1436 = vpop.permute.xlu0 %1435
        %v1439 = vsel %vm597, %v1434, 0
        %1441 = vmatprep.subr.mxu0 0.0
        %1442 = vmatpush1.msra.mxu0 %v1436
        %1443 = vmatprep.subr.mxu0 0.0
        %1444 = vmatpush1.msra.mxu0 0.0
        %1445 = vmatprep.subr.mxu0 0.0
        %1446 = vmatpush1.msra.mxu0 0.0
        %1447 = vmatprep.subr.mxu0 0.0
        %1448 = vmatpush1.msra.mxu0 0.0
        %1449 = vmatprep.subr.mxu0 0.0
        %1450 = vmatpush1.msra.mxu0 0.0
        %1451 = vmatprep.subr.mxu0 0.0
        %1452 = vmatpush1.msra.mxu0 0.0
        %1453 = vmatprep.subr.mxu0 0.0
        %1454 = vmatpush1.msra.mxu0 0.0
        %1455 = vmatprep.subr.mxu0 0.0
        %1456 = vmatpush1.msra.mxu0 0.0
        %1457 = vmatprep.subr.mxu0 0.0
        %1458 = vmatpush1.msra.mxu0 0.0
        %1459 = vmatprep.subr.mxu0 0.0
        %1460 = vmatpush1.msra.mxu0 0.0
        %1461 = vmatprep.subr.mxu0 0.0
        %1462 = vmatpush1.msra.mxu0 0.0
        %1463 = vmatprep.subr.mxu0 0.0
        %1464 = vmatpush1.msra.mxu0 0.0
        %1465 = vmatprep.subr.mxu0 0.0
        %1466 = vmatpush1.msra.mxu0 0.0
        %1467 = vmatprep.subr.mxu0 0.0
        %1468 = vmatpush1.msra.mxu0 0.0
        %1469 = vmatprep.subr.mxu0 0.0
        %1470 = vmatpush1.msra.mxu0 0.0
        %1471 = vmatprep.subr.mxu0 0.0
        %1472 = vmatpush1.msra.mxu0 0.0
        %1473 = vmatprep.subr.mxu0 0.0
        %1474 = vmatpush1.msra.mxu0 0.0
        %1475 = vmatprep.subr.mxu0 0.0
        %1476 = vmatpush1.msra.mxu0 0.0
        %1477 = vmatprep.subr.mxu0 0.0
        %1478 = vmatpush1.msra.mxu0 0.0
        %1479 = vmatprep.subr.mxu0 0.0
        %1480 = vmatpush1.msra.mxu0 0.0
        %1481 = vmatprep.subr.mxu0 0.0
        %1482 = vmatpush1.msra.mxu0 0.0
        %1483 = vmatprep.subr.mxu0 0.0
        %1484 = vmatpush1.msra.mxu0 0.0
        %1485 = vmatprep.subr.mxu0 0.0
        %1486 = vmatpush1.msra.mxu0 0.0
        %1487 = vmatprep.subr.mxu0 0.0
        %1488 = vmatpush1.msra.mxu0 0.0
        %1489 = vmatprep.subr.mxu0 0.0
        %1490 = vmatpush1.msra.mxu0 0.0
        %1491 = vmatprep.subr.mxu0 0.0
        %1492 = vmatpush1.msra.mxu0 0.0
        %1493 = vmatprep.subr.mxu0 0.0
        %1494 = vmatpush1.msra.mxu0 0.0
        %1495 = vmatprep.subr.mxu0 0.0
        %1496 = vmatpush1.msra.mxu0 0.0
        %1497 = vmatprep.subr.mxu0 0.0
        %1498 = vmatpush1.msra.mxu0 0.0
        %1499 = vmatprep.subr.mxu0 0.0
        %1500 = vmatpush1.msra.mxu0 0.0
        %1501 = vmatprep.subr.mxu0 0.0
        %1502 = vmatpush1.msra.mxu0 0.0
        %1503 = vmatprep.subr.mxu0 0.0
        %1504 = vmatpush1.msra.mxu0 0.0
        %1505 = vmatprep.mubr.f32.mxu0 0.0
        %1506 = vmatmul.mubr.f32.gmra.mrb[0].mxu0 %v1439
        %v1507 = vpop.f32.mrb[0].mxu0
        %v1508 = vadd.f32 0.0, %v1507
        %v1509 = vpop.f32.mrb[0].mxu0
        %1510 = vdwg.mxu0
        %v1511 = vadd.f32 %v1432, %v1508
        %s1512 = scalar_lea.vmem %s6, 64
        %v1513 = vld [vmem:[%s1512] sm:$0xff]
        %1514 = vrot.lane.b32.xlu0 %v882, 96
        %v1515 = vpop.permute.xlu0 %1514
        %v1518 = vsel %vm597, %v1513, 0
        %1520 = vmatprep.subr.mxu0 0.0
        %1521 = vmatpush1.msra.mxu0 %v1515
        %1522 = vmatprep.subr.mxu0 0.0
        %1523 = vmatpush1.msra.mxu0 0.0
        %1524 = vmatprep.subr.mxu0 0.0
        %1525 = vmatpush1.msra.mxu0 0.0
        %1526 = vmatprep.subr.mxu0 0.0
        %1527 = vmatpush1.msra.mxu0 0.0
        %1528 = vmatprep.subr.mxu0 0.0
        %1529 = vmatpush1.msra.mxu0 0.0
        %1530 = vmatprep.subr.mxu0 0.0
        %1531 = vmatpush1.msra.mxu0 0.0
        %1532 = vmatprep.subr.mxu0 0.0
        %1533 = vmatpush1.msra.mxu0 0.0
        %1534 = vmatprep.subr.mxu0 0.0
        %1535 = vmatpush1.msra.mxu0 0.0
        %1536 = vmatprep.subr.mxu0 0.0
        %1537 = vmatpush1.msra.mxu0 0.0
        %1538 = vmatprep.subr.mxu0 0.0
        %1539 = vmatpush1.msra.mxu0 0.0
        %1540 = vmatprep.subr.mxu0 0.0
        %1541 = vmatpush1.msra.mxu0 0.0
        %1542 = vmatprep.subr.mxu0 0.0
        %1543 = vmatpush1.msra.mxu0 0.0
        %1544 = vmatprep.subr.mxu0 0.0
        %1545 = vmatpush1.msra.mxu0 0.0
        %1546 = vmatprep.subr.mxu0 0.0
        %1547 = vmatpush1.msra.mxu0 0.0
        %1548 = vmatprep.subr.mxu0 0.0
        %1549 = vmatpush1.msra.mxu0 0.0
        %1550 = vmatprep.subr.mxu0 0.0
        %1551 = vmatpush1.msra.mxu0 0.0
        %1552 = vmatprep.subr.mxu0 0.0
        %1553 = vmatpush1.msra.mxu0 0.0
        %1554 = vmatprep.subr.mxu0 0.0
        %1555 = vmatpush1.msra.mxu0 0.0
        %1556 = vmatprep.subr.mxu0 0.0
        %1557 = vmatpush1.msra.mxu0 0.0
        %1558 = vmatprep.subr.mxu0 0.0
        %1559 = vmatpush1.msra.mxu0 0.0
        %1560 = vmatprep.subr.mxu0 0.0
        %1561 = vmatpush1.msra.mxu0 0.0
        %1562 = vmatprep.subr.mxu0 0.0
        %1563 = vmatpush1.msra.mxu0 0.0
        %1564 = vmatprep.subr.mxu0 0.0
        %1565 = vmatpush1.msra.mxu0 0.0
        %1566 = vmatprep.subr.mxu0 0.0
        %1567 = vmatpush1.msra.mxu0 0.0
        %1568 = vmatprep.subr.mxu0 0.0
        %1569 = vmatpush1.msra.mxu0 0.0
        %1570 = vmatprep.subr.mxu0 0.0
        %1571 = vmatpush1.msra.mxu0 0.0
        %1572 = vmatprep.subr.mxu0 0.0
        %1573 = vmatpush1.msra.mxu0 0.0
        %1574 = vmatprep.subr.mxu0 0.0
        %1575 = vmatpush1.msra.mxu0 0.0
        %1576 = vmatprep.subr.mxu0 0.0
        %1577 = vmatpush1.msra.mxu0 0.0
        %1578 = vmatprep.subr.mxu0 0.0
        %1579 = vmatpush1.msra.mxu0 0.0
        %1580 = vmatprep.subr.mxu0 0.0
        %1581 = vmatpush1.msra.mxu0 0.0
        %1582 = vmatprep.subr.mxu0 0.0
        %1583 = vmatpush1.msra.mxu0 0.0
        %1584 = vmatprep.mubr.f32.mxu0 0.0
        %1585 = vmatmul.mubr.f32.gmra.mrb[0].mxu0 %v1518
        %v1586 = vpop.f32.mrb[0].mxu0
        %v1587 = vadd.f32 0.0, %v1586
        %v1588 = vpop.f32.mrb[0].mxu0
        %1589 = vdwg.mxu0
        %v1590 = vadd.f32 %v1511, %v1587
        %1592 = vset.pattern.permute.xlu0 0
        %1593 = vperm.xlu0 %1592, %v810
        %v1594 = vpop.permute.xlu0 %1593
        %v1596 = vadd.f32 %v1590, %v1594
        %v1597 = vmax.f32 %v1596, 0.0
        %v1598 = vld [vmem:[%s8] sm:$0xff]
        %v1599 = vld [vmem:[%s8 + $0x8] sm:$0xff]
        %v1600 = vld [vmem:[%s8 + $0x10] sm:$0xff]
        %v1601 = vld [vmem:[%s8 + $0x18] sm:$0xff]
        %v1602 = vld [vmem:[#allocation10] sm:$0xf]
        %vm1603 = vcmask 31744
        %v1605 = vsel %vm1603, %v1597, 0
        %v1608 = vsel %vm800, %v1602, 0
        %1610 = vmatprep.subr.mxu0 0.0
        %1611 = vmatpush1.msra.mxu0 %v1608
        %1612 = vmatprep.subr.mxu0 0.0
        %1613 = vmatpush1.msra.mxu0 0.0
        %1614 = vmatprep.subr.mxu0 0.0
        %1615 = vmatpush1.msra.mxu0 0.0
        %1616 = vmatprep.subr.mxu0 0.0
        %1617 = vmatpush1.msra.mxu0 0.0
        %1618 = vmatprep.subr.mxu0 0.0
        %1619 = vmatpush1.msra.mxu0 0.0
        %1620 = vmatprep.subr.mxu0 0.0
        %1621 = vmatpush1.msra.mxu0 0.0
        %1622 = vmatprep.subr.mxu0 0.0
        %1623 = vmatpush1.msra.mxu0 0.0
        %1624 = vmatprep.subr.mxu0 0.0
        %1625 = vmatpush1.msra.mxu0 0.0
        %1626 = vmatprep.subr.mxu0 0.0
        %1627 = vmatpush1.msra.mxu0 0.0
        %1628 = vmatprep.subr.mxu0 0.0
        %1629 = vmatpush1.msra.mxu0 0.0
        %1630 = vmatprep.subr.mxu0 0.0
        %1631 = vmatpush1.msra.mxu0 0.0
        %1632 = vmatprep.subr.mxu0 0.0
        %1633 = vmatpush1.msra.mxu0 0.0
        %1634 = vmatprep.subr.mxu0 0.0
        %1635 = vmatpush1.msra.mxu0 0.0
        %1636 = vmatprep.subr.mxu0 0.0
        %1637 = vmatpush1.msra.mxu0 0.0
        %1638 = vmatprep.subr.mxu0 0.0
        %1639 = vmatpush1.msra.mxu0 0.0
        %1640 = vmatprep.subr.mxu0 0.0
        %1641 = vmatpush1.msra.mxu0 0.0
        %1642 = vmatprep.subr.mxu0 0.0
        %1643 = vmatpush1.msra.mxu0 0.0
        %1644 = vmatprep.subr.mxu0 0.0
        %1645 = vmatpush1.msra.mxu0 0.0
        %1646 = vmatprep.subr.mxu0 0.0
        %1647 = vmatpush1.msra.mxu0 0.0
        %1648 = vmatprep.subr.mxu0 0.0
        %1649 = vmatpush1.msra.mxu0 0.0
        %1650 = vmatprep.subr.mxu0 0.0
        %1651 = vmatpush1.msra.mxu0 0.0
        %1652 = vmatprep.subr.mxu0 0.0
        %1653 = vmatpush1.msra.mxu0 0.0
        %1654 = vmatprep.subr.mxu0 0.0
        %1655 = vmatpush1.msra.mxu0 0.0
        %1656 = vmatprep.subr.mxu0 0.0
        %1657 = vmatpush1.msra.mxu0 0.0
        %1658 = vmatprep.subr.mxu0 0.0
        %1659 = vmatpush1.msra.mxu0 0.0
        %1660 = vmatprep.subr.mxu0 0.0
        %1661 = vmatpush1.msra.mxu0 0.0
        %1662 = vmatprep.subr.mxu0 0.0
        %1663 = vmatpush1.msra.mxu0 0.0
        %1664 = vmatprep.subr.mxu0 0.0
        %1665 = vmatpush1.msra.mxu0 0.0
        %1666 = vmatprep.subr.mxu0 0.0
        %1667 = vmatpush1.msra.mxu0 0.0
        %1668 = vmatprep.subr.mxu0 0.0
        %1669 = vmatpush1.msra.mxu0 0.0
        %1670 = vmatprep.subr.mxu0 0.0
        %1671 = vmatpush1.msra.mxu0 0.0
        %1672 = vmatprep.subr.mxu0 0.0
        %1673 = vmatpush1.msra.mxu0 0.0
        %1674 = vmatprep.mubr.f32.mxu0 0.0
        %1675 = vmatmul.mubr.f32.gmra.mrb[0].mxu0 %v1605
        %v1676 = vpop.f32.mrb[0].mxu0
        %v1677 = vadd.f32 0.0, %v1676
        %v1678 = vpop.f32.mrb[0].mxu0
        %1679 = vdwg.mxu0
        %v1681 = vsel %vm597, %v1598, 0
        %v1684 = vsel %vm597, %v1599, 0
        %v1687 = vsel %vm597, %v1600, 0
        %v1690 = vsel %vm597, %v1601, 0
        %1692 = vmatprep.subr.mxu0 0.0
        %1693 = vmatpush1.msra.mxu0 %v1677
        %1694 = vmatprep.subr.mxu0 0.0
        %1695 = vmatpush1.msra.mxu0 0.0
        %1696 = vmatprep.subr.mxu0 0.0
        %1697 = vmatpush1.msra.mxu0 0.0
        %1698 = vmatprep.subr.mxu0 0.0
        %1699 = vmatpush1.msra.mxu0 0.0
        %1700 = vmatprep.subr.mxu0 0.0
        %1701 = vmatpush1.msra.mxu0 0.0
        %1702 = vmatprep.subr.mxu0 0.0
        %1703 = vmatpush1.msra.mxu0 0.0
        %1704 = vmatprep.subr.mxu0 0.0
        %1705 = vmatpush1.msra.mxu0 0.0
        %1706 = vmatprep.subr.mxu0 0.0
        %1707 = vmatpush1.msra.mxu0 0.0
        %1708 = vmatprep.subr.mxu0 0.0
        %1709 = vmatpush1.msra.mxu0 0.0
        %1710 = vmatprep.subr.mxu0 0.0
        %1711 = vmatpush1.msra.mxu0 0.0
        %1712 = vmatprep.subr.mxu0 0.0
        %1713 = vmatpush1.msra.mxu0 0.0
        %1714 = vmatprep.subr.mxu0 0.0
        %1715 = vmatpush1.msra.mxu0 0.0
        %1716 = vmatprep.subr.mxu0 0.0
        %1717 = vmatpush1.msra.mxu0 0.0
        %1718 = vmatprep.subr.mxu0 0.0
        %1719 = vmatpush1.msra.mxu0 0.0
        %1720 = vmatprep.subr.mxu0 0.0
        %1721 = vmatpush1.msra.mxu0 0.0
        %1722 = vmatprep.subr.mxu0 0.0
        %1723 = vmatpush1.msra.mxu0 0.0
        %1724 = vmatprep.subr.mxu0 0.0
        %1725 = vmatpush1.msra.mxu0 0.0
        %1726 = vmatprep.subr.mxu0 0.0
        %1727 = vmatpush1.msra.mxu0 0.0
        %1728 = vmatprep.subr.mxu0 0.0
        %1729 = vmatpush1.msra.mxu0 0.0
        %1730 = vmatprep.subr.mxu0 0.0
        %1731 = vmatpush1.msra.mxu0 0.0
        %1732 = vmatprep.subr.mxu0 0.0
        %1733 = vmatpush1.msra.mxu0 0.0
        %1734 = vmatprep.subr.mxu0 0.0
        %1735 = vmatpush1.msra.mxu0 0.0
        %1736 = vmatprep.subr.mxu0 0.0
        %1737 = vmatpush1.msra.mxu0 0.0
        %1738 = vmatprep.subr.mxu0 0.0
        %1739 = vmatpush1.msra.mxu0 0.0
        %1740 = vmatprep.subr.mxu0 0.0
        %1741 = vmatpush1.msra.mxu0 0.0
        %1742 = vmatprep.subr.mxu0 0.0
        %1743 = vmatpush1.msra.mxu0 0.0
        %1744 = vmatprep.subr.mxu0 0.0
        %1745 = vmatpush1.msra.mxu0 0.0
        %1746 = vmatprep.subr.mxu0 0.0
        %1747 = vmatpush1.msra.mxu0 0.0
        %1748 = vmatprep.subr.mxu0 0.0
        %1749 = vmatpush1.msra.mxu0 0.0
        %1750 = vmatprep.subr.mxu0 0.0
        %1751 = vmatpush1.msra.mxu0 0.0
        %1752 = vmatprep.subr.mxu0 0.0
        %1753 = vmatpush1.msra.mxu0 0.0
        %1754 = vmatprep.subr.mxu0 0.0
        %1755 = vmatpush1.msra.mxu0 0.0
        %1756 = vmatprep.mubr.f32.mxu0 0.0
        %1757 = vmatmul.mubr.f32.gmra.mrb[0].mxu0 %v1681
        %v1758 = vpop.f32.mrb[0].mxu0
        %v1759 = vadd.f32 0.0, %v1758
        %v1760 = vpop.f32.mrb[0].mxu0
        %1761 = vmatprep.mubr.f32.mxu0 0.0
        %1762 = vmatmul.mubr.f32.gmra.mrb[0].mxu0 %v1684
        %v1763 = vpop.f32.mrb[0].mxu0
        %v1764 = vadd.f32 0.0, %v1763
        %v1765 = vpop.f32.mrb[0].mxu0
        %1766 = vmatprep.mubr.f32.mxu0 0.0
        %1767 = vmatmul.mubr.f32.gmra.mrb[0].mxu0 %v1687
        %v1768 = vpop.f32.mrb[0].mxu0
        %v1769 = vadd.f32 0.0, %v1768
        %v1770 = vpop.f32.mrb[0].mxu0
        %1771 = vmatprep.mubr.f32.mxu0 0.0
        %1772 = vmatmul.mubr.f32.gmra.mrb[0].mxu0 %v1690
        %v1773 = vpop.f32.mrb[0].mxu0
        %v1774 = vadd.f32 0.0, %v1773
        %v1775 = vpop.f32.mrb[0].mxu0
        %1776 = vdwg.mxu0
        %v1777 = vld [vmem:[%s10] sm:$0xff]
        %v1778 = vld [vmem:[%s10 + $0x8] sm:$0xff]
        %v1779 = vld [vmem:[%s10 + $0x10] sm:$0xff]
        %v1780 = vld [vmem:[%s10 + $0x18] sm:$0xff]
        %v1781 = vld [vmem:[%s10 + $0x20] sm:$0xff]
        %v1782 = vld [vmem:[%s10 + $0x28] sm:$0xff]
        %v1783 = vld [vmem:[%s10 + $0x30] sm:$0xff]
        %v1784 = vld [vmem:[%s10 + $0x38] sm:$0xff]
        %v1785 = vld [vmem:[%s10 + $0x40] sm:$0xff]
        %v1786 = vld [vmem:[%s10 + $0x48] sm:$0xff]
        %v1787 = vld [vmem:[%s10 + $0x50] sm:$0xff]
        %v1788 = vld [vmem:[%s10 + $0x58] sm:$0xff]
        %v1789 = vld [vmem:[%s10 + $0x60] sm:$0xff]
        %v1790 = vld [vmem:[%s10 + $0x68] sm:$0xff]
        %v1791 = vld [vmem:[%s10 + $0x70] sm:$0xff]
        %v1792 = vld [vmem:[%s10 + $0x78] sm:$0xff]
        %v1793 = vld [vmem:[%s10 + $0x80] sm:$0xff]
        %v1794 = vld [vmem:[%s10 + $0x88] sm:$0xff]
        %v1795 = vld [vmem:[%s10 + $0x90] sm:$0xff]
        %v1796 = vld [vmem:[%s10 + $0x98] sm:$0xff]
        %v1797 = vld [vmem:[%s10 + $0xa0] sm:$0xff]
        %v1798 = vld [vmem:[%s10 + $0xa8] sm:$0xff]
        %v1799 = vld [vmem:[%s10 + $0xb0] sm:$0xff]
        %v1800 = vld [vmem:[%s10 + $0xb8] sm:$0xff]
        %v1801 = vld [vmem:[%s12] sm:$0x3f]
        %vm1802 = vcmask 523264
        %v1804 = vsel %vm1802, %v1759, 0
        %v1807 = vsel %vm1802, %v1764, 0
        %v1810 = vsel %vm1802, %v1769, 0
        %v1813 = vsel %vm1802, %v1774, 0
        %1815 = vmatprep.subr.mxu0 %v1778
        %1816 = vmatpush1.msra.mxu0 %v1777
        %1817 = vmatprep.subr.mxu0 %v1781
        %1818 = vmatpush1.msra.mxu0 %v1780
        %1819 = vmatprep.subr.mxu0 %v1784
        %1820 = vmatpush1.msra.mxu0 %v1783
        %1821 = vmatprep.subr.mxu0 %v1787
        %1822 = vmatpush1.msra.mxu0 %v1786
        %1823 = vmatprep.subr.mxu0 %v1790
        %1824 = vmatpush1.msra.mxu0 %v1789
        %1825 = vmatprep.subr.mxu0 %v1793
        %1826 = vmatpush1.msra.mxu0 %v1792
        %1827 = vmatprep.subr.mxu0 %v1796
        %1828 = vmatpush1.msra.mxu0 %v1795
        %1829 = vmatprep.subr.mxu0 %v1799
        %1830 = vmatpush1.msra.mxu0 %v1798
        %1831 = vmatprep.subr.mxu0 0.0
        %1832 = vmatpush1.msra.mxu0 0.0
        %1833 = vmatprep.subr.mxu0 0.0
        %1834 = vmatpush1.msra.mxu0 0.0
        %1835 = vmatprep.subr.mxu0 0.0
        %1836 = vmatpush1.msra.mxu0 0.0
        %1837 = vmatprep.subr.mxu0 0.0
        %1838 = vmatpush1.msra.mxu0 0.0
        %1839 = vmatprep.subr.mxu0 0.0
        %1840 = vmatpush1.msra.mxu0 0.0
        %1841 = vmatprep.subr.mxu0 0.0
        %1842 = vmatpush1.msra.mxu0 0.0
        %1843 = vmatprep.subr.mxu0 0.0
        %1844 = vmatpush1.msra.mxu0 0.0
        %1845 = vmatprep.subr.mxu0 0.0
        %1846 = vmatpush1.msra.mxu0 0.0
        %1847 = vmatprep.subr.mxu0 0.0
        %1848 = vmatpush1.msra.mxu0 0.0
        %1849 = vmatprep.subr.mxu0 0.0
        %1850 = vmatpush1.msra.mxu0 0.0
        %1851 = vmatprep.subr.mxu0 0.0
        %1852 = vmatpush1.msra.mxu0 0.0
        %1853 = vmatprep.subr.mxu0 0.0
        %1854 = vmatpush1.msra.mxu0 0.0
        %1855 = vmatprep.subr.mxu0 0.0
        %1856 = vmatpush1.msra.mxu0 0.0
        %1857 = vmatprep.subr.mxu0 0.0
        %1858 = vmatpush1.msra.mxu0 0.0
        %1859 = vmatprep.subr.mxu0 0.0
        %1860 = vmatpush1.msra.mxu0 0.0
        %1861 = vmatprep.subr.mxu0 0.0
        %1862 = vmatpush1.msra.mxu0 0.0
        %1863 = vmatprep.subr.mxu0 0.0
        %1864 = vmatpush1.msra.mxu0 0.0
        %1865 = vmatprep.subr.mxu0 0.0
        %1866 = vmatpush1.msra.mxu0 0.0
        %1867 = vmatprep.subr.mxu0 0.0
        %1868 = vmatpush1.msra.mxu0 0.0
        %1869 = vmatprep.subr.mxu0 0.0
        %1870 = vmatpush1.msra.mxu0 0.0
        %1871 = vmatprep.subr.mxu0 0.0
        %1872 = vmatpush1.msra.mxu0 0.0
        %1873 = vmatprep.subr.mxu0 0.0
        %1874 = vmatpush1.msra.mxu0 0.0
        %1875 = vmatprep.subr.mxu0 0.0
        %1876 = vmatpush1.msra.mxu0 0.0
        %1877 = vmatprep.subr.mxu0 0.0
        %1878 = vmatpush1.msra.mxu0 0.0
        %1879 = vmatprep.mubr.f32.mxu0 0.0
        %1880 = vmatmul.mubr.f32.gmra.mrb[0].mxu0 %v1804
        %v1881 = vpop.f32.mrb[0].mxu0
        %v1882 = vadd.f32 0.0, %v1881
        %v1883 = vpop.f32.mrb[0].mxu0
        %v1884 = vadd.f32 0.0, %v1883
        %1885 = vmatprep.mubr.f32.mxu0 0.0
        %1886 = vmatmul.mubr.f32.gmra.mrb[0].mxu0 %v1807
        %v1887 = vpop.f32.mrb[0].mxu0
        %v1888 = vadd.f32 0.0, %v1887
        %v1889 = vpop.f32.mrb[0].mxu0
        %v1890 = vadd.f32 0.0, %v1889
        %1891 = vmatprep.mubr.f32.mxu0 0.0
        %1892 = vmatmul.mubr.f32.gmra.mrb[0].mxu0 %v1810
        %v1893 = vpop.f32.mrb[0].mxu0
        %v1894 = vadd.f32 0.0, %v1893
        %v1895 = vpop.f32.mrb[0].mxu0
        %v1896 = vadd.f32 0.0, %v1895
        %1897 = vmatprep.mubr.f32.mxu0 0.0
        %1898 = vmatmul.mubr.f32.gmra.mrb[0].mxu0 %v1813
        %v1899 = vpop.f32.mrb[0].mxu0
        %v1900 = vadd.f32 0.0, %v1899
        %v1901 = vpop.f32.mrb[0].mxu0
        %v1902 = vadd.f32 0.0, %v1901
        %1903 = vdwg.mxu0
        %1904 = vmatprep.subr.mxu0 0.0
        %1905 = vmatpush1.msra.mxu0 %v1779
        %1906 = vmatprep.subr.mxu0 0.0
        %1907 = vmatpush1.msra.mxu0 %v1782
        %1908 = vmatprep.subr.mxu0 0.0
        %1909 = vmatpush1.msra.mxu0 %v1785
        %1910 = vmatprep.subr.mxu0 0.0
        %1911 = vmatpush1.msra.mxu0 %v1788
        %1912 = vmatprep.subr.mxu0 0.0
        %1913 = vmatpush1.msra.mxu0 %v1791
        %1914 = vmatprep.subr.mxu0 0.0
        %1915 = vmatpush1.msra.mxu0 %v1794
        %1916 = vmatprep.subr.mxu0 0.0
        %1917 = vmatpush1.msra.mxu0 %v1797
        %1918 = vmatprep.subr.mxu0 0.0
        %1919 = vmatpush1.msra.mxu0 %v1800
        %1920 = vmatprep.subr.mxu0 0.0
        %1921 = vmatpush1.msra.mxu0 0.0
        %1922 = vmatprep.subr.mxu0 0.0
        %1923 = vmatpush1.msra.mxu0 0.0
        %1924 = vmatprep.subr.mxu0 0.0
        %1925 = vmatpush1.msra.mxu0 0.0
        %1926 = vmatprep.subr.mxu0 0.0
        %1927 = vmatpush1.msra.mxu0 0.0
        %1928 = vmatprep.subr.mxu0 0.0
        %1929 = vmatpush1.msra.mxu0 0.0
        %1930 = vmatprep.subr.mxu0 0.0
        %1931 = vmatpush1.msra.mxu0 0.0
        %1932 = vmatprep.subr.mxu0 0.0
        %1933 = vmatpush1.msra.mxu0 0.0
        %1934 = vmatprep.subr.mxu0 0.0
        %1935 = vmatpush1.msra.mxu0 0.0
        %1936 = vmatprep.subr.mxu0 0.0
        %1937 = vmatpush1.msra.mxu0 0.0
        %1938 = vmatprep.subr.mxu0 0.0
        %1939 = vmatpush1.msra.mxu0 0.0
        %1940 = vmatprep.subr.mxu0 0.0
        %1941 = vmatpush1.msra.mxu0 0.0
        %1942 = vmatprep.subr.mxu0 0.0
        %1943 = vmatpush1.msra.mxu0 0.0
        %1944 = vmatprep.subr.mxu0 0.0
        %1945 = vmatpush1.msra.mxu0 0.0
        %1946 = vmatprep.subr.mxu0 0.0
        %1947 = vmatpush1.msra.mxu0 0.0
        %1948 = vmatprep.subr.mxu0 0.0
        %1949 = vmatpush1.msra.mxu0 0.0
        %1950 = vmatprep.subr.mxu0 0.0
        %1951 = vmatpush1.msra.mxu0 0.0
        %1952 = vmatprep.subr.mxu0 0.0
        %1953 = vmatpush1.msra.mxu0 0.0
        %1954 = vmatprep.subr.mxu0 0.0
        %1955 = vmatpush1.msra.mxu0 0.0
        %1956 = vmatprep.subr.mxu0 0.0
        %1957 = vmatpush1.msra.mxu0 0.0
        %1958 = vmatprep.subr.mxu0 0.0
        %1959 = vmatpush1.msra.mxu0 0.0
        %1960 = vmatprep.subr.mxu0 0.0
        %1961 = vmatpush1.msra.mxu0 0.0
        %1962 = vmatprep.subr.mxu0 0.0
        %1963 = vmatpush1.msra.mxu0 0.0
        %1964 = vmatprep.subr.mxu0 0.0
        %1965 = vmatpush1.msra.mxu0 0.0
        %1966 = vmatprep.subr.mxu0 0.0
        %1967 = vmatpush1.msra.mxu0 0.0
        %1968 = vmatprep.mubr.f32.mxu0 0.0
        %1969 = vmatmul.mubr.f32.gmra.mrb[0].mxu0 %v1804
        %v1970 = vpop.f32.mrb[0].mxu0
        %v1971 = vadd.f32 0.0, %v1970
        %v1972 = vpop.f32.mrb[0].mxu0
        %1973 = vmatprep.mubr.f32.mxu0 0.0
        %1974 = vmatmul.mubr.f32.gmra.mrb[0].mxu0 %v1807
        %v1975 = vpop.f32.mrb[0].mxu0
        %v1976 = vadd.f32 0.0, %v1975
        %v1977 = vpop.f32.mrb[0].mxu0
        %1978 = vmatprep.mubr.f32.mxu0 0.0
        %1979 = vmatmul.mubr.f32.gmra.mrb[0].mxu0 %v1810
        %v1980 = vpop.f32.mrb[0].mxu0
        %v1981 = vadd.f32 0.0, %v1980
        %v1982 = vpop.f32.mrb[0].mxu0
        %1983 = vmatprep.mubr.f32.mxu0 0.0
        %1984 = vmatmul.mubr.f32.gmra.mrb[0].mxu0 %v1813
        %v1985 = vpop.f32.mrb[0].mxu0
        %v1986 = vadd.f32 0.0, %v1985
        %v1987 = vpop.f32.mrb[0].mxu0
        %1988 = vdwg.mxu0
        %v1989 = vld [vmem:[#allocation12] sm:$0x3f]
        %s1990 = scalar_lea.vmem [#allocation12], 8
        %v1991 = vld [vmem:[%s1990] sm:$0x3f]
        %1996 = vrot.lane.b32.xlu0 %v1882, 92
        %v1997 = vpop.permute.xlu0 %1996
        %1998 = vrot.lane.b32.xlu0 %v1888, 92
        %v1999 = vpop.permute.xlu0 %1998
        %2000 = vrot.lane.b32.xlu0 %v1894, 92
        %v2001 = vpop.permute.xlu0 %2000
        %2002 = vrot.lane.b32.xlu0 %v1900, 92
        %v2003 = vpop.permute.xlu0 %2002
        %vm2008 = vcmask 261120
        %v2010 = vsel %vm2008, %v1991, 0
        %2012 = vmatprep.subr.mxu0 0.0
        %2013 = vmatpush1.msra.mxu0 %v1997
        %2014 = vmatprep.subr.mxu0 0.0
        %2015 = vmatpush1.msra.mxu0 %v1999
        %2016 = vmatprep.subr.mxu0 0.0
        %2017 = vmatpush1.msra.mxu0 %v2001
        %2018 = vmatprep.subr.mxu0 0.0
        %2019 = vmatpush1.msra.mxu0 %v2003
        %2020 = vmatprep.subr.mxu0 0.0
        %2021 = vmatpush1.msra.mxu0 0.0
        %2022 = vmatprep.subr.mxu0 0.0
        %2023 = vmatpush1.msra.mxu0 0.0
        %2024 = vmatprep.subr.mxu0 0.0
        %2025 = vmatpush1.msra.mxu0 0.0
        %2026 = vmatprep.subr.mxu0 0.0
        %2027 = vmatpush1.msra.mxu0 0.0
        %2028 = vmatprep.subr.mxu0 0.0
        %2029 = vmatpush1.msra.mxu0 0.0
        %2030 = vmatprep.subr.mxu0 0.0
        %2031 = vmatpush1.msra.mxu0 0.0
        %2032 = vmatprep.subr.mxu0 0.0
        %2033 = vmatpush1.msra.mxu0 0.0
        %2034 = vmatprep.subr.mxu0 0.0
        %2035 = vmatpush1.msra.mxu0 0.0
        %2036 = vmatprep.subr.mxu0 0.0
        %2037 = vmatpush1.msra.mxu0 0.0
        %2038 = vmatprep.subr.mxu0 0.0
        %2039 = vmatpush1.msra.mxu0 0.0
        %2040 = vmatprep.subr.mxu0 0.0
        %2041 = vmatpush1.msra.mxu0 0.0
        %2042 = vmatprep.subr.mxu0 0.0
        %2043 = vmatpush1.msra.mxu0 0.0
        %2044 = vmatprep.subr.mxu0 0.0
        %2045 = vmatpush1.msra.mxu0 0.0
        %2046 = vmatprep.subr.mxu0 0.0
        %2047 = vmatpush1.msra.mxu0 0.0
        %2048 = vmatprep.subr.mxu0 0.0
        %2049 = vmatpush1.msra.mxu0 0.0
        %2050 = vmatprep.subr.mxu0 0.0
        %2051 = vmatpush1.msra.mxu0 0.0
        %2052 = vmatprep.subr.mxu0 0.0
        %2053 = vmatpush1.msra.mxu0 0.0
        %2054 = vmatprep.subr.mxu0 0.0
        %2055 = vmatpush1.msra.mxu0 0.0
        %2056 = vmatprep.subr.mxu0 0.0
        %2057 = vmatpush1.msra.mxu0 0.0
        %2058 = vmatprep.subr.mxu0 0.0
        %2059 = vmatpush1.msra.mxu0 0.0
        %2060 = vmatprep.subr.mxu0 0.0
        %2061 = vmatpush1.msra.mxu0 0.0
        %2062 = vmatprep.subr.mxu0 0.0
        %2063 = vmatpush1.msra.mxu0 0.0
        %2064 = vmatprep.subr.mxu0 0.0
        %2065 = vmatpush1.msra.mxu0 0.0
        %2066 = vmatprep.subr.mxu0 0.0
        %2067 = vmatpush1.msra.mxu0 0.0
        %2068 = vmatprep.subr.mxu0 0.0
        %2069 = vmatpush1.msra.mxu0 0.0
        %2070 = vmatprep.subr.mxu0 0.0
        %2071 = vmatpush1.msra.mxu0 0.0
        %2072 = vmatprep.subr.mxu0 0.0
        %2073 = vmatpush1.msra.mxu0 0.0
        %2074 = vmatprep.subr.mxu0 0.0
        %2075 = vmatpush1.msra.mxu0 0.0
        %2076 = vmatprep.mubr.f32.mxu0 0.0
        %2077 = vmatmul.mubr.f32.gmra.mrb[0].mxu0 %v2010
        %v2078 = vpop.f32.mrb[0].mxu0
        %v2079 = vadd.f32 0.0, %v2078
        %v2080 = vpop.f32.mrb[0].mxu0
        %2081 = vdwg.mxu0
        %v2083 = vsel %vm2008, %v1989, 0
        %2085 = vmatprep.subr.mxu0 0.0
        %2086 = vmatpush1.msra.mxu0 %v1882
        %2087 = vmatprep.subr.mxu0 0.0
        %2088 = vmatpush1.msra.mxu0 %v1888
        %2089 = vmatprep.subr.mxu0 0.0
        %2090 = vmatpush1.msra.mxu0 %v1894
        %2091 = vmatprep.subr.mxu0 0.0
        %2092 = vmatpush1.msra.mxu0 %v1900
        %2093 = vmatprep.subr.mxu0 0.0
        %2094 = vmatpush1.msra.mxu0 0.0
        %2095 = vmatprep.subr.mxu0 0.0
        %2096 = vmatpush1.msra.mxu0 0.0
        %2097 = vmatprep.subr.mxu0 0.0
        %2098 = vmatpush1.msra.mxu0 0.0
        %2099 = vmatprep.subr.mxu0 0.0
        %2100 = vmatpush1.msra.mxu0 0.0
        %2101 = vmatprep.subr.mxu0 0.0
        %2102 = vmatpush1.msra.mxu0 0.0
        %2103 = vmatprep.subr.mxu0 0.0
        %2104 = vmatpush1.msra.mxu0 0.0
        %2105 = vmatprep.subr.mxu0 0.0
        %2106 = vmatpush1.msra.mxu0 0.0
        %2107 = vmatprep.subr.mxu0 0.0
        %2108 = vmatpush1.msra.mxu0 0.0
        %2109 = vmatprep.subr.mxu0 0.0
        %2110 = vmatpush1.msra.mxu0 0.0
        %2111 = vmatprep.subr.mxu0 0.0
        %2112 = vmatpush1.msra.mxu0 0.0
        %2113 = vmatprep.subr.mxu0 0.0
        %2114 = vmatpush1.msra.mxu0 0.0
        %2115 = vmatprep.subr.mxu0 0.0
        %2116 = vmatpush1.msra.mxu0 0.0
        %2117 = vmatprep.subr.mxu0 0.0
        %2118 = vmatpush1.msra.mxu0 0.0
        %2119 = vmatprep.subr.mxu0 0.0
        %2120 = vmatpush1.msra.mxu0 0.0
        %2121 = vmatprep.subr.mxu0 0.0
        %2122 = vmatpush1.msra.mxu0 0.0
        %2123 = vmatprep.subr.mxu0 0.0
        %2124 = vmatpush1.msra.mxu0 0.0
        %2125 = vmatprep.subr.mxu0 0.0
        %2126 = vmatpush1.msra.mxu0 0.0
        %2127 = vmatprep.subr.mxu0 0.0
        %2128 = vmatpush1.msra.mxu0 0.0
        %2129 = vmatprep.subr.mxu0 0.0
        %2130 = vmatpush1.msra.mxu0 0.0
        %2131 = vmatprep.subr.mxu0 0.0
        %2132 = vmatpush1.msra.mxu0 0.0
        %2133 = vmatprep.subr.mxu0 0.0
        %2134 = vmatpush1.msra.mxu0 0.0
        %2135 = vmatprep.subr.mxu0 0.0
        %2136 = vmatpush1.msra.mxu0 0.0
        %2137 = vmatprep.subr.mxu0 0.0
        %2138 = vmatpush1.msra.mxu0 0.0
        %2139 = vmatprep.subr.mxu0 0.0
        %2140 = vmatpush1.msra.mxu0 0.0
        %2141 = vmatprep.subr.mxu0 0.0
        %2142 = vmatpush1.msra.mxu0 0.0
        %2143 = vmatprep.subr.mxu0 0.0
        %2144 = vmatpush1.msra.mxu0 0.0
        %2145 = vmatprep.subr.mxu0 0.0
        %2146 = vmatpush1.msra.mxu0 0.0
        %2147 = vmatprep.subr.mxu0 0.0
        %2148 = vmatpush1.msra.mxu0 0.0
        %2149 = vmatprep.mubr.f32.mxu0 0.0
        %2150 = vmatmul.mubr.f32.gmra.mrb[0].mxu0 %v2083
        %v2151 = vpop.f32.mrb[0].mxu0
        %v2152 = vadd.f32 %v2079, %v2151
        %v2153 = vpop.f32.mrb[0].mxu0
        %2154 = vdwg.mxu0
        %s2155 = scalar_lea.vmem [#allocation12], 16
        %v2156 = vld [vmem:[%s2155] sm:$0x3f]
        %2157 = vrot.lane.b32.xlu0 %v1882, 56
        %v2158 = vpop.permute.xlu0 %2157
        %2159 = vrot.lane.b32.xlu0 %v1888, 56
        %v2160 = vpop.permute.xlu0 %2159
        %2161 = vrot.lane.b32.xlu0 %v1894, 56
        %v2162 = vpop.permute.xlu0 %2161
        %2163 = vrot.lane.b32.xlu0 %v1900, 56
        %v2164 = vpop.permute.xlu0 %2163
        %v2170 = vsel %vm2008, %v2156, 0
        %2172 = vmatprep.subr.mxu0 0.0
        %2173 = vmatpush1.msra.mxu0 %v2158
        %2174 = vmatprep.subr.mxu0 0.0
        %2175 = vmatpush1.msra.mxu0 %v2160
        %2176 = vmatprep.subr.mxu0 0.0
        %2177 = vmatpush1.msra.mxu0 %v2162
        %2178 = vmatprep.subr.mxu0 0.0
        %2179 = vmatpush1.msra.mxu0 %v2164
        %2180 = vmatprep.subr.mxu0 0.0
        %2181 = vmatpush1.msra.mxu0 0.0
        %2182 = vmatprep.subr.mxu0 0.0
        %2183 = vmatpush1.msra.mxu0 0.0
        %2184 = vmatprep.subr.mxu0 0.0
        %2185 = vmatpush1.msra.mxu0 0.0
        %2186 = vmatprep.subr.mxu0 0.0
        %2187 = vmatpush1.msra.mxu0 0.0
        %2188 = vmatprep.subr.mxu0 0.0
        %2189 = vmatpush1.msra.mxu0 0.0
        %2190 = vmatprep.subr.mxu0 0.0
        %2191 = vmatpush1.msra.mxu0 0.0
        %2192 = vmatprep.subr.mxu0 0.0
        %2193 = vmatpush1.msra.mxu0 0.0
        %2194 = vmatprep.subr.mxu0 0.0
        %2195 = vmatpush1.msra.mxu0 0.0
        %2196 = vmatprep.subr.mxu0 0.0
        %2197 = vmatpush1.msra.mxu0 0.0
        %2198 = vmatprep.subr.mxu0 0.0
        %2199 = vmatpush1.msra.mxu0 0.0
        %2200 = vmatprep.subr.mxu0 0.0
        %2201 = vmatpush1.msra.mxu0 0.0
        %2202 = vmatprep.subr.mxu0 0.0
        %2203 = vmatpush1.msra.mxu0 0.0
        %2204 = vmatprep.subr.mxu0 0.0
        %2205 = vmatpush1.msra.mxu0 0.0
        %2206 = vmatprep.subr.mxu0 0.0
        %2207 = vmatpush1.msra.mxu0 0.0
        %2208 = vmatprep.subr.mxu0 0.0
        %2209 = vmatpush1.msra.mxu0 0.0
        %2210 = vmatprep.subr.mxu0 0.0
        %2211 = vmatpush1.msra.mxu0 0.0
        %2212 = vmatprep.subr.mxu0 0.0
        %2213 = vmatpush1.msra.mxu0 0.0
        %2214 = vmatprep.subr.mxu0 0.0
        %2215 = vmatpush1.msra.mxu0 0.0
        %2216 = vmatprep.subr.mxu0 0.0
        %2217 = vmatpush1.msra.mxu0 0.0
        %2218 = vmatprep.subr.mxu0 0.0
        %2219 = vmatpush1.msra.mxu0 0.0
        %2220 = vmatprep.subr.mxu0 0.0
        %2221 = vmatpush1.msra.mxu0 0.0
        %2222 = vmatprep.subr.mxu0 0.0
        %2223 = vmatpush1.msra.mxu0 0.0
        %2224 = vmatprep.subr.mxu0 0.0
        %2225 = vmatpush1.msra.mxu0 0.0
        %2226 = vmatprep.subr.mxu0 0.0
        %2227 = vmatpush1.msra.mxu0 0.0
        %2228 = vmatprep.subr.mxu0 0.0
        %2229 = vmatpush1.msra.mxu0 0.0
        %2230 = vmatprep.subr.mxu0 0.0
        %2231 = vmatpush1.msra.mxu0 0.0
        %2232 = vmatprep.subr.mxu0 0.0
        %2233 = vmatpush1.msra.mxu0 0.0
        %2234 = vmatprep.subr.mxu0 0.0
        %2235 = vmatpush1.msra.mxu0 0.0
        %2236 = vmatprep.mubr.f32.mxu0 0.0
        %2237 = vmatmul.mubr.f32.gmra.mrb[0].mxu0 %v2170
        %v2238 = vpop.f32.mrb[0].mxu0
        %v2239 = vadd.f32 0.0, %v2238
        %v2240 = vpop.f32.mrb[0].mxu0
        %2241 = vdwg.mxu0
        %v2242 = vadd.f32 %v2152, %v2239
        %s2243 = scalar_lea.vmem [#allocation12], 24
        %v2244 = vld [vmem:[%s2243] sm:$0x3f]
        %2249 = vrot.lane.b32.xlu0 %v1882, 20
        %v2250 = vpop.permute.xlu0 %2249
        %2251 = vrot.lane.b32.xlu0 %v1884, 20
        %v2252 = vpop.permute.xlu0 %2251
        %2253 = vrot.lane.b32.xlu0 %v1888, 20
        %v2254 = vpop.permute.xlu0 %2253
        %2255 = vrot.lane.b32.xlu0 %v1890, 20
        %v2256 = vpop.permute.xlu0 %2255
        %2257 = vrot.lane.b32.xlu0 %v1894, 20
        %v2258 = vpop.permute.xlu0 %2257
        %2259 = vrot.lane.b32.xlu0 %v1896, 20
        %v2260 = vpop.permute.xlu0 %2259
        %2261 = vrot.lane.b32.xlu0 %v1900, 20
        %v2262 = vpop.permute.xlu0 %2261
        %2263 = vrot.lane.b32.xlu0 %v1902, 20
        %v2264 = vpop.permute.xlu0 %2263
        %vm2265 = vcmask 162816
        %v2266 = vsel %vm2265, %v2250, %v2252
        %v2267 = vsel %vm2265, %v2254, %v2256
        %v2268 = vsel %vm2265, %v2258, %v2260
        %v2269 = vsel %vm2265, %v2262, %v2264
        %v2275 = vsel %vm2008, %v2244, 0
        %2277 = vmatprep.subr.mxu0 0.0
        %2278 = vmatpush1.msra.mxu0 %v2266
        %2279 = vmatprep.subr.mxu0 0.0
        %2280 = vmatpush1.msra.mxu0 %v2267
        %2281 = vmatprep.subr.mxu0 0.0
        %2282 = vmatpush1.msra.mxu0 %v2268
        %2283 = vmatprep.subr.mxu0 0.0
        %2284 = vmatpush1.msra.mxu0 %v2269
        %2285 = vmatprep.subr.mxu0 0.0
        %2286 = vmatpush1.msra.mxu0 0.0
        %2287 = vmatprep.subr.mxu0 0.0
        %2288 = vmatpush1.msra.mxu0 0.0
        %2289 = vmatprep.subr.mxu0 0.0
        %2290 = vmatpush1.msra.mxu0 0.0
        %2291 = vmatprep.subr.mxu0 0.0
        %2292 = vmatpush1.msra.mxu0 0.0
        %2293 = vmatprep.subr.mxu0 0.0
        %2294 = vmatpush1.msra.mxu0 0.0
        %2295 = vmatprep.subr.mxu0 0.0
        %2296 = vmatpush1.msra.mxu0 0.0
        %2297 = vmatprep.subr.mxu0 0.0
        %2298 = vmatpush1.msra.mxu0 0.0
        %2299 = vmatprep.subr.mxu0 0.0
        %2300 = vmatpush1.msra.mxu0 0.0
        %2301 = vmatprep.subr.mxu0 0.0
        %2302 = vmatpush1.msra.mxu0 0.0
        %2303 = vmatprep.subr.mxu0 0.0
        %2304 = vmatpush1.msra.mxu0 0.0
        %2305 = vmatprep.subr.mxu0 0.0
        %2306 = vmatpush1.msra.mxu0 0.0
        %2307 = vmatprep.subr.mxu0 0.0
        %2308 = vmatpush1.msra.mxu0 0.0
        %2309 = vmatprep.subr.mxu0 0.0
        %2310 = vmatpush1.msra.mxu0 0.0
        %2311 = vmatprep.subr.mxu0 0.0
        %2312 = vmatpush1.msra.mxu0 0.0
        %2313 = vmatprep.subr.mxu0 0.0
        %2314 = vmatpush1.msra.mxu0 0.0
        %2315 = vmatprep.subr.mxu0 0.0
        %2316 = vmatpush1.msra.mxu0 0.0
        %2317 = vmatprep.subr.mxu0 0.0
        %2318 = vmatpush1.msra.mxu0 0.0
        %2319 = vmatprep.subr.mxu0 0.0
        %2320 = vmatpush1.msra.mxu0 0.0
        %2321 = vmatprep.subr.mxu0 0.0
        %2322 = vmatpush1.msra.mxu0 0.0
        %2323 = vmatprep.subr.mxu0 0.0
        %2324 = vmatpush1.msra.mxu0 0.0
        %2325 = vmatprep.subr.mxu0 0.0
        %2326 = vmatpush1.msra.mxu0 0.0
        %2327 = vmatprep.subr.mxu0 0.0
        %2328 = vmatpush1.msra.mxu0 0.0
        %2329 = vmatprep.subr.mxu0 0.0
        %2330 = vmatpush1.msra.mxu0 0.0
        %2331 = vmatprep.subr.mxu0 0.0
        %2332 = vmatpush1.msra.mxu0 0.0
        %2333 = vmatprep.subr.mxu0 0.0
        %2334 = vmatpush1.msra.mxu0 0.0
        %2335 = vmatprep.subr.mxu0 0.0
        %2336 = vmatpush1.msra.mxu0 0.0
        %2337 = vmatprep.subr.mxu0 0.0
        %2338 = vmatpush1.msra.mxu0 0.0
        %2339 = vmatprep.subr.mxu0 0.0
        %2340 = vmatpush1.msra.mxu0 0.0
        %2341 = vmatprep.mubr.f32.mxu0 0.0
        %2342 = vmatmul.mubr.f32.gmra.mrb[0].mxu0 %v2275
        %v2343 = vpop.f32.mrb[0].mxu0
        %v2344 = vadd.f32 0.0, %v2343
        %v2345 = vpop.f32.mrb[0].mxu0
        %2346 = vdwg.mxu0
        %v2347 = vadd.f32 %v2242, %v2344
        %s2348 = scalar_lea.vmem [#allocation12], 32
        %v2349 = vld [vmem:[%s2348] sm:$0x3f]
        %2350 = vrot.lane.b32.xlu0 %v1884, 112
        %v2351 = vpop.permute.xlu0 %2350
        %2352 = vrot.lane.b32.xlu0 %v1890, 112
        %v2353 = vpop.permute.xlu0 %2352
        %2354 = vrot.lane.b32.xlu0 %v1896, 112
        %v2355 = vpop.permute.xlu0 %2354
        %2356 = vrot.lane.b32.xlu0 %v1902, 112
        %v2357 = vpop.permute.xlu0 %2356
        %v2363 = vsel %vm2008, %v2349, 0
        %2365 = vmatprep.subr.mxu0 0.0
        %2366 = vmatpush1.msra.mxu0 %v2351
        %2367 = vmatprep.subr.mxu0 0.0
        %2368 = vmatpush1.msra.mxu0 %v2353
        %2369 = vmatprep.subr.mxu0 0.0
        %2370 = vmatpush1.msra.mxu0 %v2355
        %2371 = vmatprep.subr.mxu0 0.0
        %2372 = vmatpush1.msra.mxu0 %v2357
        %2373 = vmatprep.subr.mxu0 0.0
        %2374 = vmatpush1.msra.mxu0 0.0
        %2375 = vmatprep.subr.mxu0 0.0
        %2376 = vmatpush1.msra.mxu0 0.0
        %2377 = vmatprep.subr.mxu0 0.0
        %2378 = vmatpush1.msra.mxu0 0.0
        %2379 = vmatprep.subr.mxu0 0.0
        %2380 = vmatpush1.msra.mxu0 0.0
        %2381 = vmatprep.subr.mxu0 0.0
        %2382 = vmatpush1.msra.mxu0 0.0
        %2383 = vmatprep.subr.mxu0 0.0
        %2384 = vmatpush1.msra.mxu0 0.0
        %2385 = vmatprep.subr.mxu0 0.0
        %2386 = vmatpush1.msra.mxu0 0.0
        %2387 = vmatprep.subr.mxu0 0.0
        %2388 = vmatpush1.msra.mxu0 0.0
        %2389 = vmatprep.subr.mxu0 0.0
        %2390 = vmatpush1.msra.mxu0 0.0
        %2391 = vmatprep.subr.mxu0 0.0
        %2392 = vmatpush1.msra.mxu0 0.0
        %2393 = vmatprep.subr.mxu0 0.0
        %2394 = vmatpush1.msra.mxu0 0.0
        %2395 = vmatprep.subr.mxu0 0.0
        %2396 = vmatpush1.msra.mxu0 0.0
        %2397 = vmatprep.subr.mxu0 0.0
        %2398 = vmatpush1.msra.mxu0 0.0
        %2399 = vmatprep.subr.mxu0 0.0
        %2400 = vmatpush1.msra.mxu0 0.0
        %2401 = vmatprep.subr.mxu0 0.0
        %2402 = vmatpush1.msra.mxu0 0.0
        %2403 = vmatprep.subr.mxu0 0.0
        %2404 = vmatpush1.msra.mxu0 0.0
        %2405 = vmatprep.subr.mxu0 0.0
        %2406 = vmatpush1.msra.mxu0 0.0
        %2407 = vmatprep.subr.mxu0 0.0
        %2408 = vmatpush1.msra.mxu0 0.0
        %2409 = vmatprep.subr.mxu0 0.0
        %2410 = vmatpush1.msra.mxu0 0.0
        %2411 = vmatprep.subr.mxu0 0.0
        %2412 = vmatpush1.msra.mxu0 0.0
        %2413 = vmatprep.subr.mxu0 0.0
        %2414 = vmatpush1.msra.mxu0 0.0
        %2415 = vmatprep.subr.mxu0 0.0
        %2416 = vmatpush1.msra.mxu0 0.0
        %2417 = vmatprep.subr.mxu0 0.0
        %2418 = vmatpush1.msra.mxu0 0.0
        %2419 = vmatprep.subr.mxu0 0.0
        %2420 = vmatpush1.msra.mxu0 0.0
        %2421 = vmatprep.subr.mxu0 0.0
        %2422 = vmatpush1.msra.mxu0 0.0
        %2423 = vmatprep.subr.mxu0 0.0
        %2424 = vmatpush1.msra.mxu0 0.0
        %2425 = vmatprep.subr.mxu0 0.0
        %2426 = vmatpush1.msra.mxu0 0.0
        %2427 = vmatprep.subr.mxu0 0.0
        %2428 = vmatpush1.msra.mxu0 0.0
        %2429 = vmatprep.mubr.f32.mxu0 0.0
        %2430 = vmatmul.mubr.f32.gmra.mrb[0].mxu0 %v2363
        %v2431 = vpop.f32.mrb[0].mxu0
        %v2432 = vadd.f32 0.0, %v2431
        %v2433 = vpop.f32.mrb[0].mxu0
        %2434 = vdwg.mxu0
        %v2435 = vadd.f32 %v2347, %v2432
        %s2436 = scalar_lea.vmem [#allocation12], 40
        %v2437 = vld [vmem:[%s2436] sm:$0x3f]
        %2438 = vrot.lane.b32.xlu0 %v1884, 76
        %v2439 = vpop.permute.xlu0 %2438
        %2440 = vrot.lane.b32.xlu0 %v1890, 76
        %v2441 = vpop.permute.xlu0 %2440
        %2442 = vrot.lane.b32.xlu0 %v1896, 76
        %v2443 = vpop.permute.xlu0 %2442
        %2444 = vrot.lane.b32.xlu0 %v1902, 76
        %v2445 = vpop.permute.xlu0 %2444
        %v2451 = vsel %vm2008, %v2437, 0
        %2453 = vmatprep.subr.mxu0 0.0
        %2454 = vmatpush1.msra.mxu0 %v2439
        %2455 = vmatprep.subr.mxu0 0.0
        %2456 = vmatpush1.msra.mxu0 %v2441
        %2457 = vmatprep.subr.mxu0 0.0
        %2458 = vmatpush1.msra.mxu0 %v2443
        %2459 = vmatprep.subr.mxu0 0.0
        %2460 = vmatpush1.msra.mxu0 %v2445
        %2461 = vmatprep.subr.mxu0 0.0
        %2462 = vmatpush1.msra.mxu0 0.0
        %2463 = vmatprep.subr.mxu0 0.0
        %2464 = vmatpush1.msra.mxu0 0.0
        %2465 = vmatprep.subr.mxu0 0.0
        %2466 = vmatpush1.msra.mxu0 0.0
        %2467 = vmatprep.subr.mxu0 0.0
        %2468 = vmatpush1.msra.mxu0 0.0
        %2469 = vmatprep.subr.mxu0 0.0
        %2470 = vmatpush1.msra.mxu0 0.0
        %2471 = vmatprep.subr.mxu0 0.0
        %2472 = vmatpush1.msra.mxu0 0.0
        %2473 = vmatprep.subr.mxu0 0.0
        %2474 = vmatpush1.msra.mxu0 0.0
        %2475 = vmatprep.subr.mxu0 0.0
        %2476 = vmatpush1.msra.mxu0 0.0
        %2477 = vmatprep.subr.mxu0 0.0
        %2478 = vmatpush1.msra.mxu0 0.0
        %2479 = vmatprep.subr.mxu0 0.0
        %2480 = vmatpush1.msra.mxu0 0.0
        %2481 = vmatprep.subr.mxu0 0.0
        %2482 = vmatpush1.msra.mxu0 0.0
        %2483 = vmatprep.subr.mxu0 0.0
        %2484 = vmatpush1.msra.mxu0 0.0
        %2485 = vmatprep.subr.mxu0 0.0
        %2486 = vmatpush1.msra.mxu0 0.0
        %2487 = vmatprep.subr.mxu0 0.0
        %2488 = vmatpush1.msra.mxu0 0.0
        %2489 = vmatprep.subr.mxu0 0.0
        %2490 = vmatpush1.msra.mxu0 0.0
        %2491 = vmatprep.subr.mxu0 0.0
        %2492 = vmatpush1.msra.mxu0 0.0
        %2493 = vmatprep.subr.mxu0 0.0
        %2494 = vmatpush1.msra.mxu0 0.0
        %2495 = vmatprep.subr.mxu0 0.0
        %2496 = vmatpush1.msra.mxu0 0.0
        %2497 = vmatprep.subr.mxu0 0.0
        %2498 = vmatpush1.msra.mxu0 0.0
        %2499 = vmatprep.subr.mxu0 0.0
        %2500 = vmatpush1.msra.mxu0 0.0
        %2501 = vmatprep.subr.mxu0 0.0
        %2502 = vmatpush1.msra.mxu0 0.0
        %2503 = vmatprep.subr.mxu0 0.0
        %2504 = vmatpush1.msra.mxu0 0.0
        %2505 = vmatprep.subr.mxu0 0.0
        %2506 = vmatpush1.msra.mxu0 0.0
        %2507 = vmatprep.subr.mxu0 0.0
        %2508 = vmatpush1.msra.mxu0 0.0
        %2509 = vmatprep.subr.mxu0 0.0
        %2510 = vmatpush1.msra.mxu0 0.0
        %2511 = vmatprep.subr.mxu0 0.0
        %2512 = vmatpush1.msra.mxu0 0.0
        %2513 = vmatprep.subr.mxu0 0.0
        %2514 = vmatpush1.msra.mxu0 0.0
        %2515 = vmatprep.subr.mxu0 0.0
        %2516 = vmatpush1.msra.mxu0 0.0
        %2517 = vmatprep.mubr.f32.mxu0 0.0
        %2518 = vmatmul.mubr.f32.gmra.mrb[0].mxu0 %v2451
        %v2519 = vpop.f32.mrb[0].mxu0
        %v2520 = vadd.f32 0.0, %v2519
        %v2521 = vpop.f32.mrb[0].mxu0
        %2522 = vdwg.mxu0
        %v2523 = vadd.f32 %v2435, %v2520
        %s2524 = scalar_lea.vmem [#allocation12], 48
        %v2525 = vld [vmem:[%s2524] sm:$0x3f]
        %2526 = vrot.lane.b32.xlu0 %v1884, 40
        %v2527 = vpop.permute.xlu0 %2526
        %2528 = vrot.lane.b32.xlu0 %v1890, 40
        %v2529 = vpop.permute.xlu0 %2528
        %2530 = vrot.lane.b32.xlu0 %v1896, 40
        %v2531 = vpop.permute.xlu0 %2530
        %2532 = vrot.lane.b32.xlu0 %v1902, 40
        %v2533 = vpop.permute.xlu0 %2532
        %v2539 = vsel %vm2008, %v2525, 0
        %2541 = vmatprep.subr.mxu0 0.0
        %2542 = vmatpush1.msra.mxu0 %v2527
        %2543 = vmatprep.subr.mxu0 0.0
        %2544 = vmatpush1.msra.mxu0 %v2529
        %2545 = vmatprep.subr.mxu0 0.0
        %2546 = vmatpush1.msra.mxu0 %v2531
        %2547 = vmatprep.subr.mxu0 0.0
        %2548 = vmatpush1.msra.mxu0 %v2533
        %2549 = vmatprep.subr.mxu0 0.0
        %2550 = vmatpush1.msra.mxu0 0.0
        %2551 = vmatprep.subr.mxu0 0.0
        %2552 = vmatpush1.msra.mxu0 0.0
        %2553 = vmatprep.subr.mxu0 0.0
        %2554 = vmatpush1.msra.mxu0 0.0
        %2555 = vmatprep.subr.mxu0 0.0
        %2556 = vmatpush1.msra.mxu0 0.0
        %2557 = vmatprep.subr.mxu0 0.0
        %2558 = vmatpush1.msra.mxu0 0.0
        %2559 = vmatprep.subr.mxu0 0.0
        %2560 = vmatpush1.msra.mxu0 0.0
        %2561 = vmatprep.subr.mxu0 0.0
        %2562 = vmatpush1.msra.mxu0 0.0
        %2563 = vmatprep.subr.mxu0 0.0
        %2564 = vmatpush1.msra.mxu0 0.0
        %2565 = vmatprep.subr.mxu0 0.0
        %2566 = vmatpush1.msra.mxu0 0.0
        %2567 = vmatprep.subr.mxu0 0.0
        %2568 = vmatpush1.msra.mxu0 0.0
        %2569 = vmatprep.subr.mxu0 0.0
        %2570 = vmatpush1.msra.mxu0 0.0
        %2571 = vmatprep.subr.mxu0 0.0
        %2572 = vmatpush1.msra.mxu0 0.0
        %2573 = vmatprep.subr.mxu0 0.0
        %2574 = vmatpush1.msra.mxu0 0.0
        %2575 = vmatprep.subr.mxu0 0.0
        %2576 = vmatpush1.msra.mxu0 0.0
        %2577 = vmatprep.subr.mxu0 0.0
        %2578 = vmatpush1.msra.mxu0 0.0
        %2579 = vmatprep.subr.mxu0 0.0
        %2580 = vmatpush1.msra.mxu0 0.0
        %2581 = vmatprep.subr.mxu0 0.0
        %2582 = vmatpush1.msra.mxu0 0.0
        %2583 = vmatprep.subr.mxu0 0.0
        %2584 = vmatpush1.msra.mxu0 0.0
        %2585 = vmatprep.subr.mxu0 0.0
        %2586 = vmatpush1.msra.mxu0 0.0
        %2587 = vmatprep.subr.mxu0 0.0
        %2588 = vmatpush1.msra.mxu0 0.0
        %2589 = vmatprep.subr.mxu0 0.0
        %2590 = vmatpush1.msra.mxu0 0.0
        %2591 = vmatprep.subr.mxu0 0.0
        %2592 = vmatpush1.msra.mxu0 0.0
        %2593 = vmatprep.subr.mxu0 0.0
        %2594 = vmatpush1.msra.mxu0 0.0
        %2595 = vmatprep.subr.mxu0 0.0
        %2596 = vmatpush1.msra.mxu0 0.0
        %2597 = vmatprep.subr.mxu0 0.0
        %2598 = vmatpush1.msra.mxu0 0.0
        %2599 = vmatprep.subr.mxu0 0.0
        %2600 = vmatpush1.msra.mxu0 0.0
        %2601 = vmatprep.subr.mxu0 0.0
        %2602 = vmatpush1.msra.mxu0 0.0
        %2603 = vmatprep.subr.mxu0 0.0
        %2604 = vmatpush1.msra.mxu0 0.0
        %2605 = vmatprep.mubr.f32.mxu0 0.0
        %2606 = vmatmul.mubr.f32.gmra.mrb[0].mxu0 %v2539
        %v2607 = vpop.f32.mrb[0].mxu0
        %v2608 = vadd.f32 0.0, %v2607
        %v2609 = vpop.f32.mrb[0].mxu0
        %2610 = vdwg.mxu0
        %v2611 = vadd.f32 %v2523, %v2608
        %s2612 = scalar_lea.vmem [#allocation12], 56
        %v2613 = vld [vmem:[%s2612] sm:$0x3f]
        %2618 = vrot.lane.b32.xlu0 %v1884, 4
        %v2619 = vpop.permute.xlu0 %2618
        %2620 = vrot.lane.b32.xlu0 %v1971, 4
        %v2621 = vpop.permute.xlu0 %2620
        %2622 = vrot.lane.b32.xlu0 %v1890, 4
        %v2623 = vpop.permute.xlu0 %2622
        %2624 = vrot.lane.b32.xlu0 %v1976, 4
        %v2625 = vpop.permute.xlu0 %2624
        %2626 = vrot.lane.b32.xlu0 %v1896, 4
        %v2627 = vpop.permute.xlu0 %2626
        %2628 = vrot.lane.b32.xlu0 %v1981, 4
        %v2629 = vpop.permute.xlu0 %2628
        %2630 = vrot.lane.b32.xlu0 %v1902, 4
        %v2631 = vpop.permute.xlu0 %2630
        %2632 = vrot.lane.b32.xlu0 %v1986, 4
        %v2633 = vpop.permute.xlu0 %2632
        %v2634 = vsel %vm1603, %v2619, %v2621
        %v2635 = vsel %vm1603, %v2623, %v2625
        %v2636 = vsel %vm1603, %v2627, %v2629
        %v2637 = vsel %vm1603, %v2631, %v2633
        %v2643 = vsel %vm2008, %v2613, 0
        %2645 = vmatprep.subr.mxu0 0.0
        %2646 = vmatpush1.msra.mxu0 %v2634
        %2647 = vmatprep.subr.mxu0 0.0
        %2648 = vmatpush1.msra.mxu0 %v2635
        %2649 = vmatprep.subr.mxu0 0.0
        %2650 = vmatpush1.msra.mxu0 %v2636
        %2651 = vmatprep.subr.mxu0 0.0
        %2652 = vmatpush1.msra.mxu0 %v2637
        %2653 = vmatprep.subr.mxu0 0.0
        %2654 = vmatpush1.msra.mxu0 0.0
        %2655 = vmatprep.subr.mxu0 0.0
        %2656 = vmatpush1.msra.mxu0 0.0
        %2657 = vmatprep.subr.mxu0 0.0
        %2658 = vmatpush1.msra.mxu0 0.0
        %2659 = vmatprep.subr.mxu0 0.0
        %2660 = vmatpush1.msra.mxu0 0.0
        %2661 = vmatprep.subr.mxu0 0.0
        %2662 = vmatpush1.msra.mxu0 0.0
        %2663 = vmatprep.subr.mxu0 0.0
        %2664 = vmatpush1.msra.mxu0 0.0
        %2665 = vmatprep.subr.mxu0 0.0
        %2666 = vmatpush1.msra.mxu0 0.0
        %2667 = vmatprep.subr.mxu0 0.0
        %2668 = vmatpush1.msra.mxu0 0.0
        %2669 = vmatprep.subr.mxu0 0.0
        %2670 = vmatpush1.msra.mxu0 0.0
        %2671 = vmatprep.subr.mxu0 0.0
        %2672 = vmatpush1.msra.mxu0 0.0
        %2673 = vmatprep.subr.mxu0 0.0
        %2674 = vmatpush1.msra.mxu0 0.0
        %2675 = vmatprep.subr.mxu0 0.0
        %2676 = vmatpush1.msra.mxu0 0.0
        %2677 = vmatprep.subr.mxu0 0.0
        %2678 = vmatpush1.msra.mxu0 0.0
        %2679 = vmatprep.subr.mxu0 0.0
        %2680 = vmatpush1.msra.mxu0 0.0
        %2681 = vmatprep.subr.mxu0 0.0
        %2682 = vmatpush1.msra.mxu0 0.0
        %2683 = vmatprep.subr.mxu0 0.0
        %2684 = vmatpush1.msra.mxu0 0.0
        %2685 = vmatprep.subr.mxu0 0.0
        %2686 = vmatpush1.msra.mxu0 0.0
        %2687 = vmatprep.subr.mxu0 0.0
        %2688 = vmatpush1.msra.mxu0 0.0
        %2689 = vmatprep.subr.mxu0 0.0
        %2690 = vmatpush1.msra.mxu0 0.0
        %2691 = vmatprep.subr.mxu0 0.0
        %2692 = vmatpush1.msra.mxu0 0.0
        %2693 = vmatprep.subr.mxu0 0.0
        %2694 = vmatpush1.msra.mxu0 0.0
        %2695 = vmatprep.subr.mxu0 0.0
        %2696 = vmatpush1.msra.mxu0 0.0
        %2697 = vmatprep.subr.mxu0 0.0
        %2698 = vmatpush1.msra.mxu0 0.0
        %2699 = vmatprep.subr.mxu0 0.0
        %2700 = vmatpush1.msra.mxu0 0.0
        %2701 = vmatprep.subr.mxu0 0.0
        %2702 = vmatpush1.msra.mxu0 0.0
        %2703 = vmatprep.subr.mxu0 0.0
        %2704 = vmatpush1.msra.mxu0 0.0
        %2705 = vmatprep.subr.mxu0 0.0
        %2706 = vmatpush1.msra.mxu0 0.0
        %2707 = vmatprep.subr.mxu0 0.0
        %2708 = vmatpush1.msra.mxu0 0.0
        %2709 = vmatprep.mubr.f32.mxu0 0.0
        %2710 = vmatmul.mubr.f32.gmra.mrb[0].mxu0 %v2643
        %v2711 = vpop.f32.mrb[0].mxu0
        %v2712 = vadd.f32 0.0, %v2711
        %v2713 = vpop.f32.mrb[0].mxu0
        %2714 = vdwg.mxu0
        %v2715 = vadd.f32 %v2611, %v2712
        %s2716 = scalar_lea.vmem [#allocation12], 64
        %v2717 = vld [vmem:[%s2716] sm:$0x3f]
        %2718 = vrot.lane.b32.xlu0 %v1971, 96
        %v2719 = vpop.permute.xlu0 %2718
        %2720 = vrot.lane.b32.xlu0 %v1976, 96
        %v2721 = vpop.permute.xlu0 %2720
        %2722 = vrot.lane.b32.xlu0 %v1981, 96
        %v2723 = vpop.permute.xlu0 %2722
        %2724 = vrot.lane.b32.xlu0 %v1986, 96
        %v2725 = vpop.permute.xlu0 %2724
        %v2731 = vsel %vm2008, %v2717, 0
        %2733 = vmatprep.subr.mxu0 0.0
        %2734 = vmatpush1.msra.mxu0 %v2719
        %2735 = vmatprep.subr.mxu0 0.0
        %2736 = vmatpush1.msra.mxu0 %v2721
        %2737 = vmatprep.subr.mxu0 0.0
        %2738 = vmatpush1.msra.mxu0 %v2723
        %2739 = vmatprep.subr.mxu0 0.0
        %2740 = vmatpush1.msra.mxu0 %v2725
        %2741 = vmatprep.subr.mxu0 0.0
        %2742 = vmatpush1.msra.mxu0 0.0
        %2743 = vmatprep.subr.mxu0 0.0
        %2744 = vmatpush1.msra.mxu0 0.0
        %2745 = vmatprep.subr.mxu0 0.0
        %2746 = vmatpush1.msra.mxu0 0.0
        %2747 = vmatprep.subr.mxu0 0.0
        %2748 = vmatpush1.msra.mxu0 0.0
        %2749 = vmatprep.subr.mxu0 0.0
        %2750 = vmatpush1.msra.mxu0 0.0
        %2751 = vmatprep.subr.mxu0 0.0
        %2752 = vmatpush1.msra.mxu0 0.0
        %2753 = vmatprep.subr.mxu0 0.0
        %2754 = vmatpush1.msra.mxu0 0.0
        %2755 = vmatprep.subr.mxu0 0.0
        %2756 = vmatpush1.msra.mxu0 0.0
        %2757 = vmatprep.subr.mxu0 0.0
        %2758 = vmatpush1.msra.mxu0 0.0
        %2759 = vmatprep.subr.mxu0 0.0
        %2760 = vmatpush1.msra.mxu0 0.0
        %2761 = vmatprep.subr.mxu0 0.0
        %2762 = vmatpush1.msra.mxu0 0.0
        %2763 = vmatprep.subr.mxu0 0.0
        %2764 = vmatpush1.msra.mxu0 0.0
        %2765 = vmatprep.subr.mxu0 0.0
        %2766 = vmatpush1.msra.mxu0 0.0
        %2767 = vmatprep.subr.mxu0 0.0
        %2768 = vmatpush1.msra.mxu0 0.0
        %2769 = vmatprep.subr.mxu0 0.0
        %2770 = vmatpush1.msra.mxu0 0.0
        %2771 = vmatprep.subr.mxu0 0.0
        %2772 = vmatpush1.msra.mxu0 0.0
        %2773 = vmatprep.subr.mxu0 0.0
        %2774 = vmatpush1.msra.mxu0 0.0
        %2775 = vmatprep.subr.mxu0 0.0
        %2776 = vmatpush1.msra.mxu0 0.0
        %2777 = vmatprep.subr.mxu0 0.0
        %2778 = vmatpush1.msra.mxu0 0.0
        %2779 = vmatprep.subr.mxu0 0.0
        %2780 = vmatpush1.msra.mxu0 0.0
        %2781 = vmatprep.subr.mxu0 0.0
        %2782 = vmatpush1.msra.mxu0 0.0
        %2783 = vmatprep.subr.mxu0 0.0
        %2784 = vmatpush1.msra.mxu0 0.0
        %2785 = vmatprep.subr.mxu0 0.0
        %2786 = vmatpush1.msra.mxu0 0.0
        %2787 = vmatprep.subr.mxu0 0.0
        %2788 = vmatpush1.msra.mxu0 0.0
        %2789 = vmatprep.subr.mxu0 0.0
        %2790 = vmatpush1.msra.mxu0 0.0
        %2791 = vmatprep.subr.mxu0 0.0
        %2792 = vmatpush1.msra.mxu0 0.0
        %2793 = vmatprep.subr.mxu0 0.0
        %2794 = vmatpush1.msra.mxu0 0.0
        %2795 = vmatprep.subr.mxu0 0.0
        %2796 = vmatpush1.msra.mxu0 0.0
        %2797 = vmatprep.mubr.f32.mxu0 0.0
        %2798 = vmatmul.mubr.f32.gmra.mrb[0].mxu0 %v2731
        %v2799 = vpop.f32.mrb[0].mxu0
        %v2800 = vadd.f32 0.0, %v2799
        %v2801 = vpop.f32.mrb[0].mxu0
        %2802 = vdwg.mxu0
        %v2803 = vadd.f32 %v2715, %v2800
        %2805 = vset.pattern.permute.xlu0 0
        %2806 = vperm.xlu0 %2805, %v1801
        %v2807 = vpop.permute.xlu0 %2806
        %v2809 = vadd.f32 %v2803, %v2807
        %v2810 = vld [vmem:[%s13] sm:$0xff]
        %v2811 = vld [vmem:[%s13 + $0x8] sm:$0xff]
        %v2812 = vld [vmem:[%s14] sm:$0xff]
        %v2813 = vld [vmem:[%s14 + $0x8] sm:$0xff]
        %v2814 = vld [vmem:[%s14 + $0x10] sm:$0xff]
        %v2815 = vld [vmem:[%s14 + $0x18] sm:$0xff]
        %v2816 = vld [vmem:[%s14 + $0x20] sm:$0xff]
        %v2817 = vld [vmem:[%s14 + $0x28] sm:$0xff]
        %v2818 = vld [vmem:[%s14 + $0x30] sm:$0xff]
        %v2819 = vld [vmem:[%s14 + $0x38] sm:$0xff]
        %v2820 = vld [vmem:[%s14 + $0x40] sm:$0xf]
        %v2821 = vld [vmem:[%s14 + $0x48] sm:$0xf]
        %vm2822 = vcmask 293888
        %v2824 = vsel %vm2822, %v2809, 0
        %v2827 = vsel %vm800, %v2820, 0
        %v2830 = vsel %vm800, %v2821, 0
        %2832 = vmatprep.subr.mxu0 %v2813
        %2833 = vmatpush1.msra.mxu0 %v2812
        %2834 = vmatprep.subr.mxu0 %v2815
        %2835 = vmatpush1.msra.mxu0 %v2814
        %2836 = vmatprep.subr.mxu0 %v2817
        %2837 = vmatpush1.msra.mxu0 %v2816
        %2838 = vmatprep.subr.mxu0 %v2819
        %2839 = vmatpush1.msra.mxu0 %v2818
        %2840 = vmatprep.subr.mxu0 %v2830
        %2841 = vmatpush1.msra.mxu0 %v2827
        %2842 = vmatprep.subr.mxu0 0.0
        %2843 = vmatpush1.msra.mxu0 0.0
        %2844 = vmatprep.subr.mxu0 0.0
        %2845 = vmatpush1.msra.mxu0 0.0
        %2846 = vmatprep.subr.mxu0 0.0
        %2847 = vmatpush1.msra.mxu0 0.0
        %2848 = vmatprep.subr.mxu0 0.0
        %2849 = vmatpush1.msra.mxu0 0.0
        %2850 = vmatprep.subr.mxu0 0.0
        %2851 = vmatpush1.msra.mxu0 0.0
        %2852 = vmatprep.subr.mxu0 0.0
        %2853 = vmatpush1.msra.mxu0 0.0
        %2854 = vmatprep.subr.mxu0 0.0
        %2855 = vmatpush1.msra.mxu0 0.0
        %2856 = vmatprep.subr.mxu0 0.0
        %2857 = vmatpush1.msra.mxu0 0.0
        %2858 = vmatprep.subr.mxu0 0.0
        %2859 = vmatpush1.msra.mxu0 0.0
        %2860 = vmatprep.subr.mxu0 0.0
        %2861 = vmatpush1.msra.mxu0 0.0
        %2862 = vmatprep.subr.mxu0 0.0
        %2863 = vmatpush1.msra.mxu0 0.0
        %2864 = vmatprep.subr.mxu0 0.0
        %2865 = vmatpush1.msra.mxu0 0.0
        %2866 = vmatprep.subr.mxu0 0.0
        %2867 = vmatpush1.msra.mxu0 0.0
        %2868 = vmatprep.subr.mxu0 0.0
        %2869 = vmatpush1.msra.mxu0 0.0
        %2870 = vmatprep.subr.mxu0 0.0
        %2871 = vmatpush1.msra.mxu0 0.0
        %2872 = vmatprep.subr.mxu0 0.0
        %2873 = vmatpush1.msra.mxu0 0.0
        %2874 = vmatprep.subr.mxu0 0.0
        %2875 = vmatpush1.msra.mxu0 0.0
        %2876 = vmatprep.subr.mxu0 0.0
        %2877 = vmatpush1.msra.mxu0 0.0
        %2878 = vmatprep.subr.mxu0 0.0
        %2879 = vmatpush1.msra.mxu0 0.0
        %2880 = vmatprep.subr.mxu0 0.0
        %2881 = vmatpush1.msra.mxu0 0.0
        %2882 = vmatprep.subr.mxu0 0.0
        %2883 = vmatpush1.msra.mxu0 0.0
        %2884 = vmatprep.subr.mxu0 0.0
        %2885 = vmatpush1.msra.mxu0 0.0
        %2886 = vmatprep.subr.mxu0 0.0
        %2887 = vmatpush1.msra.mxu0 0.0
        %2888 = vmatprep.subr.mxu0 0.0
        %2889 = vmatpush1.msra.mxu0 0.0
        %2890 = vmatprep.subr.mxu0 0.0
        %2891 = vmatpush1.msra.mxu0 0.0
        %2892 = vmatprep.subr.mxu0 0.0
        %2893 = vmatpush1.msra.mxu0 0.0
        %2894 = vmatprep.subr.mxu0 0.0
        %2895 = vmatpush1.msra.mxu0 0.0
        %2896 = vmatprep.mubr.f32.mxu0 0.0
        %2897 = vmatmul.mubr.f32.gmra.mrb[0].mxu0 %v2824
        %v2898 = vpop.f32.mrb[0].mxu0
        %v2899 = vadd.f32 0.0, %v2898
        %v2900 = vpop.f32.mrb[0].mxu0
        %v2901 = vadd.f32 0.0, %v2900
        %2902 = vdwg.mxu0
        %vm2903 = vcmask 48128
        %v2905 = vsel %vm2903, %v2810, 0
        %v2908 = vsel %vm2903, %v2811, 0
        %v2911 = vsel %vm804, %v2899, 0
        %v2914 = vsel %vm804, %v2901, 0
        %2916 = vmatprep.subr.mxu0 %v2914
        %2917 = vmatpush1.msra.mxu0 %v2911
        %2918 = vmatprep.subr.mxu0 0.0
        %2919 = vmatpush1.msra.mxu0 0.0
        %2920 = vmatprep.subr.mxu0 0.0
        %2921 = vmatpush1.msra.mxu0 0.0
        %2922 = vmatprep.subr.mxu0 0.0
        %2923 = vmatpush1.msra.mxu0 0.0
        %2924 = vmatprep.subr.mxu0 0.0
        %2925 = vmatpush1.msra.mxu0 0.0
        %2926 = vmatprep.subr.mxu0 0.0
        %2927 = vmatpush1.msra.mxu0 0.0
        %2928 = vmatprep.subr.mxu0 0.0
        %2929 = vmatpush1.msra.mxu0 0.0
        %2930 = vmatprep.subr.mxu0 0.0
        %2931 = vmatpush1.msra.mxu0 0.0
        %2932 = vmatprep.subr.mxu0 0.0
        %2933 = vmatpush1.msra.mxu0 0.0
        %2934 = vmatprep.subr.mxu0 0.0
        %2935 = vmatpush1.msra.mxu0 0.0
        %2936 = vmatprep.subr.mxu0 0.0
        %2937 = vmatpush1.msra.mxu0 0.0
        %2938 = vmatprep.subr.mxu0 0.0
        %2939 = vmatpush1.msra.mxu0 0.0
        %2940 = vmatprep.subr.mxu0 0.0
        %2941 = vmatpush1.msra.mxu0 0.0
        %2942 = vmatprep.subr.mxu0 0.0
        %2943 = vmatpush1.msra.mxu0 0.0
        %2944 = vmatprep.subr.mxu0 0.0
        %2945 = vmatpush1.msra.mxu0 0.0
        %2946 = vmatprep.subr.mxu0 0.0
        %2947 = vmatpush1.msra.mxu0 0.0
        %2948 = vmatprep.subr.mxu0 0.0
        %2949 = vmatpush1.msra.mxu0 0.0
        %2950 = vmatprep.subr.mxu0 0.0
        %2951 = vmatpush1.msra.mxu0 0.0
        %2952 = vmatprep.subr.mxu0 0.0
        %2953 = vmatpush1.msra.mxu0 0.0
        %2954 = vmatprep.subr.mxu0 0.0
        %2955 = vmatpush1.msra.mxu0 0.0
        %2956 = vmatprep.subr.mxu0 0.0
        %2957 = vmatpush1.msra.mxu0 0.0
        %2958 = vmatprep.subr.mxu0 0.0
        %2959 = vmatpush1.msra.mxu0 0.0
        %2960 = vmatprep.subr.mxu0 0.0
        %2961 = vmatpush1.msra.mxu0 0.0
        %2962 = vmatprep.subr.mxu0 0.0
        %2963 = vmatpush1.msra.mxu0 0.0
        %2964 = vmatprep.subr.mxu0 0.0
        %2965 = vmatpush1.msra.mxu0 0.0
        %2966 = vmatprep.subr.mxu0 0.0
        %2967 = vmatpush1.msra.mxu0 0.0
        %2968 = vmatprep.subr.mxu0 0.0
        %2969 = vmatpush1.msra.mxu0 0.0
        %2970 = vmatprep.subr.mxu0 0.0
        %2971 = vmatpush1.msra.mxu0 0.0
        %2972 = vmatprep.subr.mxu0 0.0
        %2973 = vmatpush1.msra.mxu0 0.0
        %2974 = vmatprep.subr.mxu0 0.0
        %2975 = vmatpush1.msra.mxu0 0.0
        %2976 = vmatprep.subr.mxu0 0.0
        %2977 = vmatpush1.msra.mxu0 0.0
        %2978 = vmatprep.subr.mxu0 0.0
        %2979 = vmatpush1.msra.mxu0 0.0
        %2980 = vmatprep.mubr.f32.mxu0 0.0
        %2981 = vmatmul.mubr.f32.gmra.mrb[0].mxu0 %v2905
        %v2982 = vpop.f32.mrb[0].mxu0
        %v2983 = vadd.f32 0.0, %v2982
        %v2984 = vpop.f32.mrb[0].mxu0
        %v2985 = vadd.f32 0.0, %v2984
        %2986 = vmatprep.mubr.f32.mxu0 0.0
        %2987 = vmatmul.mubr.f32.gmra.mrb[0].mxu0 %v2908
        %v2988 = vpop.f32.mrb[0].mxu0
        %v2989 = vadd.f32 0.0, %v2988
        %v2990 = vpop.f32.mrb[0].mxu0
        %v2991 = vadd.f32 0.0, %v2990
        %2992 = vdwg.mxu0
        %2993 = vst [vmem:[%s582] sm:$0xff] %v2983
        %2994 = vst [vmem:[%s582 + $0x8] sm:$0xff] %v2985
        %2995 = vst [vmem:[%s582 + $0x10] sm:$0xff] %v2989
        %2996 = vst [vmem:[%s582 + $0x18] sm:$0xff] %v2991
        %p2997 = scmp.lt.s32.totalorder %s30, 1
        %s2998 = scalar_select %p2997, %s30, 1
        %s2999 = smul.addr %s2998, 4
        %s3000 = smul.addr %s2999, 8
        %s3001 = scalar_lea.vmem %s15, %s3000
        // Predicated region
        $region109: #{_lambda_.1} parent=79 // pred_check
          %p3002 = pneg %p368
        $region110: #{_lambda_.1} parent=79 // pred_check_branch
          %3004 = sbr.rel (%p3002) target = $region112
        $region111: #{_lambda_.1} parent=79 // pred_region
          _
        $region112: #{_lambda_.1} parent=79 // pred_fallthru
          _
      $region80: #{_lambda_.1} parent=5 // pred_fallthru
        _
      %p3005 = scmp.le.s32.totalorder 2, %s25
      // Predicated region
      $region113: #{_lambda_.1} parent=5 // pred_check
        %p3006 = pneg %p3005
      $region114: #{_lambda_.1} parent=5 // pred_check_branch
        %3008 = sbr.rel (%p3006) target = $region116
      $region115: #{_lambda_.1} parent=5 // pred_region
        %s3009 = ssub.s32 %s25, 2
        // Predicated region
        $region117: #{_lambda_.1} parent=115 // pred_check
          %p3010 = pneg %p374
        $region118: #{_lambda_.1} parent=115 // pred_check_branch
          %3012 = sbr.rel (%p3010) target = $region120
        $region119: #{_lambda_.1} parent=115 // pred_region
          %p3013 = scmp.lt.s32.totalorder %s31, 1
          %s3014 = scalar_select %p3013, %s31, 1
          %s3015 = smul.addr %s3014, 4
          %s3016 = smul.addr %s3015, 8
          %s3017 = scalar_lea.vmem %s15, %s3016
        $region120: #{_lambda_.1} parent=115 // pred_fallthru
          _
      $region116: #{_lambda_.1} parent=5 // pred_fallthru
        _
    $region6: #{_lambda_.1} parent=1 // loop_footer
      %s29 = sadd.s32 1, %s25
    $region7: #{_lambda_.1} parent=1 // loop_footer_branch
      %24 = sbr.rel target = $region3
    $region8: #{_lambda_.1} parent=1 // loop_exit
      _
    %3018 = vsyncpa [#allocation3], 1
    %s3019 = scalar_lea.sflag [#allocation3], 1
    %3020 = vsyncpa %s3019, 1
    %3021 = vsyncpa [#allocation5], 1
    %3022 = vsyncpa [#allocation8], 1
    %3023 = vsyncpa [#allocation11], 1

</llo_original>
